<compile_context>
chip_gen: v7x
topology: tpu7x:2x2x1
jax: 0.10.0
libtpu: 0.0.40
codegen_flags: <defaults>
</compile_context>

<pallas_src>
import functools

import jax
import jax.numpy as jnp
from jax.experimental import pallas as pl
from jax.experimental.pallas import tpu as pltpu

NEG_INF = -1e30      # masking stays in f32 (-1e30 would overflow bf16)
LN_EPS = 1e-5        # PyTorch nn.LayerNorm default


def _layernorm(v, w, b):
    # f32 elementwise path (v5e has no bf16 VPU/EUP datapath).
    mu = jnp.mean(v, axis=-1, keepdims=True)
    var = jnp.mean((v - mu) ** 2, axis=-1, keepdims=True)
    return (v - mu) * jax.lax.rsqrt(var + LN_EPS) * w + b


def clip_layer_kernel(x_ref, ln1w_ref, ln1b_ref, wqkv_ref, bqkv_ref,
                      wo_ref, bo_ref, ln2w_ref, ln2b_ref,
                      w1_ref, b1_ref, w2_ref, b2_ref, o_ref, *, n_head):
    x = x_ref[0]                               # (S, D), f32
    S, D = x.shape
    d_head = D // n_head
    scale = 1.0 / jnp.sqrt(jnp.float32(d_head))

    # ---- LayerNorm 1 + QKV projection (bf16 matmul, f32 accumulation) ----
    h = _layernorm(x, ln1w_ref[0], ln1b_ref[0])                      # f32
    qkv = jnp.dot(h.astype(jnp.bfloat16), wqkv_ref[...],
                  preferred_element_type=jnp.float32) + bqkv_ref[0]  # f32 (S, 3D)
    q = qkv[:, 0 * D:1 * D] * scale            # fold softmax scale into q once
    k = qkv[:, 1 * D:2 * D]
    v = qkv[:, 2 * D:3 * D]

    row = jax.lax.broadcasted_iota(jnp.int32, (S, S), 0)
    col = jax.lax.broadcasted_iota(jnp.int32, (S, S), 1)
    causal_ok = row >= col                     # keep lower-triangular (incl. diag)

    # ---- causal MHSA: accumulate each head directly into the output projection
    attn = jnp.zeros((S, D), jnp.float32)
    for hh in range(n_head):                   # static unrolled loop over heads
        lo = hh * d_head
        qh = q[:, lo:lo + d_head].astype(jnp.bfloat16)
        kh = k[:, lo:lo + d_head].astype(jnp.bfloat16)
        vh = v[:, lo:lo + d_head].astype(jnp.bfloat16)

        s = jnp.dot(qh, kh.T, preferred_element_type=jnp.float32)   # f32 scores
        s = jnp.where(causal_ok, s, NEG_INF)
        s = s - jnp.max(s, axis=-1, keepdims=True)
        p = jnp.exp(s)                                              # f32
        p = p * pl.reciprocal(jnp.sum(p, axis=-1, keepdims=True), approx=True)

        head_out = jnp.dot(p.astype(jnp.bfloat16), vh,
                           preferred_element_type=jnp.float32)      # (S, d_head)
        # (p @ v_h) @ Wo[h-slice]: no concat, output stays lane-dense at width D.
        attn = attn + jnp.dot(head_out.astype(jnp.bfloat16),
                              wo_ref[lo:lo + d_head, :],
                              preferred_element_type=jnp.float32)

    out1 = attn + bo_ref[0] + x                # residual 1 (f32)

    # ---- LayerNorm 2 + MLP with QuickGELU ----
    h2 = _layernorm(out1, ln2w_ref[0], ln2b_ref[0])
    h3 = jnp.dot(h2.astype(jnp.bfloat16), w1_ref[...],
                 preferred_element_type=jnp.float32) + b1_ref[0]
    h3 = h3 * jax.nn.sigmoid(1.702 * h3)       # QuickGELU, f32
    h4 = jnp.dot(h3.astype(jnp.bfloat16), w2_ref[...],
                 preferred_element_type=jnp.float32) + b2_ref[0]

    o_ref[0] = h4 + out1                       # residual 2


def _vmem_limit_bytes(S, D):
    # bf16 weights (qkv, out-proj, mlp up/down) resident across the batch grid.
    weight_bytes = 2 * (3 * D * D + D * D + 4 * D * D + 4 * D * D)
    # f32 activation working set (x/out blocks double-buffered + temporaries).
    act_bytes = 4 * (2 * 2 * S * D       # x / out tiles, double-buffered
                     + 3 * S * D         # qkv
                     + 2 * S * S         # scores + probs
                     + 4 * S * D         # mlp hidden
                     + 4 * S * D)        # misc temporaries
    est = weight_bytes + act_bytes + (1 << 20)
    return int(min(100 * 1024 * 1024, max(16 * 1024 * 1024, 2 * est)))


def _cost_estimate(B, S, D, n_head):
    flops = (2 * B * S * (3 * D * D + D * D + 4 * D * D + 4 * D * D)  # projections + MLP
             + 2 * B * 2 * S * S * D)                                 # QK^T + PV
    transcendentals = B * n_head * S * S + B * S * 4 * D + 4 * B * S  # exp + sigmoid + rsqrt
    bytes_accessed = (2 * B * S * D * 4                               # x in + out
                      + 2 * (3 + 1 + 4 + 4) * D * D                   # bf16 weights
                      + 4 * (3 + 1 + 4 + 1 + 4) * D)                  # biases / LN params
    return pl.CostEstimate(flops=int(flops),
                           transcendentals=int(transcendentals),
                           bytes_accessed=int(bytes_accessed))


def clip_layer(x, params, n_head):
    B, S, D = x.shape
    (ln1w, ln1b, wqkv, bqkv, wo, bo, ln2w, ln2b, w1, b1, w2, b2) = params

    # bf16 weights: half the VMEM/HBM footprint and native MXU operand width.
    kparams = (ln1w, ln1b,
               wqkv.astype(jnp.bfloat16), bqkv,
               wo.astype(jnp.bfloat16), bo,
               ln2w, ln2b,
               w1.astype(jnp.bfloat16), b1,
               w2.astype(jnp.bfloat16), b2)

    def build(single_buffer_weights):
        def const_spec(shape):
            if single_buffer_weights:
                # Constant index_map across the batch grid -> one buffer suffices;
                # default double-buffering would just waste VMEM on every weight.
                return pl.BlockSpec(shape, lambda b: (0,) * len(shape),
                                    pipeline_mode=pl.Buffered(1))
            return pl.BlockSpec(shape, lambda b: (0,) * len(shape))

        in_specs = [pl.BlockSpec((1, S, D), lambda b: (b, 0, 0))]       # x
        in_specs += [const_spec(p.shape) for p in kparams]
        out_spec = pl.BlockSpec((1, S, D), lambda b: (b, 0, 0))

        return pl.pallas_call(
            functools.partial(clip_layer_kernel, n_head=n_head),
            out_shape=jax.ShapeDtypeStruct((B, S, D), jnp.float32),
            grid_spec=pltpu.PrefetchScalarGridSpec(
                num_scalar_prefetch=0,
                grid=(B,),
                in_specs=in_specs,
                out_specs=out_spec,
            ),
            compiler_params=pltpu.CompilerParams(
                dimension_semantics=("parallel",),
                vmem_limit_bytes=_vmem_limit_bytes(S, D)),
            cost_estimate=_cost_estimate(B, S, D, n_head),
        )

    try:
        return build(True)(x, *kparams)
    except Exception:
        # pipeline_mode on pallas_call BlockSpecs unsupported on this jax build:
        # fall back to default double-buffering (identical numerics, more VMEM).
        return build(False)(x, *kparams)


def make_params(key, d_embed):
    ks = jax.random.split(key, 8)
    scale = 0.02
    ln1w = jnp.ones((1, d_embed), jnp.float32)
    ln1b = jnp.zeros((1, d_embed), jnp.float32)
    ln2w = jnp.ones((1, d_embed), jnp.float32)
    ln2b = jnp.zeros((1, d_embed), jnp.float32)
    # Linear weights stored as (in, out)  ==  PyTorch weight.T
    wqkv = scale * jax.random.normal(ks[0], (d_embed, 3 * d_embed), jnp.float32)
    bqkv = scale * jax.random.normal(ks[1], (1, 3 * d_embed), jnp.float32)
    wo = scale * jax.random.normal(ks[2], (d_embed, d_embed), jnp.float32)
    bo = scale * jax.random.normal(ks[3], (1, d_embed), jnp.float32)
    w1 = scale * jax.random.normal(ks[4], (d_embed, 4 * d_embed), jnp.float32)
    b1 = scale * jax.random.normal(ks[5], (1, 4 * d_embed), jnp.float32)
    w2 = scale * jax.random.normal(ks[6], (4 * d_embed, d_embed), jnp.float32)
    b2 = scale * jax.random.normal(ks[7], (1, d_embed), jnp.float32)
    return (ln1w, ln1b, wqkv, bqkv, wo, bo, ln2w, ln2b, w1, b1, w2, b2)


def reference(x, params, n_head):
    # Pure-JAX f32 reference matching the PyTorch module.
    (ln1w, ln1b, wqkv, bqkv, wo, bo, ln2w, ln2b, w1, b1, w2, b2) = params
    B, S, D = x.shape
    dh = D // n_head

    def ln(v, w, b):
        mu = v.mean(-1, keepdims=True)
        var = ((v - mu) ** 2).mean(-1, keepdims=True)
        return (v - mu) / jnp.sqrt(var + LN_EPS) * w + b

    h = ln(x, ln1w[0], ln1b[0])
    qkv = h @ wqkv + bqkv[0]
    q, k, v = jnp.split(qkv, 3, axis=-1)
    q = q.reshape(B, S, n_head, dh).transpose(0, 2, 1, 3)
    k = k.reshape(B, S, n_head, dh).transpose(0, 2, 1, 3)
    v = v.reshape(B, S, n_head, dh).transpose(0, 2, 1, 3)
    s = jnp.einsum("bhqd,bhkd->bhqk", q, k) / jnp.sqrt(jnp.float32(dh))
    mask = jnp.tril(jnp.ones((S, S), bool))
    s = jnp.where(mask, s, -jnp.inf)
    p = jax.nn.softmax(s, axis=-1)
    a = jnp.einsum("bhqk,bhkd->bhqd", p, v).transpose(0, 2, 1, 3).reshape(B, S, D)
    out = a @ wo + bo[0] + x
    res = out
    h2 = ln(out, ln2w[0], ln2b[0])
    h3 = h2 @ w1 + b1[0]
    h3 = h3 * jax.nn.sigmoid(1.702 * h3)
    return h3 @ w2 + b2[0] + res


if __name__ == "__main__":
    n_head, d_embed = 4, 32
    batch, seq = 2, 8
    key = jax.random.PRNGKey(0)
    kx, kp = jax.random.split(key)
    x = jax.random.normal(kx, (batch, seq, d_embed), jnp.float32)
    params = make_params(kp, d_embed)

    out = clip_layer(x, params, n_head)
    jax.block_until_ready(out)

    ref = reference(x, params, n_head)
    assert out.shape == (batch, seq, d_embed)
    # bf16 matmul operands + approx reciprocal => compare against f32 reference
    # at bf16-appropriate tolerance.
    assert jnp.allclose(out, ref, atol=1e-2, rtol=1e-2), "mismatch vs JAX reference"
    print("KERNEL_OK")
</pallas_src>

<mosaic_0001>
module attributes {stable_mosaic.version = 11 : i64} {
  func.func @clip_layer_kernel(%arg0: i32, %arg1: memref<1x8x32xf32, #tpu.memory_space<vmem>>, %arg2: memref<1x32xf32, #tpu.memory_space<vmem>>, %arg3: memref<1x32xf32, #tpu.memory_space<vmem>>, %arg4: memref<32x96xbf16, #tpu.memory_space<vmem>>, %arg5: memref<1x96xf32, #tpu.memory_space<vmem>>, %arg6: memref<32x32xbf16, #tpu.memory_space<vmem>>, %arg7: memref<1x32xf32, #tpu.memory_space<vmem>>, %arg8: memref<1x32xf32, #tpu.memory_space<vmem>>, %arg9: memref<1x32xf32, #tpu.memory_space<vmem>>, %arg10: memref<32x128xbf16, #tpu.memory_space<vmem>>, %arg11: memref<1x128xf32, #tpu.memory_space<vmem>>, %arg12: memref<128x32xbf16, #tpu.memory_space<vmem>>, %arg13: memref<1x32xf32, #tpu.memory_space<vmem>>, %arg14: memref<1x8x32xf32, #tpu.memory_space<vmem>>) attributes {dimension_semantics = [#tpu.dimension_semantics<parallel>], iteration_bounds = array<i64: 2>, scalar_prefetch = 0 : i64, scratch_operands = 0 : i64, tpu.core_type = #tpu.core_type<tc>, window_params = [{transform_indices = @transform_0, window_bounds = array<i64: 1, 8, 32>}, {pipeline_mode = #tpu.pipeline_mode<synchronous>, transform_indices = @transform_1, window_bounds = array<i64: 1, 32>}, {pipeline_mode = #tpu.pipeline_mode<synchronous>, transform_indices = @transform_2, window_bounds = array<i64: 1, 32>}, {pipeline_mode = #tpu.pipeline_mode<synchronous>, transform_indices = @transform_3, window_bounds = array<i64: 32, 96>}, {pipeline_mode = #tpu.pipeline_mode<synchronous>, transform_indices = @transform_4, window_bounds = array<i64: 1, 96>}, {pipeline_mode = #tpu.pipeline_mode<synchronous>, transform_indices = @transform_5, window_bounds = array<i64: 32, 32>}, {pipeline_mode = #tpu.pipeline_mode<synchronous>, transform_indices = @transform_6, window_bounds = array<i64: 1, 32>}, {pipeline_mode = #tpu.pipeline_mode<synchronous>, transform_indices = @transform_7, window_bounds = array<i64: 1, 32>}, {pipeline_mode = #tpu.pipeline_mode<synchronous>, transform_indices = @transform_8, window_bounds = array<i64: 1, 32>}, {pipeline_mode = #tpu.pipeline_mode<synchronous>, transform_indices = @transform_9, window_bounds = array<i64: 32, 128>}, {pipeline_mode = #tpu.pipeline_mode<synchronous>, transform_indices = @transform_10, window_bounds = array<i64: 1, 128>}, {pipeline_mode = #tpu.pipeline_mode<synchronous>, transform_indices = @transform_11, window_bounds = array<i64: 128, 32>}, {pipeline_mode = #tpu.pipeline_mode<synchronous>, transform_indices = @transform_12, window_bounds = array<i64: 1, 32>}, {transform_indices = @transform_13, window_bounds = array<i64: 1, 8, 32>}]} {
    %c0 = arith.constant 0 : index
    %c0_0 = arith.constant 0 : index
    %c0_1 = arith.constant 0 : index
    %0 = vector.load %arg1[%c0, %c0_0, %c0_1] : memref<1x8x32xf32, #tpu.memory_space<vmem>>, vector<1x8x32xf32>
    %1 = vector.shape_cast %0 : vector<1x8x32xf32> to vector<8x32xf32>
    %cst = arith.constant 8.000000e+00 : f32
    %2 = math.sqrt %cst : f32
    %cst_2 = arith.constant 1.000000e+00 : f32
    %3 = arith.divf %cst_2, %2 : f32
    %c0_3 = arith.constant 0 : index
    %c0_4 = arith.constant 0 : index
    %4 = vector.load %arg2[%c0_3, %c0_4] : memref<1x32xf32, #tpu.memory_space<vmem>>, vector<1x32xf32>
    %5 = vector.shape_cast %4 : vector<1x32xf32> to vector<32xf32>
    %c0_5 = arith.constant 0 : index
    %c0_6 = arith.constant 0 : index
    %6 = vector.load %arg3[%c0_5, %c0_6] : memref<1x32xf32, #tpu.memory_space<vmem>>, vector<1x32xf32>
    %7 = vector.shape_cast %6 : vector<1x32xf32> to vector<32xf32>
    %cst_7 = arith.constant dense<0.000000e+00> : vector<8xf32>
    %8 = vector.multi_reduction <add>, %1, %cst_7 [1] : vector<8x32xf32> to vector<8xf32>
    %9 = vector.shape_cast %8 : vector<8xf32> to vector<8x1xf32>
    %cst_8 = arith.constant 3.200000e+01 : f32
    %10 = vector.broadcast %cst_8 : f32 to vector<8x1xf32>
    %11 = arith.divf %9, %10 : vector<8x1xf32>
    %12 = vector.broadcast %11 : vector<8x1xf32> to vector<8x32xf32>
    %13 = arith.subf %1, %12 : vector<8x32xf32>
    %14 = arith.mulf %13, %13 : vector<8x32xf32>
    %cst_9 = arith.constant dense<0.000000e+00> : vector<8xf32>
    %15 = vector.multi_reduction <add>, %14, %cst_9 [1] : vector<8x32xf32> to vector<8xf32>
    %16 = vector.shape_cast %15 : vector<8xf32> to vector<8x1xf32>
    %cst_10 = arith.constant 3.200000e+01 : f32
    %17 = vector.broadcast %cst_10 : f32 to vector<8x1xf32>
    %18 = arith.divf %16, %17 : vector<8x1xf32>
    %19 = vector.broadcast %11 : vector<8x1xf32> to vector<8x32xf32>
    %20 = arith.subf %1, %19 : vector<8x32xf32>
    %cst_11 = arith.constant 9.99999974E-6 : f32
    %21 = vector.broadcast %cst_11 : f32 to vector<8x1xf32>
    %22 = arith.addf %18, %21 : vector<8x1xf32>
    %23 = math.rsqrt %22 : vector<8x1xf32>
    %24 = vector.broadcast %23 : vector<8x1xf32> to vector<8x32xf32>
    %25 = arith.mulf %20, %24 : vector<8x32xf32>
    %26 = vector.shape_cast %5 : vector<32xf32> to vector<1x32xf32>
    %27 = vector.broadcast %26 : vector<1x32xf32> to vector<8x32xf32>
    %28 = arith.mulf %25, %27 : vector<8x32xf32>
    %29 = vector.shape_cast %7 : vector<32xf32> to vector<1x32xf32>
    %30 = vector.broadcast %29 : vector<1x32xf32> to vector<8x32xf32>
    %31 = arith.addf %28, %30 : vector<8x32xf32>
    %32 = arith.truncf %31 : vector<8x32xf32> to vector<8x32xbf16>
    %c0_12 = arith.constant 0 : index
    %c0_13 = arith.constant 0 : index
    %33 = vector.load %arg4[%c0_12, %c0_13] : memref<32x96xbf16, #tpu.memory_space<vmem>>, vector<32x96xbf16>
    %cst_14 = arith.constant dense<0.000000e+00> : vector<8x96xf32>
    %34 = tpu.matmul %32, %33, %cst_14 {dimension_numbers = #tpu.dot_dimension_numbers<[1], [0], [0], [1], [0, 0, 1, 1], [], []>} : vector<8x32xbf16>, vector<32x96xbf16>, vector<8x96xf32> -> vector<8x96xf32>
    %c0_15 = arith.constant 0 : index
    %c0_16 = arith.constant 0 : index
    %35 = vector.load %arg5[%c0_15, %c0_16] : memref<1x96xf32, #tpu.memory_space<vmem>>, vector<1x96xf32>
    %36 = vector.shape_cast %35 : vector<1x96xf32> to vector<96xf32>
    %37 = vector.shape_cast %36 : vector<96xf32> to vector<1x96xf32>
    %38 = vector.broadcast %37 : vector<1x96xf32> to vector<8x96xf32>
    %39 = arith.addf %34, %38 : vector<8x96xf32>
    %40 = vector.extract_strided_slice %39 {offsets = [0, 0], sizes = [8, 32], strides = [1, 1]} : vector<8x96xf32> to vector<8x32xf32>
    %41 = vector.broadcast %3 : f32 to vector<8x32xf32>
    %42 = arith.mulf %40, %41 : vector<8x32xf32>
    %43 = vector.extract_strided_slice %39 {offsets = [0, 32], sizes = [8, 32], strides = [1, 1]} : vector<8x96xf32> to vector<8x32xf32>
    %44 = vector.extract_strided_slice %39 {offsets = [0, 64], sizes = [8, 32], strides = [1, 1]} : vector<8x96xf32> to vector<8x32xf32>
    %45 = tpu.iota {dimensions = array<i32: 0>} : vector<8x8xi32>
    %46 = tpu.iota {dimensions = array<i32: 1>} : vector<8x8xi32>
    %47 = arith.cmpi sge, %45, %46 : vector<8x8xi32>
    %cst_17 = arith.constant 0.000000e+00 : f32
    %48 = vector.broadcast %cst_17 : f32 to vector<8x32xf32>
    %49 = vector.extract_strided_slice %42 {offsets = [0, 0], sizes = [8, 8], strides = [1, 1]} : vector<8x32xf32> to vector<8x8xf32>
    %50 = arith.truncf %49 : vector<8x8xf32> to vector<8x8xbf16>
    %51 = vector.extract_strided_slice %43 {offsets = [0, 0], sizes = [8, 8], strides = [1, 1]} : vector<8x32xf32> to vector<8x8xf32>
    %52 = arith.truncf %51 : vector<8x8xf32> to vector<8x8xbf16>
    %53 = vector.extract_strided_slice %44 {offsets = [0, 0], sizes = [8, 8], strides = [1, 1]} : vector<8x32xf32> to vector<8x8xf32>
    %54 = arith.truncf %53 : vector<8x8xf32> to vector<8x8xbf16>
    %55 = tpu.transpose %52, [1, 0] : vector<8x8xbf16> -> vector<8x8xbf16>
    %cst_18 = arith.constant dense<0.000000e+00> : vector<8x8xf32>
    %56 = tpu.matmul %50, %55, %cst_18 {dimension_numbers = #tpu.dot_dimension_numbers<[1], [0], [0], [1], [0, 0, 1, 1], [], []>} : vector<8x8xbf16>, vector<8x8xbf16>, vector<8x8xf32> -> vector<8x8xf32>
    %cst_19 = arith.constant -1.000000e+30 : f32
    %57 = vector.broadcast %cst_19 : f32 to vector<8x8xf32>
    %58 = arith.select %47, %56, %57 : vector<8x8xi1>, vector<8x8xf32>
    %cst_20 = arith.constant dense<0xFF800000> : vector<8xf32>
    %59 = vector.multi_reduction <maximumf>, %58, %cst_20 [1] : vector<8x8xf32> to vector<8xf32>
    %60 = vector.shape_cast %59 : vector<8xf32> to vector<8x1xf32>
    %61 = vector.broadcast %60 : vector<8x1xf32> to vector<8x8xf32>
    %62 = arith.subf %58, %61 : vector<8x8xf32>
    %63 = math.exp %62 : vector<8x8xf32>
    %cst_21 = arith.constant dense<0.000000e+00> : vector<8xf32>
    %64 = vector.multi_reduction <add>, %63, %cst_21 [1] : vector<8x8xf32> to vector<8xf32>
    %65 = vector.shape_cast %64 : vector<8xf32> to vector<8x1xf32>
    %66 = tpu.reciprocal %65 {approx = true} : vector<8x1xf32> -> vector<8x1xf32>
    %67 = vector.broadcast %66 : vector<8x1xf32> to vector<8x8xf32>
    %68 = arith.mulf %63, %67 : vector<8x8xf32>
    %69 = arith.truncf %68 : vector<8x8xf32> to vector<8x8xbf16>
    %cst_22 = arith.constant dense<0.000000e+00> : vector<8x8xf32>
    %70 = tpu.matmul %69, %54, %cst_22 {dimension_numbers = #tpu.dot_dimension_numbers<[1], [0], [0], [1], [0, 0, 1, 1], [], []>} : vector<8x8xbf16>, vector<8x8xbf16>, vector<8x8xf32> -> vector<8x8xf32>
    %71 = arith.truncf %70 : vector<8x8xf32> to vector<8x8xbf16>
    %c0_23 = arith.constant 0 : index
    %c0_24 = arith.constant 0 : index
    %72 = vector.load %arg6[%c0_23, %c0_24] : memref<32x32xbf16, #tpu.memory_space<vmem>>, vector<8x32xbf16>
    %cst_25 = arith.constant dense<0.000000e+00> : vector<8x32xf32>
    %73 = tpu.matmul %71, %72, %cst_25 {dimension_numbers = #tpu.dot_dimension_numbers<[1], [0], [0], [1], [0, 0, 1, 1], [], []>} : vector<8x8xbf16>, vector<8x32xbf16>, vector<8x32xf32> -> vector<8x32xf32>
    %74 = arith.addf %48, %73 : vector<8x32xf32>
    %75 = vector.extract_strided_slice %42 {offsets = [0, 8], sizes = [8, 8], strides = [1, 1]} : vector<8x32xf32> to vector<8x8xf32>
    %76 = arith.truncf %75 : vector<8x8xf32> to vector<8x8xbf16>
    %77 = vector.extract_strided_slice %43 {offsets = [0, 8], sizes = [8, 8], strides = [1, 1]} : vector<8x32xf32> to vector<8x8xf32>
    %78 = arith.truncf %77 : vector<8x8xf32> to vector<8x8xbf16>
    %79 = vector.extract_strided_slice %44 {offsets = [0, 8], sizes = [8, 8], strides = [1, 1]} : vector<8x32xf32> to vector<8x8xf32>
    %80 = arith.truncf %79 : vector<8x8xf32> to vector<8x8xbf16>
    %81 = tpu.transpose %78, [1, 0] : vector<8x8xbf16> -> vector<8x8xbf16>
    %cst_26 = arith.constant dense<0.000000e+00> : vector<8x8xf32>
    %82 = tpu.matmul %76, %81, %cst_26 {dimension_numbers = #tpu.dot_dimension_numbers<[1], [0], [0], [1], [0, 0, 1, 1], [], []>} : vector<8x8xbf16>, vector<8x8xbf16>, vector<8x8xf32> -> vector<8x8xf32>
    %cst_27 = arith.constant -1.000000e+30 : f32
    %83 = vector.broadcast %cst_27 : f32 to vector<8x8xf32>
    %84 = arith.select %47, %82, %83 : vector<8x8xi1>, vector<8x8xf32>
    %cst_28 = arith.constant dense<0xFF800000> : vector<8xf32>
    %85 = vector.multi_reduction <maximumf>, %84, %cst_28 [1] : vector<8x8xf32> to vector<8xf32>
    %86 = vector.shape_cast %85 : vector<8xf32> to vector<8x1xf32>
    %87 = vector.broadcast %86 : vector<8x1xf32> to vector<8x8xf32>
    %88 = arith.subf %84, %87 : vector<8x8xf32>
    %89 = math.exp %88 : vector<8x8xf32>
    %cst_29 = arith.constant dense<0.000000e+00> : vector<8xf32>
    %90 = vector.multi_reduction <add>, %89, %cst_29 [1] : vector<8x8xf32> to vector<8xf32>
    %91 = vector.shape_cast %90 : vector<8xf32> to vector<8x1xf32>
    %92 = tpu.reciprocal %91 {approx = true} : vector<8x1xf32> -> vector<8x1xf32>
    %93 = vector.broadcast %92 : vector<8x1xf32> to vector<8x8xf32>
    %94 = arith.mulf %89, %93 : vector<8x8xf32>
    %95 = arith.truncf %94 : vector<8x8xf32> to vector<8x8xbf16>
    %cst_30 = arith.constant dense<0.000000e+00> : vector<8x8xf32>
    %96 = tpu.matmul %95, %80, %cst_30 {dimension_numbers = #tpu.dot_dimension_numbers<[1], [0], [0], [1], [0, 0, 1, 1], [], []>} : vector<8x8xbf16>, vector<8x8xbf16>, vector<8x8xf32> -> vector<8x8xf32>
    %97 = arith.truncf %96 : vector<8x8xf32> to vector<8x8xbf16>
    %c8 = arith.constant 8 : index
    %c0_31 = arith.constant 0 : index
    %98 = vector.load %arg6[%c8, %c0_31] : memref<32x32xbf16, #tpu.memory_space<vmem>>, vector<8x32xbf16>
    %cst_32 = arith.constant dense<0.000000e+00> : vector<8x32xf32>
    %99 = tpu.matmul %97, %98, %cst_32 {dimension_numbers = #tpu.dot_dimension_numbers<[1], [0], [0], [1], [0, 0, 1, 1], [], []>} : vector<8x8xbf16>, vector<8x32xbf16>, vector<8x32xf32> -> vector<8x32xf32>
    %100 = arith.addf %74, %99 : vector<8x32xf32>
    %101 = vector.extract_strided_slice %42 {offsets = [0, 16], sizes = [8, 8], strides = [1, 1]} : vector<8x32xf32> to vector<8x8xf32>
    %102 = arith.truncf %101 : vector<8x8xf32> to vector<8x8xbf16>
    %103 = vector.extract_strided_slice %43 {offsets = [0, 16], sizes = [8, 8], strides = [1, 1]} : vector<8x32xf32> to vector<8x8xf32>
    %104 = arith.truncf %103 : vector<8x8xf32> to vector<8x8xbf16>
    %105 = vector.extract_strided_slice %44 {offsets = [0, 16], sizes = [8, 8], strides = [1, 1]} : vector<8x32xf32> to vector<8x8xf32>
    %106 = arith.truncf %105 : vector<8x8xf32> to vector<8x8xbf16>
    %107 = tpu.transpose %104, [1, 0] : vector<8x8xbf16> -> vector<8x8xbf16>
    %cst_33 = arith.constant dense<0.000000e+00> : vector<8x8xf32>
    %108 = tpu.matmul %102, %107, %cst_33 {dimension_numbers = #tpu.dot_dimension_numbers<[1], [0], [0], [1], [0, 0, 1, 1], [], []>} : vector<8x8xbf16>, vector<8x8xbf16>, vector<8x8xf32> -> vector<8x8xf32>
    %cst_34 = arith.constant -1.000000e+30 : f32
    %109 = vector.broadcast %cst_34 : f32 to vector<8x8xf32>
    %110 = arith.select %47, %108, %109 : vector<8x8xi1>, vector<8x8xf32>
    %cst_35 = arith.constant dense<0xFF800000> : vector<8xf32>
    %111 = vector.multi_reduction <maximumf>, %110, %cst_35 [1] : vector<8x8xf32> to vector<8xf32>
    %112 = vector.shape_cast %111 : vector<8xf32> to vector<8x1xf32>
    %113 = vector.broadcast %112 : vector<8x1xf32> to vector<8x8xf32>
    %114 = arith.subf %110, %113 : vector<8x8xf32>
    %115 = math.exp %114 : vector<8x8xf32>
    %cst_36 = arith.constant dense<0.000000e+00> : vector<8xf32>
    %116 = vector.multi_reduction <add>, %115, %cst_36 [1] : vector<8x8xf32> to vector<8xf32>
    %117 = vector.shape_cast %116 : vector<8xf32> to vector<8x1xf32>
    %118 = tpu.reciprocal %117 {approx = true} : vector<8x1xf32> -> vector<8x1xf32>
    %119 = vector.broadcast %118 : vector<8x1xf32> to vector<8x8xf32>
    %120 = arith.mulf %115, %119 : vector<8x8xf32>
    %121 = arith.truncf %120 : vector<8x8xf32> to vector<8x8xbf16>
    %cst_37 = arith.constant dense<0.000000e+00> : vector<8x8xf32>
    %122 = tpu.matmul %121, %106, %cst_37 {dimension_numbers = #tpu.dot_dimension_numbers<[1], [0], [0], [1], [0, 0, 1, 1], [], []>} : vector<8x8xbf16>, vector<8x8xbf16>, vector<8x8xf32> -> vector<8x8xf32>
    %123 = arith.truncf %122 : vector<8x8xf32> to vector<8x8xbf16>
    %c16 = arith.constant 16 : index
    %c0_38 = arith.constant 0 : index
    %124 = vector.load %arg6[%c16, %c0_38] : memref<32x32xbf16, #tpu.memory_space<vmem>>, vector<8x32xbf16>
    %cst_39 = arith.constant dense<0.000000e+00> : vector<8x32xf32>
    %125 = tpu.matmul %123, %124, %cst_39 {dimension_numbers = #tpu.dot_dimension_numbers<[1], [0], [0], [1], [0, 0, 1, 1], [], []>} : vector<8x8xbf16>, vector<8x32xbf16>, vector<8x32xf32> -> vector<8x32xf32>
    %126 = arith.addf %100, %125 : vector<8x32xf32>
    %127 = vector.extract_strided_slice %42 {offsets = [0, 24], sizes = [8, 8], strides = [1, 1]} : vector<8x32xf32> to vector<8x8xf32>
    %128 = arith.truncf %127 : vector<8x8xf32> to vector<8x8xbf16>
    %129 = vector.extract_strided_slice %43 {offsets = [0, 24], sizes = [8, 8], strides = [1, 1]} : vector<8x32xf32> to vector<8x8xf32>
    %130 = arith.truncf %129 : vector<8x8xf32> to vector<8x8xbf16>
    %131 = vector.extract_strided_slice %44 {offsets = [0, 24], sizes = [8, 8], strides = [1, 1]} : vector<8x32xf32> to vector<8x8xf32>
    %132 = arith.truncf %131 : vector<8x8xf32> to vector<8x8xbf16>
    %133 = tpu.transpose %130, [1, 0] : vector<8x8xbf16> -> vector<8x8xbf16>
    %cst_40 = arith.constant dense<0.000000e+00> : vector<8x8xf32>
    %134 = tpu.matmul %128, %133, %cst_40 {dimension_numbers = #tpu.dot_dimension_numbers<[1], [0], [0], [1], [0, 0, 1, 1], [], []>} : vector<8x8xbf16>, vector<8x8xbf16>, vector<8x8xf32> -> vector<8x8xf32>
    %cst_41 = arith.constant -1.000000e+30 : f32
    %135 = vector.broadcast %cst_41 : f32 to vector<8x8xf32>
    %136 = arith.select %47, %134, %135 : vector<8x8xi1>, vector<8x8xf32>
    %cst_42 = arith.constant dense<0xFF800000> : vector<8xf32>
    %137 = vector.multi_reduction <maximumf>, %136, %cst_42 [1] : vector<8x8xf32> to vector<8xf32>
    %138 = vector.shape_cast %137 : vector<8xf32> to vector<8x1xf32>
    %139 = vector.broadcast %138 : vector<8x1xf32> to vector<8x8xf32>
    %140 = arith.subf %136, %139 : vector<8x8xf32>
    %141 = math.exp %140 : vector<8x8xf32>
    %cst_43 = arith.constant dense<0.000000e+00> : vector<8xf32>
    %142 = vector.multi_reduction <add>, %141, %cst_43 [1] : vector<8x8xf32> to vector<8xf32>
    %143 = vector.shape_cast %142 : vector<8xf32> to vector<8x1xf32>
    %144 = tpu.reciprocal %143 {approx = true} : vector<8x1xf32> -> vector<8x1xf32>
    %145 = vector.broadcast %144 : vector<8x1xf32> to vector<8x8xf32>
    %146 = arith.mulf %141, %145 : vector<8x8xf32>
    %147 = arith.truncf %146 : vector<8x8xf32> to vector<8x8xbf16>
    %cst_44 = arith.constant dense<0.000000e+00> : vector<8x8xf32>
    %148 = tpu.matmul %147, %132, %cst_44 {dimension_numbers = #tpu.dot_dimension_numbers<[1], [0], [0], [1], [0, 0, 1, 1], [], []>} : vector<8x8xbf16>, vector<8x8xbf16>, vector<8x8xf32> -> vector<8x8xf32>
    %149 = arith.truncf %148 : vector<8x8xf32> to vector<8x8xbf16>
    %c24 = arith.constant 24 : index
    %c0_45 = arith.constant 0 : index
    %150 = vector.load %arg6[%c24, %c0_45] : memref<32x32xbf16, #tpu.memory_space<vmem>>, vector<8x32xbf16>
    %cst_46 = arith.constant dense<0.000000e+00> : vector<8x32xf32>
    %151 = tpu.matmul %149, %150, %cst_46 {dimension_numbers = #tpu.dot_dimension_numbers<[1], [0], [0], [1], [0, 0, 1, 1], [], []>} : vector<8x8xbf16>, vector<8x32xbf16>, vector<8x32xf32> -> vector<8x32xf32>
    %152 = arith.addf %126, %151 : vector<8x32xf32>
    %c0_47 = arith.constant 0 : index
    %c0_48 = arith.constant 0 : index
    %153 = vector.load %arg7[%c0_47, %c0_48] : memref<1x32xf32, #tpu.memory_space<vmem>>, vector<1x32xf32>
    %154 = vector.shape_cast %153 : vector<1x32xf32> to vector<32xf32>
    %155 = vector.shape_cast %154 : vector<32xf32> to vector<1x32xf32>
    %156 = vector.broadcast %155 : vector<1x32xf32> to vector<8x32xf32>
    %157 = arith.addf %152, %156 : vector<8x32xf32>
    %158 = arith.addf %157, %1 : vector<8x32xf32>
    %c0_49 = arith.constant 0 : index
    %c0_50 = arith.constant 0 : index
    %159 = vector.load %arg8[%c0_49, %c0_50] : memref<1x32xf32, #tpu.memory_space<vmem>>, vector<1x32xf32>
    %160 = vector.shape_cast %159 : vector<1x32xf32> to vector<32xf32>
    %c0_51 = arith.constant 0 : index
    %c0_52 = arith.constant 0 : index
    %161 = vector.load %arg9[%c0_51, %c0_52] : memref<1x32xf32, #tpu.memory_space<vmem>>, vector<1x32xf32>
    %162 = vector.shape_cast %161 : vector<1x32xf32> to vector<32xf32>
    %cst_53 = arith.constant dense<0.000000e+00> : vector<8xf32>
    %163 = vector.multi_reduction <add>, %158, %cst_53 [1] : vector<8x32xf32> to vector<8xf32>
    %164 = vector.shape_cast %163 : vector<8xf32> to vector<8x1xf32>
    %cst_54 = arith.constant 3.200000e+01 : f32
    %165 = vector.broadcast %cst_54 : f32 to vector<8x1xf32>
    %166 = arith.divf %164, %165 : vector<8x1xf32>
    %167 = vector.broadcast %166 : vector<8x1xf32> to vector<8x32xf32>
    %168 = arith.subf %158, %167 : vector<8x32xf32>
    %169 = arith.mulf %168, %168 : vector<8x32xf32>
    %cst_55 = arith.constant dense<0.000000e+00> : vector<8xf32>
    %170 = vector.multi_reduction <add>, %169, %cst_55 [1] : vector<8x32xf32> to vector<8xf32>
    %171 = vector.shape_cast %170 : vector<8xf32> to vector<8x1xf32>
    %cst_56 = arith.constant 3.200000e+01 : f32
    %172 = vector.broadcast %cst_56 : f32 to vector<8x1xf32>
    %173 = arith.divf %171, %172 : vector<8x1xf32>
    %174 = vector.broadcast %166 : vector<8x1xf32> to vector<8x32xf32>
    %175 = arith.subf %158, %174 : vector<8x32xf32>
    %cst_57 = arith.constant 9.99999974E-6 : f32
    %176 = vector.broadcast %cst_57 : f32 to vector<8x1xf32>
    %177 = arith.addf %173, %176 : vector<8x1xf32>
    %178 = math.rsqrt %177 : vector<8x1xf32>
    %179 = vector.broadcast %178 : vector<8x1xf32> to vector<8x32xf32>
    %180 = arith.mulf %175, %179 : vector<8x32xf32>
    %181 = vector.shape_cast %160 : vector<32xf32> to vector<1x32xf32>
    %182 = vector.broadcast %181 : vector<1x32xf32> to vector<8x32xf32>
    %183 = arith.mulf %180, %182 : vector<8x32xf32>
    %184 = vector.shape_cast %162 : vector<32xf32> to vector<1x32xf32>
    %185 = vector.broadcast %184 : vector<1x32xf32> to vector<8x32xf32>
    %186 = arith.addf %183, %185 : vector<8x32xf32>
    %187 = arith.truncf %186 : vector<8x32xf32> to vector<8x32xbf16>
    %c0_58 = arith.constant 0 : index
    %c0_59 = arith.constant 0 : index
    %188 = vector.load %arg10[%c0_58, %c0_59] : memref<32x128xbf16, #tpu.memory_space<vmem>>, vector<32x128xbf16>
    %cst_60 = arith.constant dense<0.000000e+00> : vector<8x128xf32>
    %189 = tpu.matmul %187, %188, %cst_60 {dimension_numbers = #tpu.dot_dimension_numbers<[1], [0], [0], [1], [0, 0, 1, 1], [], []>} : vector<8x32xbf16>, vector<32x128xbf16>, vector<8x128xf32> -> vector<8x128xf32>
    %c0_61 = arith.constant 0 : index
    %c0_62 = arith.constant 0 : index
    %190 = vector.load %arg11[%c0_61, %c0_62] : memref<1x128xf32, #tpu.memory_space<vmem>>, vector<1x128xf32>
    %191 = vector.shape_cast %190 : vector<1x128xf32> to vector<128xf32>
    %192 = vector.shape_cast %191 : vector<128xf32> to vector<1x128xf32>
    %193 = vector.broadcast %192 : vector<1x128xf32> to vector<8x128xf32>
    %194 = arith.addf %189, %193 : vector<8x128xf32>
    %cst_63 = arith.constant 1.702000e+00 : f32
    %195 = vector.broadcast %cst_63 : f32 to vector<8x128xf32>
    %196 = arith.mulf %195, %194 : vector<8x128xf32>
    %197 = arith.negf %196 : vector<8x128xf32>
    %198 = math.exp %197 : vector<8x128xf32>
    %cst_64 = arith.constant 1.000000e+00 : f32
    %199 = vector.broadcast %cst_64 : f32 to vector<8x128xf32>
    %200 = arith.addf %199, %198 : vector<8x128xf32>
    %201 = arith.divf %199, %200 : vector<8x128xf32>
    %202 = arith.mulf %194, %201 : vector<8x128xf32>
    %203 = arith.truncf %202 : vector<8x128xf32> to vector<8x128xbf16>
    %c0_65 = arith.constant 0 : index
    %c0_66 = arith.constant 0 : index
    %204 = vector.load %arg12[%c0_65, %c0_66] : memref<128x32xbf16, #tpu.memory_space<vmem>>, vector<128x32xbf16>
    %cst_67 = arith.constant dense<0.000000e+00> : vector<8x32xf32>
    %205 = tpu.matmul %203, %204, %cst_67 {dimension_numbers = #tpu.dot_dimension_numbers<[1], [0], [0], [1], [0, 0, 1, 1], [], []>} : vector<8x128xbf16>, vector<128x32xbf16>, vector<8x32xf32> -> vector<8x32xf32>
    %c0_68 = arith.constant 0 : index
    %c0_69 = arith.constant 0 : index
    %206 = vector.load %arg13[%c0_68, %c0_69] : memref<1x32xf32, #tpu.memory_space<vmem>>, vector<1x32xf32>
    %207 = vector.shape_cast %206 : vector<1x32xf32> to vector<32xf32>
    %208 = vector.shape_cast %207 : vector<32xf32> to vector<1x32xf32>
    %209 = vector.broadcast %208 : vector<1x32xf32> to vector<8x32xf32>
    %210 = arith.addf %205, %209 : vector<8x32xf32>
    %211 = arith.addf %210, %158 : vector<8x32xf32>
    %c0_70 = arith.constant 0 : index
    %c0_71 = arith.constant 0 : index
    %c0_72 = arith.constant 0 : index
    %212 = vector.load %arg14[%c0_70, %c0_71, %c0_72] : memref<1x8x32xf32, #tpu.memory_space<vmem>>, vector<1x8x32xf32>
    %213 = vector.shape_cast %212 : vector<1x8x32xf32> to vector<8x32xf32>
    %214 = vector.shape_cast %211 : vector<8x32xf32> to vector<1x8x32xf32>
    tpu.vector_store %arg14[%c0_70, %c0_71, %c0_72], %214 {strides = array<i32>} : memref<1x8x32xf32, #tpu.memory_space<vmem>>, vector<1x8x32xf32>,
    return
  }
  func.func @transform_0(%arg0: i32) -> (i32, i32, i32) {
    %c0_i32 = arith.constant 0 : i32
    %c0_i32_0 = arith.constant 0 : i32
    %c0_i32_1 = arith.constant 0 : i32
    return %arg0, %c0_i32, %c0_i32_0 : i32, i32, i32
  }
  func.func @transform_1(%arg0: i32) -> (i32, i32) {
    %c0_i32 = arith.constant 0 : i32
    %c0_i32_0 = arith.constant 0 : i32
    %c0_i32_1 = arith.constant 0 : i32
    return %c0_i32, %c0_i32_0 : i32, i32
  }
  func.func @transform_2(%arg0: i32) -> (i32, i32) {
    %c0_i32 = arith.constant 0 : i32
    %c0_i32_0 = arith.constant 0 : i32
    %c0_i32_1 = arith.constant 0 : i32
    return %c0_i32, %c0_i32_0 : i32, i32
  }
  func.func @transform_3(%arg0: i32) -> (i32, i32) {
    %c0_i32 = arith.constant 0 : i32
    %c0_i32_0 = arith.constant 0 : i32
    %c0_i32_1 = arith.constant 0 : i32
    return %c0_i32, %c0_i32_0 : i32, i32
  }
  func.func @transform_4(%arg0: i32) -> (i32, i32) {
    %c0_i32 = arith.constant 0 : i32
    %c0_i32_0 = arith.constant 0 : i32
    %c0_i32_1 = arith.constant 0 : i32
    return %c0_i32, %c0_i32_0 : i32, i32
  }
  func.func @transform_5(%arg0: i32) -> (i32, i32) {
    %c0_i32 = arith.constant 0 : i32
    %c0_i32_0 = arith.constant 0 : i32
    %c0_i32_1 = arith.constant 0 : i32
    return %c0_i32, %c0_i32_0 : i32, i32
  }
  func.func @transform_6(%arg0: i32) -> (i32, i32) {
    %c0_i32 = arith.constant 0 : i32
    %c0_i32_0 = arith.constant 0 : i32
    %c0_i32_1 = arith.constant 0 : i32
    return %c0_i32, %c0_i32_0 : i32, i32
  }
  func.func @transform_7(%arg0: i32) -> (i32, i32) {
    %c0_i32 = arith.constant 0 : i32
    %c0_i32_0 = arith.constant 0 : i32
    %c0_i32_1 = arith.constant 0 : i32
    return %c0_i32, %c0_i32_0 : i32, i32
  }
  func.func @transform_8(%arg0: i32) -> (i32, i32) {
    %c0_i32 = arith.constant 0 : i32
    %c0_i32_0 = arith.constant 0 : i32
    %c0_i32_1 = arith.constant 0 : i32
    return %c0_i32, %c0_i32_0 : i32, i32
  }
  func.func @transform_9(%arg0: i32) -> (i32, i32) {
    %c0_i32 = arith.constant 0 : i32
    %c0_i32_0 = arith.constant 0 : i32
    %c0_i32_1 = arith.constant 0 : i32
    return %c0_i32, %c0_i32_0 : i32, i32
  }
  func.func @transform_10(%arg0: i32) -> (i32, i32) {
    %c0_i32 = arith.constant 0 : i32
    %c0_i32_0 = arith.constant 0 : i32
    %c0_i32_1 = arith.constant 0 : i32
    return %c0_i32, %c0_i32_0 : i32, i32
  }
  func.func @transform_11(%arg0: i32) -> (i32, i32) {
    %c0_i32 = arith.constant 0 : i32
    %c0_i32_0 = arith.constant 0 : i32
    %c0_i32_1 = arith.constant 0 : i32
    return %c0_i32, %c0_i32_0 : i32, i32
  }
  func.func @transform_12(%arg0: i32) -> (i32, i32) {
    %c0_i32 = arith.constant 0 : i32
    %c0_i32_0 = arith.constant 0 : i32
    %c0_i32_1 = arith.constant 0 : i32
    return %c0_i32, %c0_i32_0 : i32, i32
  }
  func.func @transform_13(%arg0: i32) -> (i32, i32, i32) {
    %c0_i32 = arith.constant 0 : i32
    %c0_i32_0 = arith.constant 0 : i32
    %c0_i32_1 = arith.constant 0 : i32
    return %arg0, %c0_i32, %c0_i32_0 : i32, i32, i32
  }
}

module attributes {stable_mosaic.version = 11 : i64} {
  func.func @clip_layer_kernel(%arg0: i32, %arg1: memref<1x8x32xf32, #tpu.memory_space<vmem>>, %arg2: memref<1x32xf32, #tpu.memory_space<vmem>>, %arg3: memref<1x32xf32, #tpu.memory_space<vmem>>, %arg4: memref<32x96xbf16, #tpu.memory_space<vmem>>, %arg5: memref<1x96xf32, #tpu.memory_space<vmem>>, %arg6: memref<32x32xbf16, #tpu.memory_space<vmem>>, %arg7: memref<1x32xf32, #tpu.memory_space<vmem>>, %arg8: memref<1x32xf32, #tpu.memory_space<vmem>>, %arg9: memref<1x32xf32, #tpu.memory_space<vmem>>, %arg10: memref<32x128xbf16, #tpu.memory_space<vmem>>, %arg11: memref<1x128xf32, #tpu.memory_space<vmem>>, %arg12: memref<128x32xbf16, #tpu.memory_space<vmem>>, %arg13: memref<1x32xf32, #tpu.memory_space<vmem>>, %arg14: memref<1x8x32xf32, #tpu.memory_space<vmem>>) attributes {dimension_semantics = [#tpu.dimension_semantics<parallel>], iteration_bounds = array<i64: 2>, scalar_prefetch = 0 : i64, scratch_operands = 0 : i64, tpu.core_type = #tpu.core_type<tc>, window_params = [{transform_indices = @transform_0, window_bounds = array<i64: 1, 8, 32>}, {pipeline_mode = #tpu.pipeline_mode<synchronous>, transform_indices = @transform_1, window_bounds = array<i64: 1, 32>}, {pipeline_mode = #tpu.pipeline_mode<synchronous>, transform_indices = @transform_2, window_bounds = array<i64: 1, 32>}, {pipeline_mode = #tpu.pipeline_mode<synchronous>, transform_indices = @transform_3, window_bounds = array<i64: 32, 96>}, {pipeline_mode = #tpu.pipeline_mode<synchronous>, transform_indices = @transform_4, window_bounds = array<i64: 1, 96>}, {pipeline_mode = #tpu.pipeline_mode<synchronous>, transform_indices = @transform_5, window_bounds = array<i64: 32, 32>}, {pipeline_mode = #tpu.pipeline_mode<synchronous>, transform_indices = @transform_6, window_bounds = array<i64: 1, 32>}, {pipeline_mode = #tpu.pipeline_mode<synchronous>, transform_indices = @transform_7, window_bounds = array<i64: 1, 32>}, {pipeline_mode = #tpu.pipeline_mode<synchronous>, transform_indices = @transform_8, window_bounds = array<i64: 1, 32>}, {pipeline_mode = #tpu.pipeline_mode<synchronous>, transform_indices = @transform_9, window_bounds = array<i64: 32, 128>}, {pipeline_mode = #tpu.pipeline_mode<synchronous>, transform_indices = @transform_10, window_bounds = array<i64: 1, 128>}, {pipeline_mode = #tpu.pipeline_mode<synchronous>, transform_indices = @transform_11, window_bounds = array<i64: 128, 32>}, {pipeline_mode = #tpu.pipeline_mode<synchronous>, transform_indices = @transform_12, window_bounds = array<i64: 1, 32>}, {transform_indices = @transform_13, window_bounds = array<i64: 1, 8, 32>}]} {
    %c0 = arith.constant 0 : index
    %c0_0 = arith.constant 0 : index
    %c0_1 = arith.constant 0 : index
    %0 = vector.load %arg1[%c0, %c0_0, %c0_1] : memref<1x8x32xf32, #tpu.memory_space<vmem>>, vector<1x8x32xf32>
    %1 = vector.shape_cast %0 : vector<1x8x32xf32> to vector<8x32xf32>
    %cst = arith.constant 8.000000e+00 : f32
    %2 = math.sqrt %cst : f32
    %cst_2 = arith.constant 1.000000e+00 : f32
    %3 = arith.divf %cst_2, %2 : f32
    %c0_3 = arith.constant 0 : index
    %c0_4 = arith.constant 0 : index
    %4 = vector.load %arg2[%c0_3, %c0_4] : memref<1x32xf32, #tpu.memory_space<vmem>>, vector<1x32xf32>
    %5 = vector.shape_cast %4 : vector<1x32xf32> to vector<32xf32>
    %c0_5 = arith.constant 0 : index
    %c0_6 = arith.constant 0 : index
    %6 = vector.load %arg3[%c0_5, %c0_6] : memref<1x32xf32, #tpu.memory_space<vmem>>, vector<1x32xf32>
    %7 = vector.shape_cast %6 : vector<1x32xf32> to vector<32xf32>
    %cst_7 = arith.constant dense<0.000000e+00> : vector<8xf32>
    %8 = vector.multi_reduction <add>, %1, %cst_7 [1] : vector<8x32xf32> to vector<8xf32>
    %9 = vector.shape_cast %8 : vector<8xf32> to vector<8x1xf32>
    %cst_8 = arith.constant 3.200000e+01 : f32
    %10 = vector.broadcast %cst_8 : f32 to vector<8x1xf32>
    %11 = arith.divf %9, %10 : vector<8x1xf32>
    %12 = vector.broadcast %11 : vector<8x1xf32> to vector<8x32xf32>
    %13 = arith.subf %1, %12 : vector<8x32xf32>
    %14 = arith.mulf %13, %13 : vector<8x32xf32>
    %cst_9 = arith.constant dense<0.000000e+00> : vector<8xf32>
    %15 = vector.multi_reduction <add>, %14, %cst_9 [1] : vector<8x32xf32> to vector<8xf32>
    %16 = vector.shape_cast %15 : vector<8xf32> to vector<8x1xf32>
    %cst_10 = arith.constant 3.200000e+01 : f32
    %17 = vector.broadcast %cst_10 : f32 to vector<8x1xf32>
    %18 = arith.divf %16, %17 : vector<8x1xf32>
    %19 = vector.broadcast %11 : vector<8x1xf32> to vector<8x32xf32>
    %20 = arith.subf %1, %19 : vector<8x32xf32>
    %cst_11 = arith.constant 9.99999974E-6 : f32
    %21 = vector.broadcast %cst_11 : f32 to vector<8x1xf32>
    %22 = arith.addf %18, %21 : vector<8x1xf32>
    %23 = math.rsqrt %22 : vector<8x1xf32>
    %24 = vector.broadcast %23 : vector<8x1xf32> to vector<8x32xf32>
    %25 = arith.mulf %20, %24 : vector<8x32xf32>
    %26 = vector.shape_cast %5 : vector<32xf32> to vector<1x32xf32>
    %27 = vector.broadcast %26 : vector<1x32xf32> to vector<8x32xf32>
    %28 = arith.mulf %25, %27 : vector<8x32xf32>
    %29 = vector.shape_cast %7 : vector<32xf32> to vector<1x32xf32>
    %30 = vector.broadcast %29 : vector<1x32xf32> to vector<8x32xf32>
    %31 = arith.addf %28, %30 : vector<8x32xf32>
    %32 = arith.truncf %31 : vector<8x32xf32> to vector<8x32xbf16>
    %c0_12 = arith.constant 0 : index
    %c0_13 = arith.constant 0 : index
    %33 = vector.load %arg4[%c0_12, %c0_13] : memref<32x96xbf16, #tpu.memory_space<vmem>>, vector<32x96xbf16>
    %cst_14 = arith.constant dense<0.000000e+00> : vector<8x96xf32>
    %34 = tpu.matmul %32, %33, %cst_14 {dimension_numbers = #tpu.dot_dimension_numbers<[1], [0], [0], [1], [0, 0, 1, 1], [], []>} : vector<8x32xbf16>, vector<32x96xbf16>, vector<8x96xf32> -> vector<8x96xf32>
    %c0_15 = arith.constant 0 : index
    %c0_16 = arith.constant 0 : index
    %35 = vector.load %arg5[%c0_15, %c0_16] : memref<1x96xf32, #tpu.memory_space<vmem>>, vector<1x96xf32>
    %36 = vector.shape_cast %35 : vector<1x96xf32> to vector<96xf32>
    %37 = vector.shape_cast %36 : vector<96xf32> to vector<1x96xf32>
    %38 = vector.broadcast %37 : vector<1x96xf32> to vector<8x96xf32>
    %39 = arith.addf %34, %38 : vector<8x96xf32>
    %40 = vector.extract_strided_slice %39 {offsets = [0, 0], sizes = [8, 32], strides = [1, 1]} : vector<8x96xf32> to vector<8x32xf32>
    %41 = vector.broadcast %3 : f32 to vector<8x32xf32>
    %42 = arith.mulf %40, %41 : vector<8x32xf32>
    %43 = vector.extract_strided_slice %39 {offsets = [0, 32], sizes = [8, 32], strides = [1, 1]} : vector<8x96xf32> to vector<8x32xf32>
    %44 = vector.extract_strided_slice %39 {offsets = [0, 64], sizes = [8, 32], strides = [1, 1]} : vector<8x96xf32> to vector<8x32xf32>
    %45 = tpu.iota {dimensions = array<i32: 0>} : vector<8x8xi32>
    %46 = tpu.iota {dimensions = array<i32: 1>} : vector<8x8xi32>
    %47 = arith.cmpi sge, %45, %46 : vector<8x8xi32>
    %cst_17 = arith.constant 0.000000e+00 : f32
    %48 = vector.broadcast %cst_17 : f32 to vector<8x32xf32>
    %49 = vector.extract_strided_slice %42 {offsets = [0, 0], sizes = [8, 8], strides = [1, 1]} : vector<8x32xf32> to vector<8x8xf32>
    %50 = arith.truncf %49 : vector<8x8xf32> to vector<8x8xbf16>
    %51 = vector.extract_strided_slice %43 {offsets = [0, 0], sizes = [8, 8], strides = [1, 1]} : vector<8x32xf32> to vector<8x8xf32>
    %52 = arith.truncf %51 : vector<8x8xf32> to vector<8x8xbf16>
    %53 = vector.extract_strided_slice %44 {offsets = [0, 0], sizes = [8, 8], strides = [1, 1]} : vector<8x32xf32> to vector<8x8xf32>
    %54 = arith.truncf %53 : vector<8x8xf32> to vector<8x8xbf16>
    %55 = tpu.transpose %52, [1, 0] : vector<8x8xbf16> -> vector<8x8xbf16>
    %cst_18 = arith.constant dense<0.000000e+00> : vector<8x8xf32>
    %56 = tpu.matmul %50, %55, %cst_18 {dimension_numbers = #tpu.dot_dimension_numbers<[1], [0], [0], [1], [0, 0, 1, 1], [], []>} : vector<8x8xbf16>, vector<8x8xbf16>, vector<8x8xf32> -> vector<8x8xf32>
    %cst_19 = arith.constant -1.000000e+30 : f32
    %57 = vector.broadcast %cst_19 : f32 to vector<8x8xf32>
    %58 = arith.select %47, %56, %57 : vector<8x8xi1>, vector<8x8xf32>
    %cst_20 = arith.constant dense<0xFF800000> : vector<8xf32>
    %59 = vector.multi_reduction <maximumf>, %58, %cst_20 [1] : vector<8x8xf32> to vector<8xf32>
    %60 = vector.shape_cast %59 : vector<8xf32> to vector<8x1xf32>
    %61 = vector.broadcast %60 : vector<8x1xf32> to vector<8x8xf32>
    %62 = arith.subf %58, %61 : vector<8x8xf32>
    %63 = math.exp %62 : vector<8x8xf32>
    %cst_21 = arith.constant dense<0.000000e+00> : vector<8xf32>
    %64 = vector.multi_reduction <add>, %63, %cst_21 [1] : vector<8x8xf32> to vector<8xf32>
    %65 = vector.shape_cast %64 : vector<8xf32> to vector<8x1xf32>
    %66 = tpu.reciprocal %65 {approx = true} : vector<8x1xf32> -> vector<8x1xf32>
    %67 = vector.broadcast %66 : vector<8x1xf32> to vector<8x8xf32>
    %68 = arith.mulf %63, %67 : vector<8x8xf32>
    %69 = arith.truncf %68 : vector<8x8xf32> to vector<8x8xbf16>
    %cst_22 = arith.constant dense<0.000000e+00> : vector<8x8xf32>
    %70 = tpu.matmul %69, %54, %cst_22 {dimension_numbers = #tpu.dot_dimension_numbers<[1], [0], [0], [1], [0, 0, 1, 1], [], []>} : vector<8x8xbf16>, vector<8x8xbf16>, vector<8x8xf32> -> vector<8x8xf32>
    %71 = arith.truncf %70 : vector<8x8xf32> to vector<8x8xbf16>
    %c0_23 = arith.constant 0 : index
    %c0_24 = arith.constant 0 : index
    %72 = vector.load %arg6[%c0_23, %c0_24] : memref<32x32xbf16, #tpu.memory_space<vmem>>, vector<8x32xbf16>
    %cst_25 = arith.constant dense<0.000000e+00> : vector<8x32xf32>
    %73 = tpu.matmul %71, %72, %cst_25 {dimension_numbers = #tpu.dot_dimension_numbers<[1], [0], [0], [1], [0, 0, 1, 1], [], []>} : vector<8x8xbf16>, vector<8x32xbf16>, vector<8x32xf32> -> vector<8x32xf32>
    %74 = arith.addf %48, %73 : vector<8x32xf32>
    %75 = vector.extract_strided_slice %42 {offsets = [0, 8], sizes = [8, 8], strides = [1, 1]} : vector<8x32xf32> to vector<8x8xf32>
    %76 = arith.truncf %75 : vector<8x8xf32> to vector<8x8xbf16>
    %77 = vector.extract_strided_slice %43 {offsets = [0, 8], sizes = [8, 8], strides = [1, 1]} : vector<8x32xf32> to vector<8x8xf32>
    %78 = arith.truncf %77 : vector<8x8xf32> to vector<8x8xbf16>
    %79 = vector.extract_strided_slice %44 {offsets = [0, 8], sizes = [8, 8], strides = [1, 1]} : vector<8x32xf32> to vector<8x8xf32>
    %80 = arith.truncf %79 : vector<8x8xf32> to vector<8x8xbf16>
    %81 = tpu.transpose %78, [1, 0] : vector<8x8xbf16> -> vector<8x8xbf16>
    %cst_26 = arith.constant dense<0.000000e+00> : vector<8x8xf32>
    %82 = tpu.matmul %76, %81, %cst_26 {dimension_numbers = #tpu.dot_dimension_numbers<[1], [0], [0], [1], [0, 0, 1, 1], [], []>} : vector<8x8xbf16>, vector<8x8xbf16>, vector<8x8xf32> -> vector<8x8xf32>
    %cst_27 = arith.constant -1.000000e+30 : f32
    %83 = vector.broadcast %cst_27 : f32 to vector<8x8xf32>
    %84 = arith.select %47, %82, %83 : vector<8x8xi1>, vector<8x8xf32>
    %cst_28 = arith.constant dense<0xFF800000> : vector<8xf32>
    %85 = vector.multi_reduction <maximumf>, %84, %cst_28 [1] : vector<8x8xf32> to vector<8xf32>
    %86 = vector.shape_cast %85 : vector<8xf32> to vector<8x1xf32>
    %87 = vector.broadcast %86 : vector<8x1xf32> to vector<8x8xf32>
    %88 = arith.subf %84, %87 : vector<8x8xf32>
    %89 = math.exp %88 : vector<8x8xf32>
    %cst_29 = arith.constant dense<0.000000e+00> : vector<8xf32>
    %90 = vector.multi_reduction <add>, %89, %cst_29 [1] : vector<8x8xf32> to vector<8xf32>
    %91 = vector.shape_cast %90 : vector<8xf32> to vector<8x1xf32>
    %92 = tpu.reciprocal %91 {approx = true} : vector<8x1xf32> -> vector<8x1xf32>
    %93 = vector.broadcast %92 : vector<8x1xf32> to vector<8x8xf32>
    %94 = arith.mulf %89, %93 : vector<8x8xf32>
    %95 = arith.truncf %94 : vector<8x8xf32> to vector<8x8xbf16>
    %cst_30 = arith.constant dense<0.000000e+00> : vector<8x8xf32>
    %96 = tpu.matmul %95, %80, %cst_30 {dimension_numbers = #tpu.dot_dimension_numbers<[1], [0], [0], [1], [0, 0, 1, 1], [], []>} : vector<8x8xbf16>, vector<8x8xbf16>, vector<8x8xf32> -> vector<8x8xf32>
    %97 = arith.truncf %96 : vector<8x8xf32> to vector<8x8xbf16>
    %c8 = arith.constant 8 : index
    %c0_31 = arith.constant 0 : index
    %98 = vector.load %arg6[%c8, %c0_31] : memref<32x32xbf16, #tpu.memory_space<vmem>>, vector<8x32xbf16>
    %cst_32 = arith.constant dense<0.000000e+00> : vector<8x32xf32>
    %99 = tpu.matmul %97, %98, %cst_32 {dimension_numbers = #tpu.dot_dimension_numbers<[1], [0], [0], [1], [0, 0, 1, 1], [], []>} : vector<8x8xbf16>, vector<8x32xbf16>, vector<8x32xf32> -> vector<8x32xf32>
    %100 = arith.addf %74, %99 : vector<8x32xf32>
    %101 = vector.extract_strided_slice %42 {offsets = [0, 16], sizes = [8, 8], strides = [1, 1]} : vector<8x32xf32> to vector<8x8xf32>
    %102 = arith.truncf %101 : vector<8x8xf32> to vector<8x8xbf16>
    %103 = vector.extract_strided_slice %43 {offsets = [0, 16], sizes = [8, 8], strides = [1, 1]} : vector<8x32xf32> to vector<8x8xf32>
    %104 = arith.truncf %103 : vector<8x8xf32> to vector<8x8xbf16>
    %105 = vector.extract_strided_slice %44 {offsets = [0, 16], sizes = [8, 8], strides = [1, 1]} : vector<8x32xf32> to vector<8x8xf32>
    %106 = arith.truncf %105 : vector<8x8xf32> to vector<8x8xbf16>
    %107 = tpu.transpose %104, [1, 0] : vector<8x8xbf16> -> vector<8x8xbf16>
    %cst_33 = arith.constant dense<0.000000e+00> : vector<8x8xf32>
    %108 = tpu.matmul %102, %107, %cst_33 {dimension_numbers = #tpu.dot_dimension_numbers<[1], [0], [0], [1], [0, 0, 1, 1], [], []>} : vector<8x8xbf16>, vector<8x8xbf16>, vector<8x8xf32> -> vector<8x8xf32>
    %cst_34 = arith.constant -1.000000e+30 : f32
    %109 = vector.broadcast %cst_34 : f32 to vector<8x8xf32>
    %110 = arith.select %47, %108, %109 : vector<8x8xi1>, vector<8x8xf32>
    %cst_35 = arith.constant dense<0xFF800000> : vector<8xf32>
    %111 = vector.multi_reduction <maximumf>, %110, %cst_35 [1] : vector<8x8xf32> to vector<8xf32>
    %112 = vector.shape_cast %111 : vector<8xf32> to vector<8x1xf32>
    %113 = vector.broadcast %112 : vector<8x1xf32> to vector<8x8xf32>
    %114 = arith.subf %110, %113 : vector<8x8xf32>
    %115 = math.exp %114 : vector<8x8xf32>
    %cst_36 = arith.constant dense<0.000000e+00> : vector<8xf32>
    %116 = vector.multi_reduction <add>, %115, %cst_36 [1] : vector<8x8xf32> to vector<8xf32>
    %117 = vector.shape_cast %116 : vector<8xf32> to vector<8x1xf32>
    %118 = tpu.reciprocal %117 {approx = true} : vector<8x1xf32> -> vector<8x1xf32>
    %119 = vector.broadcast %118 : vector<8x1xf32> to vector<8x8xf32>
    %120 = arith.mulf %115, %119 : vector<8x8xf32>
    %121 = arith.truncf %120 : vector<8x8xf32> to vector<8x8xbf16>
    %cst_37 = arith.constant dense<0.000000e+00> : vector<8x8xf32>
    %122 = tpu.matmul %121, %106, %cst_37 {dimension_numbers = #tpu.dot_dimension_numbers<[1], [0], [0], [1], [0, 0, 1, 1], [], []>} : vector<8x8xbf16>, vector<8x8xbf16>, vector<8x8xf32> -> vector<8x8xf32>
    %123 = arith.truncf %122 : vector<8x8xf32> to vector<8x8xbf16>
    %c16 = arith.constant 16 : index
    %c0_38 = arith.constant 0 : index
    %124 = vector.load %arg6[%c16, %c0_38] : memref<32x32xbf16, #tpu.memory_space<vmem>>, vector<8x32xbf16>
    %cst_39 = arith.constant dense<0.000000e+00> : vector<8x32xf32>
    %125 = tpu.matmul %123, %124, %cst_39 {dimension_numbers = #tpu.dot_dimension_numbers<[1], [0], [0], [1], [0, 0, 1, 1], [], []>} : vector<8x8xbf16>, vector<8x32xbf16>, vector<8x32xf32> -> vector<8x32xf32>
    %126 = arith.addf %100, %125 : vector<8x32xf32>
    %127 = vector.extract_strided_slice %42 {offsets = [0, 24], sizes = [8, 8], strides = [1, 1]} : vector<8x32xf32> to vector<8x8xf32>
    %128 = arith.truncf %127 : vector<8x8xf32> to vector<8x8xbf16>
    %129 = vector.extract_strided_slice %43 {offsets = [0, 24], sizes = [8, 8], strides = [1, 1]} : vector<8x32xf32> to vector<8x8xf32>
    %130 = arith.truncf %129 : vector<8x8xf32> to vector<8x8xbf16>
    %131 = vector.extract_strided_slice %44 {offsets = [0, 24], sizes = [8, 8], strides = [1, 1]} : vector<8x32xf32> to vector<8x8xf32>
    %132 = arith.truncf %131 : vector<8x8xf32> to vector<8x8xbf16>
    %133 = tpu.transpose %130, [1, 0] : vector<8x8xbf16> -> vector<8x8xbf16>
    %cst_40 = arith.constant dense<0.000000e+00> : vector<8x8xf32>
    %134 = tpu.matmul %128, %133, %cst_40 {dimension_numbers = #tpu.dot_dimension_numbers<[1], [0], [0], [1], [0, 0, 1, 1], [], []>} : vector<8x8xbf16>, vector<8x8xbf16>, vector<8x8xf32> -> vector<8x8xf32>
    %cst_41 = arith.constant -1.000000e+30 : f32
    %135 = vector.broadcast %cst_41 : f32 to vector<8x8xf32>
    %136 = arith.select %47, %134, %135 : vector<8x8xi1>, vector<8x8xf32>
    %cst_42 = arith.constant dense<0xFF800000> : vector<8xf32>
    %137 = vector.multi_reduction <maximumf>, %136, %cst_42 [1] : vector<8x8xf32> to vector<8xf32>
    %138 = vector.shape_cast %137 : vector<8xf32> to vector<8x1xf32>
    %139 = vector.broadcast %138 : vector<8x1xf32> to vector<8x8xf32>
    %140 = arith.subf %136, %139 : vector<8x8xf32>
    %141 = math.exp %140 : vector<8x8xf32>
    %cst_43 = arith.constant dense<0.000000e+00> : vector<8xf32>
    %142 = vector.multi_reduction <add>, %141, %cst_43 [1] : vector<8x8xf32> to vector<8xf32>
    %143 = vector.shape_cast %142 : vector<8xf32> to vector<8x1xf32>
    %144 = tpu.reciprocal %143 {approx = true} : vector<8x1xf32> -> vector<8x1xf32>
    %145 = vector.broadcast %144 : vector<8x1xf32> to vector<8x8xf32>
    %146 = arith.mulf %141, %145 : vector<8x8xf32>
    %147 = arith.truncf %146 : vector<8x8xf32> to vector<8x8xbf16>
    %cst_44 = arith.constant dense<0.000000e+00> : vector<8x8xf32>
    %148 = tpu.matmul %147, %132, %cst_44 {dimension_numbers = #tpu.dot_dimension_numbers<[1], [0], [0], [1], [0, 0, 1, 1], [], []>} : vector<8x8xbf16>, vector<8x8xbf16>, vector<8x8xf32> -> vector<8x8xf32>
    %149 = arith.truncf %148 : vector<8x8xf32> to vector<8x8xbf16>
    %c24 = arith.constant 24 : index
    %c0_45 = arith.constant 0 : index
    %150 = vector.load %arg6[%c24, %c0_45] : memref<32x32xbf16, #tpu.memory_space<vmem>>, vector<8x32xbf16>
    %cst_46 = arith.constant dense<0.000000e+00> : vector<8x32xf32>
    %151 = tpu.matmul %149, %150, %cst_46 {dimension_numbers = #tpu.dot_dimension_numbers<[1], [0], [0], [1], [0, 0, 1, 1], [], []>} : vector<8x8xbf16>, vector<8x32xbf16>, vector<8x32xf32> -> vector<8x32xf32>
    %152 = arith.addf %126, %151 : vector<8x32xf32>
    %c0_47 = arith.constant 0 : index
    %c0_48 = arith.constant 0 : index
    %153 = vector.load %arg7[%c0_47, %c0_48] : memref<1x32xf32, #tpu.memory_space<vmem>>, vector<1x32xf32>
    %154 = vector.shape_cast %153 : vector<1x32xf32> to vector<32xf32>
    %155 = vector.shape_cast %154 : vector<32xf32> to vector<1x32xf32>
    %156 = vector.broadcast %155 : vector<1x32xf32> to vector<8x32xf32>
    %157 = arith.addf %152, %156 : vector<8x32xf32>
    %158 = arith.addf %157, %1 : vector<8x32xf32>
    %c0_49 = arith.constant 0 : index
    %c0_50 = arith.constant 0 : index
    %159 = vector.load %arg8[%c0_49, %c0_50] : memref<1x32xf32, #tpu.memory_space<vmem>>, vector<1x32xf32>
    %160 = vector.shape_cast %159 : vector<1x32xf32> to vector<32xf32>
    %c0_51 = arith.constant 0 : index
    %c0_52 = arith.constant 0 : index
    %161 = vector.load %arg9[%c0_51, %c0_52] : memref<1x32xf32, #tpu.memory_space<vmem>>, vector<1x32xf32>
    %162 = vector.shape_cast %161 : vector<1x32xf32> to vector<32xf32>
    %cst_53 = arith.constant dense<0.000000e+00> : vector<8xf32>
    %163 = vector.multi_reduction <add>, %158, %cst_53 [1] : vector<8x32xf32> to vector<8xf32>
    %164 = vector.shape_cast %163 : vector<8xf32> to vector<8x1xf32>
    %cst_54 = arith.constant 3.200000e+01 : f32
    %165 = vector.broadcast %cst_54 : f32 to vector<8x1xf32>
    %166 = arith.divf %164, %165 : vector<8x1xf32>
    %167 = vector.broadcast %166 : vector<8x1xf32> to vector<8x32xf32>
    %168 = arith.subf %158, %167 : vector<8x32xf32>
    %169 = arith.mulf %168, %168 : vector<8x32xf32>
    %cst_55 = arith.constant dense<0.000000e+00> : vector<8xf32>
    %170 = vector.multi_reduction <add>, %169, %cst_55 [1] : vector<8x32xf32> to vector<8xf32>
    %171 = vector.shape_cast %170 : vector<8xf32> to vector<8x1xf32>
    %cst_56 = arith.constant 3.200000e+01 : f32
    %172 = vector.broadcast %cst_56 : f32 to vector<8x1xf32>
    %173 = arith.divf %171, %172 : vector<8x1xf32>
    %174 = vector.broadcast %166 : vector<8x1xf32> to vector<8x32xf32>
    %175 = arith.subf %158, %174 : vector<8x32xf32>
    %cst_57 = arith.constant 9.99999974E-6 : f32
    %176 = vector.broadcast %cst_57 : f32 to vector<8x1xf32>
    %177 = arith.addf %173, %176 : vector<8x1xf32>
    %178 = math.rsqrt %177 : vector<8x1xf32>
    %179 = vector.broadcast %178 : vector<8x1xf32> to vector<8x32xf32>
    %180 = arith.mulf %175, %179 : vector<8x32xf32>
    %181 = vector.shape_cast %160 : vector<32xf32> to vector<1x32xf32>
    %182 = vector.broadcast %181 : vector<1x32xf32> to vector<8x32xf32>
    %183 = arith.mulf %180, %182 : vector<8x32xf32>
    %184 = vector.shape_cast %162 : vector<32xf32> to vector<1x32xf32>
    %185 = vector.broadcast %184 : vector<1x32xf32> to vector<8x32xf32>
    %186 = arith.addf %183, %185 : vector<8x32xf32>
    %187 = arith.truncf %186 : vector<8x32xf32> to vector<8x32xbf16>
    %c0_58 = arith.constant 0 : index
    %c0_59 = arith.constant 0 : index
    %188 = vector.load %arg10[%c0_58, %c0_59] : memref<32x128xbf16, #tpu.memory_space<vmem>>, vector<32x128xbf16>
    %cst_60 = arith.constant dense<0.000000e+00> : vector<8x128xf32>
    %189 = tpu.matmul %187, %188, %cst_60 {dimension_numbers = #tpu.dot_dimension_numbers<[1], [0], [0], [1], [0, 0, 1, 1], [], []>} : vector<8x32xbf16>, vector<32x128xbf16>, vector<8x128xf32> -> vector<8x128xf32>
    %c0_61 = arith.constant 0 : index
    %c0_62 = arith.constant 0 : index
    %190 = vector.load %arg11[%c0_61, %c0_62] : memref<1x128xf32, #tpu.memory_space<vmem>>, vector<1x128xf32>
    %191 = vector.shape_cast %190 : vector<1x128xf32> to vector<128xf32>
    %192 = vector.shape_cast %191 : vector<128xf32> to vector<1x128xf32>
    %193 = vector.broadcast %192 : vector<1x128xf32> to vector<8x128xf32>
    %194 = arith.addf %189, %193 : vector<8x128xf32>
    %cst_63 = arith.constant 1.702000e+00 : f32
    %195 = vector.broadcast %cst_63 : f32 to vector<8x128xf32>
    %196 = arith.mulf %195, %194 : vector<8x128xf32>
    %197 = arith.negf %196 : vector<8x128xf32>
    %198 = math.exp %197 : vector<8x128xf32>
    %cst_64 = arith.constant 1.000000e+00 : f32
    %199 = vector.broadcast %cst_64 : f32 to vector<8x128xf32>
    %200 = arith.addf %199, %198 : vector<8x128xf32>
    %201 = arith.divf %199, %200 : vector<8x128xf32>
    %202 = arith.mulf %194, %201 : vector<8x128xf32>
    %203 = arith.truncf %202 : vector<8x128xf32> to vector<8x128xbf16>
    %c0_65 = arith.constant 0 : index
    %c0_66 = arith.constant 0 : index
    %204 = vector.load %arg12[%c0_65, %c0_66] : memref<128x32xbf16, #tpu.memory_space<vmem>>, vector<128x32xbf16>
    %cst_67 = arith.constant dense<0.000000e+00> : vector<8x32xf32>
    %205 = tpu.matmul %203, %204, %cst_67 {dimension_numbers = #tpu.dot_dimension_numbers<[1], [0], [0], [1], [0, 0, 1, 1], [], []>} : vector<8x128xbf16>, vector<128x32xbf16>, vector<8x32xf32> -> vector<8x32xf32>
    %c0_68 = arith.constant 0 : index
    %c0_69 = arith.constant 0 : index
    %206 = vector.load %arg13[%c0_68, %c0_69] : memref<1x32xf32, #tpu.memory_space<vmem>>, vector<1x32xf32>
    %207 = vector.shape_cast %206 : vector<1x32xf32> to vector<32xf32>
    %208 = vector.shape_cast %207 : vector<32xf32> to vector<1x32xf32>
    %209 = vector.broadcast %208 : vector<1x32xf32> to vector<8x32xf32>
    %210 = arith.addf %205, %209 : vector<8x32xf32>
    %211 = arith.addf %210, %158 : vector<8x32xf32>
    %c0_70 = arith.constant 0 : index
    %c0_71 = arith.constant 0 : index
    %c0_72 = arith.constant 0 : index
    %212 = vector.load %arg14[%c0_70, %c0_71, %c0_72] : memref<1x8x32xf32, #tpu.memory_space<vmem>>, vector<1x8x32xf32>
    %213 = vector.shape_cast %212 : vector<1x8x32xf32> to vector<8x32xf32>
    %214 = vector.shape_cast %211 : vector<8x32xf32> to vector<1x8x32xf32>
    tpu.vector_store %arg14[%c0_70, %c0_71, %c0_72], %214 {strides = array<i32>} : memref<1x8x32xf32, #tpu.memory_space<vmem>>, vector<1x8x32xf32>,
    return
  }
  func.func @transform_0(%arg0: i32) -> (i32, i32, i32) {
    %c0_i32 = arith.constant 0 : i32
    %c0_i32_0 = arith.constant 0 : i32
    %c0_i32_1 = arith.constant 0 : i32
    return %arg0, %c0_i32, %c0_i32_0 : i32, i32, i32
  }
  func.func @transform_1(%arg0: i32) -> (i32, i32) {
    %c0_i32 = arith.constant 0 : i32
    %c0_i32_0 = arith.constant 0 : i32
    %c0_i32_1 = arith.constant 0 : i32
    return %c0_i32, %c0_i32_0 : i32, i32
  }
  func.func @transform_2(%arg0: i32) -> (i32, i32) {
    %c0_i32 = arith.constant 0 : i32
    %c0_i32_0 = arith.constant 0 : i32
    %c0_i32_1 = arith.constant 0 : i32
    return %c0_i32, %c0_i32_0 : i32, i32
  }
  func.func @transform_3(%arg0: i32) -> (i32, i32) {
    %c0_i32 = arith.constant 0 : i32
    %c0_i32_0 = arith.constant 0 : i32
    %c0_i32_1 = arith.constant 0 : i32
    return %c0_i32, %c0_i32_0 : i32, i32
  }
  func.func @transform_4(%arg0: i32) -> (i32, i32) {
    %c0_i32 = arith.constant 0 : i32
    %c0_i32_0 = arith.constant 0 : i32
    %c0_i32_1 = arith.constant 0 : i32
    return %c0_i32, %c0_i32_0 : i32, i32
  }
  func.func @transform_5(%arg0: i32) -> (i32, i32) {
    %c0_i32 = arith.constant 0 : i32
    %c0_i32_0 = arith.constant 0 : i32
    %c0_i32_1 = arith.constant 0 : i32
    return %c0_i32, %c0_i32_0 : i32, i32
  }
  func.func @transform_6(%arg0: i32) -> (i32, i32) {
    %c0_i32 = arith.constant 0 : i32
    %c0_i32_0 = arith.constant 0 : i32
    %c0_i32_1 = arith.constant 0 : i32
    return %c0_i32, %c0_i32_0 : i32, i32
  }
  func.func @transform_7(%arg0: i32) -> (i32, i32) {
    %c0_i32 = arith.constant 0 : i32
    %c0_i32_0 = arith.constant 0 : i32
    %c0_i32_1 = arith.constant 0 : i32
    return %c0_i32, %c0_i32_0 : i32, i32
  }
  func.func @transform_8(%arg0: i32) -> (i32, i32) {
    %c0_i32 = arith.constant 0 : i32
    %c0_i32_0 = arith.constant 0 : i32
    %c0_i32_1 = arith.constant 0 : i32
    return %c0_i32, %c0_i32_0 : i32, i32
  }
  func.func @transform_9(%arg0: i32) -> (i32, i32) {
    %c0_i32 = arith.constant 0 : i32
    %c0_i32_0 = arith.constant 0 : i32
    %c0_i32_1 = arith.constant 0 : i32
    return %c0_i32, %c0_i32_0 : i32, i32
  }
  func.func @transform_10(%arg0: i32) -> (i32, i32) {
    %c0_i32 = arith.constant 0 : i32
    %c0_i32_0 = arith.constant 0 : i32
    %c0_i32_1 = arith.constant 0 : i32
    return %c0_i32, %c0_i32_0 : i32, i32
  }
  func.func @transform_11(%arg0: i32) -> (i32, i32) {
    %c0_i32 = arith.constant 0 : i32
    %c0_i32_0 = arith.constant 0 : i32
    %c0_i32_1 = arith.constant 0 : i32
    return %c0_i32, %c0_i32_0 : i32, i32
  }
  func.func @transform_12(%arg0: i32) -> (i32, i32) {
    %c0_i32 = arith.constant 0 : i32
    %c0_i32_0 = arith.constant 0 : i32
    %c0_i32_1 = arith.constant 0 : i32
    return %c0_i32, %c0_i32_0 : i32, i32
  }
  func.func @transform_13(%arg0: i32) -> (i32, i32, i32) {
    %c0_i32 = arith.constant 0 : i32
    %c0_i32_0 = arith.constant 0 : i32
    %c0_i32_1 = arith.constant 0 : i32
    return %arg0, %c0_i32, %c0_i32_0 : i32, i32, i32
  }
}

</mosaic_0001>

<llo_original>
// kernel: tpu_custom_call.1
$region0: #{tpu_custom_call.1}
  #allocation0 [shape = 'u32[]', space=smem, size = 0x4, offset = 0x4, fixed_abs, tag = 'smem constant byte address 0x4 - core index']
  #allocation1 [shape = 'u32[144,128]{1,0:T(1,128)}', space=vmem, size = 0x12000, scoped, tag = 'internal scratch']
  %s0 = inlined_call_operand.vmem [shape: f32[2,8,32], index: 0, kind: input, shape index: {}]
  %s1 = inlined_call_operand.vmem [shape: f32[1,32], index: 1, kind: input, shape index: {}]
  %s2 = inlined_call_operand.vmem [shape: f32[1,32], index: 2, kind: input, shape index: {}]
  %s3 = inlined_call_operand.vmem [shape: bf16[32,96], index: 3, kind: input, shape index: {}]
  %s4 = inlined_call_operand.vmem [shape: f32[1,96], index: 4, kind: input, shape index: {}]
  %s5 = inlined_call_operand.vmem [shape: bf16[32,32], index: 5, kind: input, shape index: {}]
  %s6 = inlined_call_operand.vmem [shape: f32[1,32], index: 6, kind: input, shape index: {}]
  %s7 = inlined_call_operand.vmem [shape: f32[1,32], index: 7, kind: input, shape index: {}]
  %s8 = inlined_call_operand.vmem [shape: f32[1,32], index: 8, kind: input, shape index: {}]
  %s9 = inlined_call_operand.vmem [shape: bf16[32,128], index: 9, kind: input, shape index: {}]
  %s10 = inlined_call_operand.vmem [shape: f32[1,128], index: 10, kind: input, shape index: {}]
  %s11 = inlined_call_operand.vmem [shape: bf16[128,32], index: 11, kind: input, shape index: {}]
  %s12 = inlined_call_operand.vmem [shape: f32[1,32], index: 12, kind: input, shape index: {}]
  %s13 = inlined_call_operand.hbm [shape: f32[2,8,32], index: 13, kind: output, shape index: {}]
  %s14 = sld [smem:[#allocation0]]
  $region85: #{tpu_custom_call.1} parent=0
    _
  %s16 = ssub.s32 1, %s14
  %s17 = scalar_select 0, %s16, %s14
  $region1: #{tpu_custom_call.1} parent=0
    #allocation2 [shape = 'u8[8192]{0}', space=vmem, size = 0x2000, scoped, tag = 'output window, operand 0']
    #allocation3 [shape = 's32[2]{0}', space=sflag, size = 0x8, scoped, tag = 'scoped memory for tpu_custom_call.1']
    %18 = vsyncpa [#allocation3], 0
    %s19 = scalar_lea.sflag [#allocation3], 1
    %20 = vsyncpa %s19, 0
    loop: start=0, step=1, limit=4
    $region2: #{tpu_custom_call.1} parent=1 // loop_pre_header
      _
    $region3: #{tpu_custom_call.1} parent=1 // loop_header
      %s22 = sphi 0, %s26
      %p23 = scmp.ge.s32.totalorder %s22, 4
      %s32 = sphi 0, %s34
      %s35 = sphi 0, %s32
      %s36 = sphi 0, %s35
      %s52 = sphi 0, %s36
      %s56 = sphi 0, %s56
      %s58 = sphi 0, %s56
      %s59 = sphi 0, %s58
      %s73 = sphi 0, %s59
      %s77 = sphi 0, %s77
      %s79 = sphi 0, %s77
      %s80 = sphi 0, %s79
      %s94 = sphi 0, %s80
      %s98 = sphi 0, %s98
      %s100 = sphi 0, %s98
      %s101 = sphi 0, %s100
      %s115 = sphi 0, %s101
      %s119 = sphi 0, %s119
      %s121 = sphi 0, %s119
      %s122 = sphi 0, %s121
      %s136 = sphi 0, %s122
      %s140 = sphi 0, %s140
      %s142 = sphi 0, %s140
      %s143 = sphi 0, %s142
      %s157 = sphi 0, %s143
      %s161 = sphi 0, %s161
      %s163 = sphi 0, %s161
      %s164 = sphi 0, %s163
      %s178 = sphi 0, %s164
      %s182 = sphi 0, %s182
      %s184 = sphi 0, %s182
      %s185 = sphi 0, %s184
      %s199 = sphi 0, %s185
      %s203 = sphi 0, %s203
      %s205 = sphi 0, %s203
      %s206 = sphi 0, %s205
      %s220 = sphi 0, %s206
      %s224 = sphi 0, %s224
      %s226 = sphi 0, %s224
      %s227 = sphi 0, %s226
      %s241 = sphi 0, %s227
      %s245 = sphi 0, %s245
      %s247 = sphi 0, %s245
      %s248 = sphi 0, %s247
      %s262 = sphi 0, %s248
      %s266 = sphi 0, %s266
      %s268 = sphi 0, %s266
      %s269 = sphi 0, %s268
      %s283 = sphi 0, %s269
      %s287 = sphi 0, %s287
      %s289 = sphi 0, %s287
      %s290 = sphi 0, %s289
      %s304 = sphi 0, %s290
      %s310 = sphi 0, %s312
      %s313 = sphi 0, %s310
      %s314 = sphi 0, %s313
      %s330 = sphi 0, %s314
    $region4: #{tpu_custom_call.1} parent=1 // loop_header_branch
      %25 = sbr.rel (%p23) target = $region8
    $region5: #{tpu_custom_call.1} parent=1 // loop_body
      %s27 = ssub.s32 %s22, 1
      %s28 = ssub.s32 %s22, 2
      %s29 = sadd.s32 %s22, 1
      %s30 = ssub.s32 %s22, %s29
      %p31 = scmp.eq.s32.totalorder %s30, 0
      %s33 = sadd.s32 %s32, 1
      %s34 = scalar_select %p31, %s32, %s33
      %p37 = pneg %p31
      %p38 = scmp.eq.s32.totalorder %s22, 1
      %p39 = por %p37, %p38
      %p40 = scmp.ne.s32.totalorder %s32, %s35
      %p41 = scmp.eq.s32.totalorder %s22, 0
      %p42 = por %p40, %p41
      %p43 = scmp.ne.s32.totalorder %s32, %s35
      %p44 = scmp.eq.s32.totalorder %s27, 1
      %p45 = por %p43, %p44
      %p46 = scmp.ne.s32.totalorder %s35, %s36
      %p47 = scmp.eq.s32.totalorder %s27, 0
      %p48 = por %p46, %p47
      %p49 = scmp.ne.s32.totalorder %s35, %s36
      %p50 = scmp.eq.s32.totalorder %s28, 1
      %p51 = por %p49, %p50
      %p53 = scmp.ne.s32.totalorder %s36, %s52
      %p54 = scmp.eq.s32.totalorder %s28, 0
      %p55 = por %p53, %p54
      %s57 = sadd.s32 %s56, 1
      %p60 = scmp.eq.s32.totalorder %s22, 1
      %p61 = scmp.ne.s32.totalorder %s56, %s58
      %p62 = scmp.eq.s32.totalorder %s22, 0
      %p63 = por %p61, %p62
      %p64 = scmp.ne.s32.totalorder %s56, %s58
      %p65 = scmp.eq.s32.totalorder %s27, 1
      %p66 = por %p64, %p65
      %p67 = scmp.ne.s32.totalorder %s58, %s59
      %p68 = scmp.eq.s32.totalorder %s27, 0
      %p69 = por %p67, %p68
      %p70 = scmp.ne.s32.totalorder %s58, %s59
      %p71 = scmp.eq.s32.totalorder %s28, 1
      %p72 = por %p70, %p71
      %p74 = scmp.ne.s32.totalorder %s59, %s73
      %p75 = scmp.eq.s32.totalorder %s28, 0
      %p76 = por %p74, %p75
      %s78 = sadd.s32 %s77, 1
      %p81 = scmp.eq.s32.totalorder %s22, 1
      %p82 = scmp.ne.s32.totalorder %s77, %s79
      %p83 = scmp.eq.s32.totalorder %s22, 0
      %p84 = por %p82, %p83
      %p85 = scmp.ne.s32.totalorder %s77, %s79
      %p86 = scmp.eq.s32.totalorder %s27, 1
      %p87 = por %p85, %p86
      %p88 = scmp.ne.s32.totalorder %s79, %s80
      %p89 = scmp.eq.s32.totalorder %s27, 0
      %p90 = por %p88, %p89
      %p91 = scmp.ne.s32.totalorder %s79, %s80
      %p92 = scmp.eq.s32.totalorder %s28, 1
      %p93 = por %p91, %p92
      %p95 = scmp.ne.s32.totalorder %s80, %s94
      %p96 = scmp.eq.s32.totalorder %s28, 0
      %p97 = por %p95, %p96
      %s99 = sadd.s32 %s98, 1
      %p102 = scmp.eq.s32.totalorder %s22, 1
      %p103 = scmp.ne.s32.totalorder %s98, %s100
      %p104 = scmp.eq.s32.totalorder %s22, 0
      %p105 = por %p103, %p104
      %p106 = scmp.ne.s32.totalorder %s98, %s100
      %p107 = scmp.eq.s32.totalorder %s27, 1
      %p108 = por %p106, %p107
      %p109 = scmp.ne.s32.totalorder %s100, %s101
      %p110 = scmp.eq.s32.totalorder %s27, 0
      %p111 = por %p109, %p110
      %p112 = scmp.ne.s32.totalorder %s100, %s101
      %p113 = scmp.eq.s32.totalorder %s28, 1
      %p114 = por %p112, %p113
      %p116 = scmp.ne.s32.totalorder %s101, %s115
      %p117 = scmp.eq.s32.totalorder %s28, 0
      %p118 = por %p116, %p117
      %s120 = sadd.s32 %s119, 1
      %p123 = scmp.eq.s32.totalorder %s22, 1
      %p124 = scmp.ne.s32.totalorder %s119, %s121
      %p125 = scmp.eq.s32.totalorder %s22, 0
      %p126 = por %p124, %p125
      %p127 = scmp.ne.s32.totalorder %s119, %s121
      %p128 = scmp.eq.s32.totalorder %s27, 1
      %p129 = por %p127, %p128
      %p130 = scmp.ne.s32.totalorder %s121, %s122
      %p131 = scmp.eq.s32.totalorder %s27, 0
      %p132 = por %p130, %p131
      %p133 = scmp.ne.s32.totalorder %s121, %s122
      %p134 = scmp.eq.s32.totalorder %s28, 1
      %p135 = por %p133, %p134
      %p137 = scmp.ne.s32.totalorder %s122, %s136
      %p138 = scmp.eq.s32.totalorder %s28, 0
      %p139 = por %p137, %p138
      %s141 = sadd.s32 %s140, 1
      %p144 = scmp.eq.s32.totalorder %s22, 1
      %p145 = scmp.ne.s32.totalorder %s140, %s142
      %p146 = scmp.eq.s32.totalorder %s22, 0
      %p147 = por %p145, %p146
      %p148 = scmp.ne.s32.totalorder %s140, %s142
      %p149 = scmp.eq.s32.totalorder %s27, 1
      %p150 = por %p148, %p149
      %p151 = scmp.ne.s32.totalorder %s142, %s143
      %p152 = scmp.eq.s32.totalorder %s27, 0
      %p153 = por %p151, %p152
      %p154 = scmp.ne.s32.totalorder %s142, %s143
      %p155 = scmp.eq.s32.totalorder %s28, 1
      %p156 = por %p154, %p155
      %p158 = scmp.ne.s32.totalorder %s143, %s157
      %p159 = scmp.eq.s32.totalorder %s28, 0
      %p160 = por %p158, %p159
      %s162 = sadd.s32 %s161, 1
      %p165 = scmp.eq.s32.totalorder %s22, 1
      %p166 = scmp.ne.s32.totalorder %s161, %s163
      %p167 = scmp.eq.s32.totalorder %s22, 0
      %p168 = por %p166, %p167
      %p169 = scmp.ne.s32.totalorder %s161, %s163
      %p170 = scmp.eq.s32.totalorder %s27, 1
      %p171 = por %p169, %p170
      %p172 = scmp.ne.s32.totalorder %s163, %s164
      %p173 = scmp.eq.s32.totalorder %s27, 0
      %p174 = por %p172, %p173
      %p175 = scmp.ne.s32.totalorder %s163, %s164
      %p176 = scmp.eq.s32.totalorder %s28, 1
      %p177 = por %p175, %p176
      %p179 = scmp.ne.s32.totalorder %s164, %s178
      %p180 = scmp.eq.s32.totalorder %s28, 0
      %p181 = por %p179, %p180
      %s183 = sadd.s32 %s182, 1
      %p186 = scmp.eq.s32.totalorder %s22, 1
      %p187 = scmp.ne.s32.totalorder %s182, %s184
      %p188 = scmp.eq.s32.totalorder %s22, 0
      %p189 = por %p187, %p188
      %p190 = scmp.ne.s32.totalorder %s182, %s184
      %p191 = scmp.eq.s32.totalorder %s27, 1
      %p192 = por %p190, %p191
      %p193 = scmp.ne.s32.totalorder %s184, %s185
      %p194 = scmp.eq.s32.totalorder %s27, 0
      %p195 = por %p193, %p194
      %p196 = scmp.ne.s32.totalorder %s184, %s185
      %p197 = scmp.eq.s32.totalorder %s28, 1
      %p198 = por %p196, %p197
      %p200 = scmp.ne.s32.totalorder %s185, %s199
      %p201 = scmp.eq.s32.totalorder %s28, 0
      %p202 = por %p200, %p201
      %s204 = sadd.s32 %s203, 1
      %p207 = scmp.eq.s32.totalorder %s22, 1
      %p208 = scmp.ne.s32.totalorder %s203, %s205
      %p209 = scmp.eq.s32.totalorder %s22, 0
      %p210 = por %p208, %p209
      %p211 = scmp.ne.s32.totalorder %s203, %s205
      %p212 = scmp.eq.s32.totalorder %s27, 1
      %p213 = por %p211, %p212
      %p214 = scmp.ne.s32.totalorder %s205, %s206
      %p215 = scmp.eq.s32.totalorder %s27, 0
      %p216 = por %p214, %p215
      %p217 = scmp.ne.s32.totalorder %s205, %s206
      %p218 = scmp.eq.s32.totalorder %s28, 1
      %p219 = por %p217, %p218
      %p221 = scmp.ne.s32.totalorder %s206, %s220
      %p222 = scmp.eq.s32.totalorder %s28, 0
      %p223 = por %p221, %p222
      %s225 = sadd.s32 %s224, 1
      %p228 = scmp.eq.s32.totalorder %s22, 1
      %p229 = scmp.ne.s32.totalorder %s224, %s226
      %p230 = scmp.eq.s32.totalorder %s22, 0
      %p231 = por %p229, %p230
      %p232 = scmp.ne.s32.totalorder %s224, %s226
      %p233 = scmp.eq.s32.totalorder %s27, 1
      %p234 = por %p232, %p233
      %p235 = scmp.ne.s32.totalorder %s226, %s227
      %p236 = scmp.eq.s32.totalorder %s27, 0
      %p237 = por %p235, %p236
      %p238 = scmp.ne.s32.totalorder %s226, %s227
      %p239 = scmp.eq.s32.totalorder %s28, 1
      %p240 = por %p238, %p239
      %p242 = scmp.ne.s32.totalorder %s227, %s241
      %p243 = scmp.eq.s32.totalorder %s28, 0
      %p244 = por %p242, %p243
      %s246 = sadd.s32 %s245, 1
      %p249 = scmp.eq.s32.totalorder %s22, 1
      %p250 = scmp.ne.s32.totalorder %s245, %s247
      %p251 = scmp.eq.s32.totalorder %s22, 0
      %p252 = por %p250, %p251
      %p253 = scmp.ne.s32.totalorder %s245, %s247
      %p254 = scmp.eq.s32.totalorder %s27, 1
      %p255 = por %p253, %p254
      %p256 = scmp.ne.s32.totalorder %s247, %s248
      %p257 = scmp.eq.s32.totalorder %s27, 0
      %p258 = por %p256, %p257
      %p259 = scmp.ne.s32.totalorder %s247, %s248
      %p260 = scmp.eq.s32.totalorder %s28, 1
      %p261 = por %p259, %p260
      %p263 = scmp.ne.s32.totalorder %s248, %s262
      %p264 = scmp.eq.s32.totalorder %s28, 0
      %p265 = por %p263, %p264
      %s267 = sadd.s32 %s266, 1
      %p270 = scmp.eq.s32.totalorder %s22, 1
      %p271 = scmp.ne.s32.totalorder %s266, %s268
      %p272 = scmp.eq.s32.totalorder %s22, 0
      %p273 = por %p271, %p272
      %p274 = scmp.ne.s32.totalorder %s266, %s268
      %p275 = scmp.eq.s32.totalorder %s27, 1
      %p276 = por %p274, %p275
      %p277 = scmp.ne.s32.totalorder %s268, %s269
      %p278 = scmp.eq.s32.totalorder %s27, 0
      %p279 = por %p277, %p278
      %p280 = scmp.ne.s32.totalorder %s268, %s269
      %p281 = scmp.eq.s32.totalorder %s28, 1
      %p282 = por %p280, %p281
      %p284 = scmp.ne.s32.totalorder %s269, %s283
      %p285 = scmp.eq.s32.totalorder %s28, 0
      %p286 = por %p284, %p285
      %s288 = sadd.s32 %s287, 1
      %p291 = scmp.eq.s32.totalorder %s22, 1
      %p292 = scmp.ne.s32.totalorder %s287, %s289
      %p293 = scmp.eq.s32.totalorder %s22, 0
      %p294 = por %p292, %p293
      %p295 = scmp.ne.s32.totalorder %s287, %s289
      %p296 = scmp.eq.s32.totalorder %s27, 1
      %p297 = por %p295, %p296
      %p298 = scmp.ne.s32.totalorder %s289, %s290
      %p299 = scmp.eq.s32.totalorder %s27, 0
      %p300 = por %p298, %p299
      %p301 = scmp.ne.s32.totalorder %s289, %s290
      %p302 = scmp.eq.s32.totalorder %s28, 1
      %p303 = por %p301, %p302
      %p305 = scmp.ne.s32.totalorder %s290, %s304
      %p306 = scmp.eq.s32.totalorder %s28, 0
      %p307 = por %p305, %p306
      %s308 = ssub.s32 %s22, %s29
      %p309 = scmp.eq.s32.totalorder %s308, 0
      %s311 = sadd.s32 %s310, 1
      %s312 = scalar_select %p309, %s310, %s311
      %p315 = pneg %p309
      %p316 = scmp.eq.s32.totalorder %s22, 1
      %p317 = por %p315, %p316
      %p318 = scmp.ne.s32.totalorder %s310, %s313
      %p319 = scmp.eq.s32.totalorder %s22, 0
      %p320 = por %p318, %p319
      %p321 = scmp.ne.s32.totalorder %s310, %s313
      %p322 = scmp.eq.s32.totalorder %s27, 1
      %p323 = por %p321, %p322
      %p324 = scmp.ne.s32.totalorder %s313, %s314
      %p325 = scmp.eq.s32.totalorder %s27, 0
      %p326 = por %p324, %p325
      %p327 = scmp.ne.s32.totalorder %s313, %s314
      %p328 = scmp.eq.s32.totalorder %s28, 1
      %p329 = por %p327, %p328
      %p331 = scmp.ne.s32.totalorder %s314, %s330
      %p332 = scmp.eq.s32.totalorder %s28, 0
      %p333 = por %p331, %p332
      %p334 = scmp.le.s32.totalorder 1, %s22
      %p335 = scmp.lt.s32.totalorder %s22, 3
      %p336 = pnand %p334, %p335
      %p337 = pneg %p336
      // Predicated region
      $region9: #{tpu_custom_call.1} parent=5 // pred_check
        _
      $region10: #{tpu_custom_call.1} parent=5 // pred_check_branch
        %339 = sbr.rel (%p336) target = $region12
      $region11: #{tpu_custom_call.1} parent=5 // pred_region
        %s340 = ssub.s32 %s22, 1
        // Predicated region
        $region13: #{tpu_custom_call.1} parent=11 // pred_check
          %p341 = pneg %p69
        $region14: #{tpu_custom_call.1} parent=11 // pred_check_branch
          %343 = sbr.rel (%p341) target = $region16
        $region15: #{tpu_custom_call.1} parent=11 // pred_region
          _
        $region16: #{tpu_custom_call.1} parent=11 // pred_fallthru
          _
        // Predicated region
        $region17: #{tpu_custom_call.1} parent=11 // pred_check
          %p344 = pneg %p90
        $region18: #{tpu_custom_call.1} parent=11 // pred_check_branch
          %346 = sbr.rel (%p344) target = $region20
        $region19: #{tpu_custom_call.1} parent=11 // pred_region
          _
        $region20: #{tpu_custom_call.1} parent=11 // pred_fallthru
          _
        // Predicated region
        $region21: #{tpu_custom_call.1} parent=11 // pred_check
          %p347 = pneg %p111
        $region22: #{tpu_custom_call.1} parent=11 // pred_check_branch
          %349 = sbr.rel (%p347) target = $region24
        $region23: #{tpu_custom_call.1} parent=11 // pred_region
          _
        $region24: #{tpu_custom_call.1} parent=11 // pred_fallthru
          _
        // Predicated region
        $region25: #{tpu_custom_call.1} parent=11 // pred_check
          %p350 = pneg %p132
        $region26: #{tpu_custom_call.1} parent=11 // pred_check_branch
          %352 = sbr.rel (%p350) target = $region28
        $region27: #{tpu_custom_call.1} parent=11 // pred_region
          _
        $region28: #{tpu_custom_call.1} parent=11 // pred_fallthru
          _
        // Predicated region
        $region29: #{tpu_custom_call.1} parent=11 // pred_check
          %p353 = pneg %p153
        $region30: #{tpu_custom_call.1} parent=11 // pred_check_branch
          %355 = sbr.rel (%p353) target = $region32
        $region31: #{tpu_custom_call.1} parent=11 // pred_region
          _
        $region32: #{tpu_custom_call.1} parent=11 // pred_fallthru
          _
        // Predicated region
        $region33: #{tpu_custom_call.1} parent=11 // pred_check
          %p356 = pneg %p174
        $region34: #{tpu_custom_call.1} parent=11 // pred_check_branch
          %358 = sbr.rel (%p356) target = $region36
        $region35: #{tpu_custom_call.1} parent=11 // pred_region
          _
        $region36: #{tpu_custom_call.1} parent=11 // pred_fallthru
          _
        // Predicated region
        $region37: #{tpu_custom_call.1} parent=11 // pred_check
          %p359 = pneg %p195
        $region38: #{tpu_custom_call.1} parent=11 // pred_check_branch
          %361 = sbr.rel (%p359) target = $region40
        $region39: #{tpu_custom_call.1} parent=11 // pred_region
          _
        $region40: #{tpu_custom_call.1} parent=11 // pred_fallthru
          _
        // Predicated region
        $region41: #{tpu_custom_call.1} parent=11 // pred_check
          %p362 = pneg %p216
        $region42: #{tpu_custom_call.1} parent=11 // pred_check_branch
          %364 = sbr.rel (%p362) target = $region44
        $region43: #{tpu_custom_call.1} parent=11 // pred_region
          _
        $region44: #{tpu_custom_call.1} parent=11 // pred_fallthru
          _
        // Predicated region
        $region45: #{tpu_custom_call.1} parent=11 // pred_check
          %p365 = pneg %p237
        $region46: #{tpu_custom_call.1} parent=11 // pred_check_branch
          %367 = sbr.rel (%p365) target = $region48
        $region47: #{tpu_custom_call.1} parent=11 // pred_region
          _
        $region48: #{tpu_custom_call.1} parent=11 // pred_fallthru
          _
        // Predicated region
        $region49: #{tpu_custom_call.1} parent=11 // pred_check
          %p368 = pneg %p258
        $region50: #{tpu_custom_call.1} parent=11 // pred_check_branch
          %370 = sbr.rel (%p368) target = $region52
        $region51: #{tpu_custom_call.1} parent=11 // pred_region
          _
        $region52: #{tpu_custom_call.1} parent=11 // pred_fallthru
          _
        // Predicated region
        $region53: #{tpu_custom_call.1} parent=11 // pred_check
          %p371 = pneg %p279
        $region54: #{tpu_custom_call.1} parent=11 // pred_check_branch
          %373 = sbr.rel (%p371) target = $region56
        $region55: #{tpu_custom_call.1} parent=11 // pred_region
          _
        $region56: #{tpu_custom_call.1} parent=11 // pred_fallthru
          _
        // Predicated region
        $region57: #{tpu_custom_call.1} parent=11 // pred_check
          %p374 = pneg %p300
        $region58: #{tpu_custom_call.1} parent=11 // pred_check_branch
          %376 = sbr.rel (%p374) target = $region60
        $region59: #{tpu_custom_call.1} parent=11 // pred_region
          _
        $region60: #{tpu_custom_call.1} parent=11 // pred_fallthru
          _
      $region12: #{tpu_custom_call.1} parent=5 // pred_fallthru
        _
      %p377 = scmp.lt.s32.totalorder %s22, 2
      // Predicated region
      $region61: #{tpu_custom_call.1} parent=5 // pred_check
        %p378 = pneg %p377
      $region62: #{tpu_custom_call.1} parent=5 // pred_check_branch
        %380 = sbr.rel (%p378) target = $region64
      $region63: #{tpu_custom_call.1} parent=5 // pred_region
        // Predicated region
        $region65: #{tpu_custom_call.1} parent=63 // pred_check
          %p381 = pneg %p42
        $region66: #{tpu_custom_call.1} parent=63 // pred_check_branch
          %383 = sbr.rel (%p381) target = $region68
        $region67: #{tpu_custom_call.1} parent=63 // pred_region
          %p384 = scmp.lt.s32.totalorder %s22, 1
          %s385 = scalar_select %p384, %s22, 1
          %s386 = smul.addr %s385, 8
          %s387 = scalar_lea.vmem %s0, %s386
        $region68: #{tpu_custom_call.1} parent=63 // pred_fallthru
          _
      $region64: #{tpu_custom_call.1} parent=5 // pred_fallthru
        _
      %p388 = scmp.le.s32.totalorder 1, %s22
      %p389 = scmp.lt.s32.totalorder %s22, 3
      %p390 = pnand %p388, %p389
      %p391 = pneg %p390
      // Predicated region
      $region69: #{tpu_custom_call.1} parent=5 // pred_check
        _
      $region70: #{tpu_custom_call.1} parent=5 // pred_check_branch
        %393 = sbr.rel (%p390) target = $region72
      $region71: #{tpu_custom_call.1} parent=5 // pred_region
        %s394 = ssub.s32 %s22, 1
        %p395 = scmp.lt.s32.totalorder %s27, 1
        %s396 = scalar_select %p395, %s27, 1
        %s397 = smul.addr %s396, 8
        %s398 = scalar_lea.vmem %s0, %s397
        %p399 = pneg %p48
        %p400 = pneg %p45
        %p401 = pneg %p69
        %p402 = pneg %p66
        %p403 = pneg %p90
        %p404 = pneg %p87
        %p405 = pneg %p111
        %p406 = pneg %p108
        %p407 = pneg %p132
        %p408 = pneg %p129
        %p409 = pneg %p153
        %p410 = pneg %p150
        %p411 = pneg %p174
        %p412 = pneg %p171
        %p413 = pneg %p195
        %p414 = pneg %p192
        %p415 = pneg %p216
        %p416 = pneg %p213
        %p417 = pneg %p237
        %p418 = pneg %p234
        %p419 = pneg %p258
        %p420 = pneg %p255
        %p421 = pneg %p279
        %p422 = pneg %p276
        %p423 = pneg %p300
        %p424 = pneg %p297
        %p425 = pneg %p326
        %p426 = pneg %p323
        %s427 = sand.u32 %s313, 1
        %s428 = scalar_lea.sflag [#allocation3], %s427
        %s429 = sand.u32 %s313, 1
        %s430 = smul.addr %s429, 8
        %s431 = scalar_lea.vmem [#allocation2], %s430
        %p432 = scmp.lt.s32.totalorder %s27, 1
        %s433 = scalar_select %p432, %s27, 1
        %s434 = smul.addr %s433, 8
        %s435 = scalar_lea.vmem %s0, %s434
        %v437 = vld [vmem:[%s435] sm:$0xff]
        %v438 = vld [vmem:[%s1] sm:$0x1]
        %v439 = vld [vmem:[%s2] sm:$0x1]
        %vm440 = vcmask 261120
        %v441 = vsel %vm440, %v437, 0.0
        %442 = vadd.xlane.f32.xlu0 %v441
        %v443 = vpop.xlane.xlu0 %442
        %v444 = vrcp.pop 32.0
        %v445 = vmul.f32 %v443, %v444
        %v446 = vsub.f32 %v437, %v445
        %v447 = vmul.f32 %v446, %v446
        %v448 = vsel %vm440, %v447, 0.0
        %449 = vadd.xlane.f32.xlu0 %v448
        %v450 = vpop.xlane.xlu0 %449
        %v451 = vmul.f32 %v450, %v444
        %v452 = vadd.f32 %v451, 1e-05
        %v453 = vrsqrt.pop %v452
        %v454 = vmul.f32 %v446, %v453
        %v456 = vlaneseq
        %v457 = vshrl.u32 %v456, 7
        %v458 = vsub.s32 0, %v457
        %v459 = vrot.slane %v438, %v458
        %v461 = vmul.f32 %v454, %v459
        %v463 = vlaneseq
        %v464 = vshrl.u32 %v463, 7
        %v465 = vsub.s32 0, %v464
        %v466 = vrot.slane %v439, %v465
        %v468 = vadd.f32 %v461, %v466
        %v469 = vpack.c.bf16 %v468, %v468
        %v470 = vld [vmem:[%s3] sm:$0xf]
        %v471 = vld [vmem:[%s3 + $0x4] sm:$0xf]
        %v472 = vld [vmem:[%s3 + $0x8] sm:$0xf]
        %v473 = vld [vmem:[%s3 + $0xc] sm:$0xf]
        %v474 = vld [vmem:[%s4] sm:$0x1]
        %v476 = vlaneseq
        %v477 = vshrl.u32 %v476, 7
        %v478 = vsub.s32 0, %v477
        %v479 = vrot.slane %v474, %v478
        %v485 = vunpack.c.l.b16 %v470
        %v486 = vunpack.c.l.b16 %v471
        %v487 = vunpack.c.l.b16 %v472
        %v488 = vunpack.c.l.b16 %v473
        %v489 = vpack.c.b16 %v486, %v485
        %v490 = vpack.c.b16 %v488, %v487
        %v494 = vsel %vm440, %v469, 0
        %496 = vmatprep.subr.bf16.mxu0 0
        %497 = vmatpush1.bf16.msra.mxu0 %v489
        %498 = vmatprep.subr.bf16.mxu0 0
        %499 = vmatpush1.bf16.msra.mxu0 %v490
        %500 = vmatprep.subr.bf16.mxu0 0
        %501 = vmatpush1.bf16.msra.mxu0 0
        %502 = vmatprep.subr.bf16.mxu0 0
        %503 = vmatpush1.bf16.msra.mxu0 0
        %504 = vmatprep.subr.bf16.mxu0 0
        %505 = vmatpush1.bf16.msra.mxu0 0
        %506 = vmatprep.subr.bf16.mxu0 0
        %507 = vmatpush1.bf16.msra.mxu0 0
        %508 = vmatprep.subr.bf16.mxu0 0
        %509 = vmatpush1.bf16.msra.mxu0 0
        %510 = vmatprep.subr.bf16.mxu0 0
        %511 = vmatpush1.bf16.msra.mxu0 0
        %512 = vmatprep.subr.bf16.mxu0 0
        %513 = vmatpush1.bf16.msra.mxu0 0
        %514 = vmatprep.subr.bf16.mxu0 0
        %515 = vmatpush1.bf16.msra.mxu0 0
        %516 = vmatprep.subr.bf16.mxu0 0
        %517 = vmatpush1.bf16.msra.mxu0 0
        %518 = vmatprep.subr.bf16.mxu0 0
        %519 = vmatpush1.bf16.msra.mxu0 0
        %520 = vmatprep.subr.bf16.mxu0 0
        %521 = vmatpush1.bf16.msra.mxu0 0
        %522 = vmatprep.subr.bf16.mxu0 0
        %523 = vmatpush1.bf16.msra.mxu0 0
        %524 = vmatprep.subr.bf16.mxu0 0
        %525 = vmatpush1.bf16.msra.mxu0 0
        %526 = vmatprep.subr.bf16.mxu0 0
        %527 = vmatpush1.bf16.msra.mxu0 0
        %528 = vmatprep.mubr.bf16.mxu0 0
        %529 = vmatmul.mubr.bf16.gmra.mrb[0].mxu0 %v494
        %v530 = vpop.f32.mrb[0].mxu0
        %v531 = vadd.f32 %v479, %v530
        %v532 = vpop.f32.mrb[0].mxu0
        %v533 = vpop.f32.mrb[0].mxu0
        %v534 = vpop.f32.mrb[0].mxu0
        %535 = vdwg.mxu0
        %v536 = vmul.f32 %v531, 0.35355338
        %v537 = vlaneseq
        %v538 = vshrl.u32 %v537, 7
        %v539 = vlaneseq
        %v540 = vand.u32 %v539, 127
        %vm541 = vcmp.ge.s32.totalorder %v538, %v540
        %v542 = vpack.c.bf16 %v536, %v536
        %v543 = vpack.c.bf16 %v531, %v531
        %545 = vrot.lane.b32.xlu0 %v543, 96
        %v546 = vpop.permute.xlu0 %545
        %vm547 = vcmask 64512
        %v549 = vsel %vm547, %v542, 0
        %v552 = vsel %vm547, %v546, 0
        %554 = vmatprep.subr.bf16.mxu0 0
        %555 = vmatpush1.bf16.xpose.msra.mxu0 %v552
        %556 = vmatprep.subr.bf16.mxu0 0
        %557 = vmatpush1.bf16.xpose.msra.mxu0 0
        %558 = vmatprep.subr.bf16.mxu0 0
        %559 = vmatpush1.bf16.xpose.msra.mxu0 0
        %560 = vmatprep.subr.bf16.mxu0 0
        %561 = vmatpush1.bf16.xpose.msra.mxu0 0
        %562 = vmatprep.subr.bf16.mxu0 0
        %563 = vmatpush1.bf16.xpose.msra.mxu0 0
        %564 = vmatprep.subr.bf16.mxu0 0
        %565 = vmatpush1.bf16.xpose.msra.mxu0 0
        %566 = vmatprep.subr.bf16.mxu0 0
        %567 = vmatpush1.bf16.xpose.msra.mxu0 0
        %568 = vmatprep.subr.bf16.mxu0 0
        %569 = vmatpush1.bf16.xpose.msra.mxu0 0
        %570 = vmatprep.subr.bf16.mxu0 0
        %571 = vmatpush1.bf16.xpose.msra.mxu0 0
        %572 = vmatprep.subr.bf16.mxu0 0
        %573 = vmatpush1.bf16.xpose.msra.mxu0 0
        %574 = vmatprep.subr.bf16.mxu0 0
        %575 = vmatpush1.bf16.xpose.msra.mxu0 0
        %576 = vmatprep.subr.bf16.mxu0 0
        %577 = vmatpush1.bf16.xpose.msra.mxu0 0
        %578 = vmatprep.subr.bf16.mxu0 0
        %579 = vmatpush1.bf16.xpose.msra.mxu0 0
        %580 = vmatprep.subr.bf16.mxu0 0
        %581 = vmatpush1.bf16.xpose.msra.mxu0 0
        %582 = vmatprep.subr.bf16.mxu0 0
        %583 = vmatpush1.bf16.xpose.msra.mxu0 0
        %584 = vmatprep.subr.bf16.mxu0 0
        %585 = vmatpush1.bf16.xpose.msra.mxu0 0
        %586 = vmatprep.mubr.bf16.mxu0 0
        %587 = vmatmul.mubr.bf16.gmra.mrb[0].mxu0 %v549
        %v588 = vpop.f32.mrb[0].mxu0
        %v589 = vadd.f32 0.0, %v588
        %v590 = vpop.f32.mrb[0].mxu0
        %v591 = vpop.f32.mrb[0].mxu0
        %v592 = vpop.f32.mrb[0].mxu0
        %593 = vdwg.mxu0
        %v594 = vsel %vm541, %v589, -1e+30
        %v595 = vsel %vm547, %v594, -inf
        %596 = vmax.xlane.f32.xlu0 %v595
        %v597 = vpop.xlane.xlu0 %596
        %v598 = vsub.f32 %v594, %v597
        %v599 = vmul.f32 %v598, 1.442695
        %v600 = vpow.pop %v599
        %v601 = vsel %vm547, %v600, 0.0
        %602 = vadd.xlane.f32.xlu0 %v601
        %v603 = vpop.xlane.xlu0 %602
        %v604 = vrcp.pop %v603
        %v605 = vmul.f32 %v600, %v604
        %v606 = vpack.c.bf16 %v605, %v605
        %607 = vrot.lane.b32.xlu0 %v543, 64
        %v608 = vpop.permute.xlu0 %607
        %v610 = vsel %vm547, %v606, 0
        %vm612 = vcmask 1043456
        %v614 = vsel %vm612, %v608, 0
        %616 = vmatprep.subr.bf16.mxu0 0
        %617 = vmatpush1.bf16.msra.mxu0 %v614
        %618 = vmatprep.subr.bf16.mxu0 0
        %619 = vmatpush1.bf16.msra.mxu0 0
        %620 = vmatprep.subr.bf16.mxu0 0
        %621 = vmatpush1.bf16.msra.mxu0 0
        %622 = vmatprep.subr.bf16.mxu0 0
        %623 = vmatpush1.bf16.msra.mxu0 0
        %624 = vmatprep.subr.bf16.mxu0 0
        %625 = vmatpush1.bf16.msra.mxu0 0
        %626 = vmatprep.subr.bf16.mxu0 0
        %627 = vmatpush1.bf16.msra.mxu0 0
        %628 = vmatprep.subr.bf16.mxu0 0
        %629 = vmatpush1.bf16.msra.mxu0 0
        %630 = vmatprep.subr.bf16.mxu0 0
        %631 = vmatpush1.bf16.msra.mxu0 0
        %632 = vmatprep.subr.bf16.mxu0 0
        %633 = vmatpush1.bf16.msra.mxu0 0
        %634 = vmatprep.subr.bf16.mxu0 0
        %635 = vmatpush1.bf16.msra.mxu0 0
        %636 = vmatprep.subr.bf16.mxu0 0
        %637 = vmatpush1.bf16.msra.mxu0 0
        %638 = vmatprep.subr.bf16.mxu0 0
        %639 = vmatpush1.bf16.msra.mxu0 0
        %640 = vmatprep.subr.bf16.mxu0 0
        %641 = vmatpush1.bf16.msra.mxu0 0
        %642 = vmatprep.subr.bf16.mxu0 0
        %643 = vmatpush1.bf16.msra.mxu0 0
        %644 = vmatprep.subr.bf16.mxu0 0
        %645 = vmatpush1.bf16.msra.mxu0 0
        %646 = vmatprep.subr.bf16.mxu0 0
        %647 = vmatpush1.bf16.msra.mxu0 0
        %648 = vmatprep.mubr.bf16.mxu0 0
        %649 = vmatmul.mubr.bf16.gmra.mrb[0].mxu0 %v610
        %v650 = vpop.f32.mrb[0].mxu0
        %v651 = vadd.f32 0.0, %v650
        %v652 = vpop.f32.mrb[0].mxu0
        %v653 = vpop.f32.mrb[0].mxu0
        %v654 = vpop.f32.mrb[0].mxu0
        %655 = vdwg.mxu0
        %v656 = vpack.c.bf16 %v651, %v651
        %v657 = vld [vmem:[%s5] sm:$0xf]
        %659 = vrot.lane.b32.xlu0 %v542, 120
        %v660 = vpop.permute.xlu0 %659
        %661 = vrot.lane.b32.xlu0 %v543, 88
        %v662 = vpop.permute.xlu0 %661
        %v664 = vsel %vm547, %v660, 0
        %v667 = vsel %vm547, %v662, 0
        %669 = vmatprep.subr.bf16.mxu0 0
        %670 = vmatpush1.bf16.xpose.msra.mxu0 %v667
        %671 = vmatprep.subr.bf16.mxu0 0
        %672 = vmatpush1.bf16.xpose.msra.mxu0 0
        %673 = vmatprep.subr.bf16.mxu0 0
        %674 = vmatpush1.bf16.xpose.msra.mxu0 0
        %675 = vmatprep.subr.bf16.mxu0 0
        %676 = vmatpush1.bf16.xpose.msra.mxu0 0
        %677 = vmatprep.subr.bf16.mxu0 0
        %678 = vmatpush1.bf16.xpose.msra.mxu0 0
        %679 = vmatprep.subr.bf16.mxu0 0
        %680 = vmatpush1.bf16.xpose.msra.mxu0 0
        %681 = vmatprep.subr.bf16.mxu0 0
        %682 = vmatpush1.bf16.xpose.msra.mxu0 0
        %683 = vmatprep.subr.bf16.mxu0 0
        %684 = vmatpush1.bf16.xpose.msra.mxu0 0
        %685 = vmatprep.subr.bf16.mxu0 0
        %686 = vmatpush1.bf16.xpose.msra.mxu0 0
        %687 = vmatprep.subr.bf16.mxu0 0
        %688 = vmatpush1.bf16.xpose.msra.mxu0 0
        %689 = vmatprep.subr.bf16.mxu0 0
        %690 = vmatpush1.bf16.xpose.msra.mxu0 0
        %691 = vmatprep.subr.bf16.mxu0 0
        %692 = vmatpush1.bf16.xpose.msra.mxu0 0
        %693 = vmatprep.subr.bf16.mxu0 0
        %694 = vmatpush1.bf16.xpose.msra.mxu0 0
        %695 = vmatprep.subr.bf16.mxu0 0
        %696 = vmatpush1.bf16.xpose.msra.mxu0 0
        %697 = vmatprep.subr.bf16.mxu0 0
        %698 = vmatpush1.bf16.xpose.msra.mxu0 0
        %699 = vmatprep.subr.bf16.mxu0 0
        %700 = vmatpush1.bf16.xpose.msra.mxu0 0
        %701 = vmatprep.mubr.bf16.mxu0 0
        %702 = vmatmul.mubr.bf16.gmra.mrb[0].mxu0 %v664
        %v703 = vpop.f32.mrb[0].mxu0
        %v704 = vadd.f32 0.0, %v703
        %v705 = vpop.f32.mrb[0].mxu0
        %v706 = vpop.f32.mrb[0].mxu0
        %v707 = vpop.f32.mrb[0].mxu0
        %708 = vdwg.mxu0
        %v709 = vsel %vm541, %v704, -1e+30
        %v710 = vsel %vm547, %v709, -inf
        %711 = vmax.xlane.f32.xlu0 %v710
        %v712 = vpop.xlane.xlu0 %711
        %v713 = vsub.f32 %v709, %v712
        %v714 = vmul.f32 %v713, 1.442695
        %v715 = vpow.pop %v714
        %v716 = vsel %vm547, %v715, 0.0
        %717 = vadd.xlane.f32.xlu0 %v716
        %v718 = vpop.xlane.xlu0 %717
        %v719 = vrcp.pop %v718
        %v720 = vmul.f32 %v715, %v719
        %v721 = vpack.c.bf16 %v720, %v720
        %722 = vrot.lane.b32.xlu0 %v543, 56
        %v723 = vpop.permute.xlu0 %722
        %v725 = vsel %vm547, %v721, 0
        %v728 = vsel %vm612, %v723, 0
        %730 = vmatprep.subr.bf16.mxu0 0
        %731 = vmatpush1.bf16.msra.mxu0 %v728
        %732 = vmatprep.subr.bf16.mxu0 0
        %733 = vmatpush1.bf16.msra.mxu0 0
        %734 = vmatprep.subr.bf16.mxu0 0
        %735 = vmatpush1.bf16.msra.mxu0 0
        %736 = vmatprep.subr.bf16.mxu0 0
        %737 = vmatpush1.bf16.msra.mxu0 0
        %738 = vmatprep.subr.bf16.mxu0 0
        %739 = vmatpush1.bf16.msra.mxu0 0
        %740 = vmatprep.subr.bf16.mxu0 0
        %741 = vmatpush1.bf16.msra.mxu0 0
        %742 = vmatprep.subr.bf16.mxu0 0
        %743 = vmatpush1.bf16.msra.mxu0 0
        %744 = vmatprep.subr.bf16.mxu0 0
        %745 = vmatpush1.bf16.msra.mxu0 0
        %746 = vmatprep.subr.bf16.mxu0 0
        %747 = vmatpush1.bf16.msra.mxu0 0
        %748 = vmatprep.subr.bf16.mxu0 0
        %749 = vmatpush1.bf16.msra.mxu0 0
        %750 = vmatprep.subr.bf16.mxu0 0
        %751 = vmatpush1.bf16.msra.mxu0 0
        %752 = vmatprep.subr.bf16.mxu0 0
        %753 = vmatpush1.bf16.msra.mxu0 0
        %754 = vmatprep.subr.bf16.mxu0 0
        %755 = vmatpush1.bf16.msra.mxu0 0
        %756 = vmatprep.subr.bf16.mxu0 0
        %757 = vmatpush1.bf16.msra.mxu0 0
        %758 = vmatprep.subr.bf16.mxu0 0
        %759 = vmatpush1.bf16.msra.mxu0 0
        %760 = vmatprep.subr.bf16.mxu0 0
        %761 = vmatpush1.bf16.msra.mxu0 0
        %762 = vmatprep.mubr.bf16.mxu0 0
        %763 = vmatmul.mubr.bf16.gmra.mrb[0].mxu0 %v725
        %v764 = vpop.f32.mrb[0].mxu0
        %v765 = vadd.f32 0.0, %v764
        %v766 = vpop.f32.mrb[0].mxu0
        %v767 = vpop.f32.mrb[0].mxu0
        %v768 = vpop.f32.mrb[0].mxu0
        %769 = vdwg.mxu0
        %v770 = vpack.c.bf16 %v765, %v765
        %v771 = vld [vmem:[%s5 + $0x4] sm:$0xf]
        %v773 = vsel %vm547, %v770, 0
        %v776 = vsel %vm612, %v771, 0
        %778 = vmatprep.subr.bf16.mxu0 0
        %779 = vmatpush1.bf16.msra.mxu0 %v776
        %780 = vmatprep.subr.bf16.mxu0 0
        %781 = vmatpush1.bf16.msra.mxu0 0
        %782 = vmatprep.subr.bf16.mxu0 0
        %783 = vmatpush1.bf16.msra.mxu0 0
        %784 = vmatprep.subr.bf16.mxu0 0
        %785 = vmatpush1.bf16.msra.mxu0 0
        %786 = vmatprep.subr.bf16.mxu0 0
        %787 = vmatpush1.bf16.msra.mxu0 0
        %788 = vmatprep.subr.bf16.mxu0 0
        %789 = vmatpush1.bf16.msra.mxu0 0
        %790 = vmatprep.subr.bf16.mxu0 0
        %791 = vmatpush1.bf16.msra.mxu0 0
        %792 = vmatprep.subr.bf16.mxu0 0
        %793 = vmatpush1.bf16.msra.mxu0 0
        %794 = vmatprep.subr.bf16.mxu0 0
        %795 = vmatpush1.bf16.msra.mxu0 0
        %796 = vmatprep.subr.bf16.mxu0 0
        %797 = vmatpush1.bf16.msra.mxu0 0
        %798 = vmatprep.subr.bf16.mxu0 0
        %799 = vmatpush1.bf16.msra.mxu0 0
        %800 = vmatprep.subr.bf16.mxu0 0
        %801 = vmatpush1.bf16.msra.mxu0 0
        %802 = vmatprep.subr.bf16.mxu0 0
        %803 = vmatpush1.bf16.msra.mxu0 0
        %804 = vmatprep.subr.bf16.mxu0 0
        %805 = vmatpush1.bf16.msra.mxu0 0
        %806 = vmatprep.subr.bf16.mxu0 0
        %807 = vmatpush1.bf16.msra.mxu0 0
        %808 = vmatprep.subr.bf16.mxu0 0
        %809 = vmatpush1.bf16.msra.mxu0 0
        %810 = vmatprep.mubr.bf16.mxu0 0
        %811 = vmatmul.mubr.bf16.gmra.mrb[0].mxu0 %v773
        %v812 = vpop.f32.mrb[0].mxu0
        %v813 = vadd.f32 0.0, %v812
        %v814 = vpop.f32.mrb[0].mxu0
        %v815 = vpop.f32.mrb[0].mxu0
        %v816 = vpop.f32.mrb[0].mxu0
        %817 = vdwg.mxu0
        %v819 = vsel %vm547, %v656, 0
        %v822 = vsel %vm612, %v657, 0
        %824 = vmatprep.subr.bf16.mxu0 0
        %825 = vmatpush1.bf16.msra.mxu0 %v822
        %826 = vmatprep.subr.bf16.mxu0 0
        %827 = vmatpush1.bf16.msra.mxu0 0
        %828 = vmatprep.subr.bf16.mxu0 0
        %829 = vmatpush1.bf16.msra.mxu0 0
        %830 = vmatprep.subr.bf16.mxu0 0
        %831 = vmatpush1.bf16.msra.mxu0 0
        %832 = vmatprep.subr.bf16.mxu0 0
        %833 = vmatpush1.bf16.msra.mxu0 0
        %834 = vmatprep.subr.bf16.mxu0 0
        %835 = vmatpush1.bf16.msra.mxu0 0
        %836 = vmatprep.subr.bf16.mxu0 0
        %837 = vmatpush1.bf16.msra.mxu0 0
        %838 = vmatprep.subr.bf16.mxu0 0
        %839 = vmatpush1.bf16.msra.mxu0 0
        %840 = vmatprep.subr.bf16.mxu0 0
        %841 = vmatpush1.bf16.msra.mxu0 0
        %842 = vmatprep.subr.bf16.mxu0 0
        %843 = vmatpush1.bf16.msra.mxu0 0
        %844 = vmatprep.subr.bf16.mxu0 0
        %845 = vmatpush1.bf16.msra.mxu0 0
        %846 = vmatprep.subr.bf16.mxu0 0
        %847 = vmatpush1.bf16.msra.mxu0 0
        %848 = vmatprep.subr.bf16.mxu0 0
        %849 = vmatpush1.bf16.msra.mxu0 0
        %850 = vmatprep.subr.bf16.mxu0 0
        %851 = vmatpush1.bf16.msra.mxu0 0
        %852 = vmatprep.subr.bf16.mxu0 0
        %853 = vmatpush1.bf16.msra.mxu0 0
        %854 = vmatprep.subr.bf16.mxu0 0
        %855 = vmatpush1.bf16.msra.mxu0 0
        %856 = vmatprep.mubr.bf16.mxu0 0
        %857 = vmatmul.mubr.bf16.gmra.mrb[0].mxu0 %v819
        %v858 = vpop.f32.mrb[0].mxu0
        %v859 = vadd.f32 %v813, %v858
        %v860 = vpop.f32.mrb[0].mxu0
        %v861 = vpop.f32.mrb[0].mxu0
        %v862 = vpop.f32.mrb[0].mxu0
        %863 = vdwg.mxu0
        %864 = vrot.lane.b32.xlu0 %v542, 112
        %v865 = vpop.permute.xlu0 %864
        %866 = vrot.lane.b32.xlu0 %v543, 80
        %v867 = vpop.permute.xlu0 %866
        %v869 = vsel %vm547, %v865, 0
        %v872 = vsel %vm547, %v867, 0
        %874 = vmatprep.subr.bf16.mxu0 0
        %875 = vmatpush1.bf16.xpose.msra.mxu0 %v872
        %876 = vmatprep.subr.bf16.mxu0 0
        %877 = vmatpush1.bf16.xpose.msra.mxu0 0
        %878 = vmatprep.subr.bf16.mxu0 0
        %879 = vmatpush1.bf16.xpose.msra.mxu0 0
        %880 = vmatprep.subr.bf16.mxu0 0
        %881 = vmatpush1.bf16.xpose.msra.mxu0 0
        %882 = vmatprep.subr.bf16.mxu0 0
        %883 = vmatpush1.bf16.xpose.msra.mxu0 0
        %884 = vmatprep.subr.bf16.mxu0 0
        %885 = vmatpush1.bf16.xpose.msra.mxu0 0
        %886 = vmatprep.subr.bf16.mxu0 0
        %887 = vmatpush1.bf16.xpose.msra.mxu0 0
        %888 = vmatprep.subr.bf16.mxu0 0
        %889 = vmatpush1.bf16.xpose.msra.mxu0 0
        %890 = vmatprep.subr.bf16.mxu0 0
        %891 = vmatpush1.bf16.xpose.msra.mxu0 0
        %892 = vmatprep.subr.bf16.mxu0 0
        %893 = vmatpush1.bf16.xpose.msra.mxu0 0
        %894 = vmatprep.subr.bf16.mxu0 0
        %895 = vmatpush1.bf16.xpose.msra.mxu0 0
        %896 = vmatprep.subr.bf16.mxu0 0
        %897 = vmatpush1.bf16.xpose.msra.mxu0 0
        %898 = vmatprep.subr.bf16.mxu0 0
        %899 = vmatpush1.bf16.xpose.msra.mxu0 0
        %900 = vmatprep.subr.bf16.mxu0 0
        %901 = vmatpush1.bf16.xpose.msra.mxu0 0
        %902 = vmatprep.subr.bf16.mxu0 0
        %903 = vmatpush1.bf16.xpose.msra.mxu0 0
        %904 = vmatprep.subr.bf16.mxu0 0
        %905 = vmatpush1.bf16.xpose.msra.mxu0 0
        %906 = vmatprep.mubr.bf16.mxu0 0
        %907 = vmatmul.mubr.bf16.gmra.mrb[0].mxu0 %v869
        %v908 = vpop.f32.mrb[0].mxu0
        %v909 = vadd.f32 0.0, %v908
        %v910 = vpop.f32.mrb[0].mxu0
        %v911 = vpop.f32.mrb[0].mxu0
        %v912 = vpop.f32.mrb[0].mxu0
        %913 = vdwg.mxu0
        %v914 = vsel %vm541, %v909, -1e+30
        %v915 = vsel %vm547, %v914, -inf
        %916 = vmax.xlane.f32.xlu0 %v915
        %v917 = vpop.xlane.xlu0 %916
        %v918 = vsub.f32 %v914, %v917
        %v919 = vmul.f32 %v918, 1.442695
        %v920 = vpow.pop %v919
        %v921 = vsel %vm547, %v920, 0.0
        %922 = vadd.xlane.f32.xlu0 %v921
        %v923 = vpop.xlane.xlu0 %922
        %v924 = vrcp.pop %v923
        %v925 = vmul.f32 %v920, %v924
        %v926 = vpack.c.bf16 %v925, %v925
        %927 = vrot.lane.b32.xlu0 %v543, 48
        %v928 = vpop.permute.xlu0 %927
        %v930 = vsel %vm547, %v926, 0
        %v933 = vsel %vm612, %v928, 0
        %935 = vmatprep.subr.bf16.mxu0 0
        %936 = vmatpush1.bf16.msra.mxu0 %v933
        %937 = vmatprep.subr.bf16.mxu0 0
        %938 = vmatpush1.bf16.msra.mxu0 0
        %939 = vmatprep.subr.bf16.mxu0 0
        %940 = vmatpush1.bf16.msra.mxu0 0
        %941 = vmatprep.subr.bf16.mxu0 0
        %942 = vmatpush1.bf16.msra.mxu0 0
        %943 = vmatprep.subr.bf16.mxu0 0
        %944 = vmatpush1.bf16.msra.mxu0 0
        %945 = vmatprep.subr.bf16.mxu0 0
        %946 = vmatpush1.bf16.msra.mxu0 0
        %947 = vmatprep.subr.bf16.mxu0 0
        %948 = vmatpush1.bf16.msra.mxu0 0
        %949 = vmatprep.subr.bf16.mxu0 0
        %950 = vmatpush1.bf16.msra.mxu0 0
        %951 = vmatprep.subr.bf16.mxu0 0
        %952 = vmatpush1.bf16.msra.mxu0 0
        %953 = vmatprep.subr.bf16.mxu0 0
        %954 = vmatpush1.bf16.msra.mxu0 0
        %955 = vmatprep.subr.bf16.mxu0 0
        %956 = vmatpush1.bf16.msra.mxu0 0
        %957 = vmatprep.subr.bf16.mxu0 0
        %958 = vmatpush1.bf16.msra.mxu0 0
        %959 = vmatprep.subr.bf16.mxu0 0
        %960 = vmatpush1.bf16.msra.mxu0 0
        %961 = vmatprep.subr.bf16.mxu0 0
        %962 = vmatpush1.bf16.msra.mxu0 0
        %963 = vmatprep.subr.bf16.mxu0 0
        %964 = vmatpush1.bf16.msra.mxu0 0
        %965 = vmatprep.subr.bf16.mxu0 0
        %966 = vmatpush1.bf16.msra.mxu0 0
        %967 = vmatprep.mubr.bf16.mxu0 0
        %968 = vmatmul.mubr.bf16.gmra.mrb[0].mxu0 %v930
        %v969 = vpop.f32.mrb[0].mxu0
        %v970 = vadd.f32 0.0, %v969
        %v971 = vpop.f32.mrb[0].mxu0
        %v972 = vpop.f32.mrb[0].mxu0
        %v973 = vpop.f32.mrb[0].mxu0
        %974 = vdwg.mxu0
        %v975 = vpack.c.bf16 %v970, %v970
        %v976 = vld [vmem:[%s5 + $0x8] sm:$0xf]
        %v978 = vsel %vm547, %v975, 0
        %v981 = vsel %vm612, %v976, 0
        %983 = vmatprep.subr.bf16.mxu0 0
        %984 = vmatpush1.bf16.msra.mxu0 %v981
        %985 = vmatprep.subr.bf16.mxu0 0
        %986 = vmatpush1.bf16.msra.mxu0 0
        %987 = vmatprep.subr.bf16.mxu0 0
        %988 = vmatpush1.bf16.msra.mxu0 0
        %989 = vmatprep.subr.bf16.mxu0 0
        %990 = vmatpush1.bf16.msra.mxu0 0
        %991 = vmatprep.subr.bf16.mxu0 0
        %992 = vmatpush1.bf16.msra.mxu0 0
        %993 = vmatprep.subr.bf16.mxu0 0
        %994 = vmatpush1.bf16.msra.mxu0 0
        %995 = vmatprep.subr.bf16.mxu0 0
        %996 = vmatpush1.bf16.msra.mxu0 0
        %997 = vmatprep.subr.bf16.mxu0 0
        %998 = vmatpush1.bf16.msra.mxu0 0
        %999 = vmatprep.subr.bf16.mxu0 0
        %1000 = vmatpush1.bf16.msra.mxu0 0
        %1001 = vmatprep.subr.bf16.mxu0 0
        %1002 = vmatpush1.bf16.msra.mxu0 0
        %1003 = vmatprep.subr.bf16.mxu0 0
        %1004 = vmatpush1.bf16.msra.mxu0 0
        %1005 = vmatprep.subr.bf16.mxu0 0
        %1006 = vmatpush1.bf16.msra.mxu0 0
        %1007 = vmatprep.subr.bf16.mxu0 0
        %1008 = vmatpush1.bf16.msra.mxu0 0
        %1009 = vmatprep.subr.bf16.mxu0 0
        %1010 = vmatpush1.bf16.msra.mxu0 0
        %1011 = vmatprep.subr.bf16.mxu0 0
        %1012 = vmatpush1.bf16.msra.mxu0 0
        %1013 = vmatprep.subr.bf16.mxu0 0
        %1014 = vmatpush1.bf16.msra.mxu0 0
        %1015 = vmatprep.mubr.bf16.mxu0 0
        %1016 = vmatmul.mubr.bf16.gmra.mrb[0].mxu0 %v978
        %v1017 = vpop.f32.mrb[0].mxu0
        %v1018 = vadd.f32 0.0, %v1017
        %v1019 = vpop.f32.mrb[0].mxu0
        %v1020 = vpop.f32.mrb[0].mxu0
        %v1021 = vpop.f32.mrb[0].mxu0
        %1022 = vdwg.mxu0
        %v1023 = vadd.f32 %v859, %v1018
        %1024 = vrot.lane.b32.xlu0 %v542, 104
        %v1025 = vpop.permute.xlu0 %1024
        %1026 = vrot.lane.b32.xlu0 %v543, 72
        %v1027 = vpop.permute.xlu0 %1026
        %v1029 = vsel %vm547, %v1025, 0
        %v1032 = vsel %vm547, %v1027, 0
        %1034 = vmatprep.subr.bf16.mxu0 0
        %1035 = vmatpush1.bf16.xpose.msra.mxu0 %v1032
        %1036 = vmatprep.subr.bf16.mxu0 0
        %1037 = vmatpush1.bf16.xpose.msra.mxu0 0
        %1038 = vmatprep.subr.bf16.mxu0 0
        %1039 = vmatpush1.bf16.xpose.msra.mxu0 0
        %1040 = vmatprep.subr.bf16.mxu0 0
        %1041 = vmatpush1.bf16.xpose.msra.mxu0 0
        %1042 = vmatprep.subr.bf16.mxu0 0
        %1043 = vmatpush1.bf16.xpose.msra.mxu0 0
        %1044 = vmatprep.subr.bf16.mxu0 0
        %1045 = vmatpush1.bf16.xpose.msra.mxu0 0
        %1046 = vmatprep.subr.bf16.mxu0 0
        %1047 = vmatpush1.bf16.xpose.msra.mxu0 0
        %1048 = vmatprep.subr.bf16.mxu0 0
        %1049 = vmatpush1.bf16.xpose.msra.mxu0 0
        %1050 = vmatprep.subr.bf16.mxu0 0
        %1051 = vmatpush1.bf16.xpose.msra.mxu0 0
        %1052 = vmatprep.subr.bf16.mxu0 0
        %1053 = vmatpush1.bf16.xpose.msra.mxu0 0
        %1054 = vmatprep.subr.bf16.mxu0 0
        %1055 = vmatpush1.bf16.xpose.msra.mxu0 0
        %1056 = vmatprep.subr.bf16.mxu0 0
        %1057 = vmatpush1.bf16.xpose.msra.mxu0 0
        %1058 = vmatprep.subr.bf16.mxu0 0
        %1059 = vmatpush1.bf16.xpose.msra.mxu0 0
        %1060 = vmatprep.subr.bf16.mxu0 0
        %1061 = vmatpush1.bf16.xpose.msra.mxu0 0
        %1062 = vmatprep.subr.bf16.mxu0 0
        %1063 = vmatpush1.bf16.xpose.msra.mxu0 0
        %1064 = vmatprep.subr.bf16.mxu0 0
        %1065 = vmatpush1.bf16.xpose.msra.mxu0 0
        %1066 = vmatprep.mubr.bf16.mxu0 0
        %1067 = vmatmul.mubr.bf16.gmra.mrb[0].mxu0 %v1029
        %v1068 = vpop.f32.mrb[0].mxu0
        %v1069 = vadd.f32 0.0, %v1068
        %v1070 = vpop.f32.mrb[0].mxu0
        %v1071 = vpop.f32.mrb[0].mxu0
        %v1072 = vpop.f32.mrb[0].mxu0
        %1073 = vdwg.mxu0
        %v1074 = vsel %vm541, %v1069, -1e+30
        %v1075 = vsel %vm547, %v1074, -inf
        %1076 = vmax.xlane.f32.xlu0 %v1075
        %v1077 = vpop.xlane.xlu0 %1076
        %v1078 = vsub.f32 %v1074, %v1077
        %v1079 = vmul.f32 %v1078, 1.442695
        %v1080 = vpow.pop %v1079
        %v1081 = vsel %vm547, %v1080, 0.0
        %1082 = vadd.xlane.f32.xlu0 %v1081
        %v1083 = vpop.xlane.xlu0 %1082
        %v1084 = vrcp.pop %v1083
        %v1085 = vmul.f32 %v1080, %v1084
        %v1086 = vpack.c.bf16 %v1085, %v1085
        %1087 = vrot.lane.b32.xlu0 %v543, 40
        %v1088 = vpop.permute.xlu0 %1087
        %v1090 = vsel %vm547, %v1086, 0
        %v1093 = vsel %vm612, %v1088, 0
        %1095 = vmatprep.subr.bf16.mxu0 0
        %1096 = vmatpush1.bf16.msra.mxu0 %v1093
        %1097 = vmatprep.subr.bf16.mxu0 0
        %1098 = vmatpush1.bf16.msra.mxu0 0
        %1099 = vmatprep.subr.bf16.mxu0 0
        %1100 = vmatpush1.bf16.msra.mxu0 0
        %1101 = vmatprep.subr.bf16.mxu0 0
        %1102 = vmatpush1.bf16.msra.mxu0 0
        %1103 = vmatprep.subr.bf16.mxu0 0
        %1104 = vmatpush1.bf16.msra.mxu0 0
        %1105 = vmatprep.subr.bf16.mxu0 0
        %1106 = vmatpush1.bf16.msra.mxu0 0
        %1107 = vmatprep.subr.bf16.mxu0 0
        %1108 = vmatpush1.bf16.msra.mxu0 0
        %1109 = vmatprep.subr.bf16.mxu0 0
        %1110 = vmatpush1.bf16.msra.mxu0 0
        %1111 = vmatprep.subr.bf16.mxu0 0
        %1112 = vmatpush1.bf16.msra.mxu0 0
        %1113 = vmatprep.subr.bf16.mxu0 0
        %1114 = vmatpush1.bf16.msra.mxu0 0
        %1115 = vmatprep.subr.bf16.mxu0 0
        %1116 = vmatpush1.bf16.msra.mxu0 0
        %1117 = vmatprep.subr.bf16.mxu0 0
        %1118 = vmatpush1.bf16.msra.mxu0 0
        %1119 = vmatprep.subr.bf16.mxu0 0
        %1120 = vmatpush1.bf16.msra.mxu0 0
        %1121 = vmatprep.subr.bf16.mxu0 0
        %1122 = vmatpush1.bf16.msra.mxu0 0
        %1123 = vmatprep.subr.bf16.mxu0 0
        %1124 = vmatpush1.bf16.msra.mxu0 0
        %1125 = vmatprep.subr.bf16.mxu0 0
        %1126 = vmatpush1.bf16.msra.mxu0 0
        %1127 = vmatprep.mubr.bf16.mxu0 0
        %1128 = vmatmul.mubr.bf16.gmra.mrb[0].mxu0 %v1090
        %v1129 = vpop.f32.mrb[0].mxu0
        %v1130 = vadd.f32 0.0, %v1129
        %v1131 = vpop.f32.mrb[0].mxu0
        %v1132 = vpop.f32.mrb[0].mxu0
        %v1133 = vpop.f32.mrb[0].mxu0
        %1134 = vdwg.mxu0
        %v1135 = vpack.c.bf16 %v1130, %v1130
        %v1136 = vld [vmem:[%s5 + $0xc] sm:$0xf]
        %v1138 = vsel %vm547, %v1135, 0
        %v1141 = vsel %vm612, %v1136, 0
        %1143 = vmatprep.subr.bf16.mxu0 0
        %1144 = vmatpush1.bf16.msra.mxu0 %v1141
        %1145 = vmatprep.subr.bf16.mxu0 0
        %1146 = vmatpush1.bf16.msra.mxu0 0
        %1147 = vmatprep.subr.bf16.mxu0 0
        %1148 = vmatpush1.bf16.msra.mxu0 0
        %1149 = vmatprep.subr.bf16.mxu0 0
        %1150 = vmatpush1.bf16.msra.mxu0 0
        %1151 = vmatprep.subr.bf16.mxu0 0
        %1152 = vmatpush1.bf16.msra.mxu0 0
        %1153 = vmatprep.subr.bf16.mxu0 0
        %1154 = vmatpush1.bf16.msra.mxu0 0
        %1155 = vmatprep.subr.bf16.mxu0 0
        %1156 = vmatpush1.bf16.msra.mxu0 0
        %1157 = vmatprep.subr.bf16.mxu0 0
        %1158 = vmatpush1.bf16.msra.mxu0 0
        %1159 = vmatprep.subr.bf16.mxu0 0
        %1160 = vmatpush1.bf16.msra.mxu0 0
        %1161 = vmatprep.subr.bf16.mxu0 0
        %1162 = vmatpush1.bf16.msra.mxu0 0
        %1163 = vmatprep.subr.bf16.mxu0 0
        %1164 = vmatpush1.bf16.msra.mxu0 0
        %1165 = vmatprep.subr.bf16.mxu0 0
        %1166 = vmatpush1.bf16.msra.mxu0 0
        %1167 = vmatprep.subr.bf16.mxu0 0
        %1168 = vmatpush1.bf16.msra.mxu0 0
        %1169 = vmatprep.subr.bf16.mxu0 0
        %1170 = vmatpush1.bf16.msra.mxu0 0
        %1171 = vmatprep.subr.bf16.mxu0 0
        %1172 = vmatpush1.bf16.msra.mxu0 0
        %1173 = vmatprep.subr.bf16.mxu0 0
        %1174 = vmatpush1.bf16.msra.mxu0 0
        %1175 = vmatprep.mubr.bf16.mxu0 0
        %1176 = vmatmul.mubr.bf16.gmra.mrb[0].mxu0 %v1138
        %v1177 = vpop.f32.mrb[0].mxu0
        %v1178 = vadd.f32 0.0, %v1177
        %v1179 = vpop.f32.mrb[0].mxu0
        %v1180 = vpop.f32.mrb[0].mxu0
        %v1181 = vpop.f32.mrb[0].mxu0
        %1182 = vdwg.mxu0
        %v1183 = vadd.f32 %v1023, %v1178
        %v1184 = vld [vmem:[%s6] sm:$0x1]
        %v1186 = vlaneseq
        %v1187 = vshrl.u32 %v1186, 7
        %v1188 = vsub.s32 0, %v1187
        %v1189 = vrot.slane %v1184, %v1188
        %v1191 = vadd.f32 %v1183, %v1189
        %v1192 = vadd.f32 %v1191, %v437
        %v1193 = vld [vmem:[%s7] sm:$0x1]
        %v1194 = vld [vmem:[%s8] sm:$0x1]
        %v1195 = vsel %vm440, %v1192, 0.0
        %1196 = vadd.xlane.f32.xlu0 %v1195
        %v1197 = vpop.xlane.xlu0 %1196
        %v1198 = vmul.f32 %v1197, %v444
        %v1199 = vsub.f32 %v1192, %v1198
        %v1200 = vmul.f32 %v1199, %v1199
        %v1201 = vsel %vm440, %v1200, 0.0
        %1202 = vadd.xlane.f32.xlu0 %v1201
        %v1203 = vpop.xlane.xlu0 %1202
        %v1204 = vmul.f32 %v1203, %v444
        %v1205 = vadd.f32 %v1204, 1e-05
        %v1206 = vrsqrt.pop %v1205
        %v1207 = vmul.f32 %v1199, %v1206
        %v1209 = vlaneseq
        %v1210 = vshrl.u32 %v1209, 7
        %v1211 = vsub.s32 0, %v1210
        %v1212 = vrot.slane %v1193, %v1211
        %v1214 = vmul.f32 %v1207, %v1212
        %v1216 = vlaneseq
        %v1217 = vshrl.u32 %v1216, 7
        %v1218 = vsub.s32 0, %v1217
        %v1219 = vrot.slane %v1194, %v1218
        %v1221 = vadd.f32 %v1214, %v1219
        %v1222 = vpack.c.bf16 %v1221, %v1221
        %v1223 = vld [vmem:[%s9] sm:$0xf]
        %v1224 = vld [vmem:[%s9 + $0x4] sm:$0xf]
        %v1225 = vld [vmem:[%s9 + $0x8] sm:$0xf]
        %v1226 = vld [vmem:[%s9 + $0xc] sm:$0xf]
        %v1227 = vld [vmem:[%s10] sm:$0x1]
        %v1229 = vlaneseq
        %v1230 = vshrl.u32 %v1229, 7
        %v1231 = vsub.s32 0, %v1230
        %v1232 = vrot.slane %v1227, %v1231
        %v1238 = vunpack.c.l.b16 %v1223
        %v1239 = vunpack.c.l.b16 %v1224
        %v1240 = vunpack.c.l.b16 %v1225
        %v1241 = vunpack.c.l.b16 %v1226
        %v1242 = vpack.c.b16 %v1239, %v1238
        %v1243 = vpack.c.b16 %v1241, %v1240
        %v1247 = vsel %vm440, %v1222, 0
        %1249 = vmatprep.subr.bf16.mxu0 0
        %1250 = vmatpush1.bf16.msra.mxu0 %v1242
        %1251 = vmatprep.subr.bf16.mxu0 0
        %1252 = vmatpush1.bf16.msra.mxu0 %v1243
        %1253 = vmatprep.subr.bf16.mxu0 0
        %1254 = vmatpush1.bf16.msra.mxu0 0
        %1255 = vmatprep.subr.bf16.mxu0 0
        %1256 = vmatpush1.bf16.msra.mxu0 0
        %1257 = vmatprep.subr.bf16.mxu0 0
        %1258 = vmatpush1.bf16.msra.mxu0 0
        %1259 = vmatprep.subr.bf16.mxu0 0
        %1260 = vmatpush1.bf16.msra.mxu0 0
        %1261 = vmatprep.subr.bf16.mxu0 0
        %1262 = vmatpush1.bf16.msra.mxu0 0
        %1263 = vmatprep.subr.bf16.mxu0 0
        %1264 = vmatpush1.bf16.msra.mxu0 0
        %1265 = vmatprep.subr.bf16.mxu0 0
        %1266 = vmatpush1.bf16.msra.mxu0 0
        %1267 = vmatprep.subr.bf16.mxu0 0
        %1268 = vmatpush1.bf16.msra.mxu0 0
        %1269 = vmatprep.subr.bf16.mxu0 0
        %1270 = vmatpush1.bf16.msra.mxu0 0
        %1271 = vmatprep.subr.bf16.mxu0 0
        %1272 = vmatpush1.bf16.msra.mxu0 0
        %1273 = vmatprep.subr.bf16.mxu0 0
        %1274 = vmatpush1.bf16.msra.mxu0 0
        %1275 = vmatprep.subr.bf16.mxu0 0
        %1276 = vmatpush1.bf16.msra.mxu0 0
        %1277 = vmatprep.subr.bf16.mxu0 0
        %1278 = vmatpush1.bf16.msra.mxu0 0
        %1279 = vmatprep.subr.bf16.mxu0 0
        %1280 = vmatpush1.bf16.msra.mxu0 0
        %1281 = vmatprep.mubr.bf16.mxu0 0
        %1282 = vmatmul.mubr.bf16.gmra.mrb[0].mxu0 %v1247
        %v1283 = vpop.f32.mrb[0].mxu0
        %v1284 = vadd.f32 %v1232, %v1283
        %v1285 = vpop.f32.mrb[0].mxu0
        %v1286 = vpop.f32.mrb[0].mxu0
        %v1287 = vpop.f32.mrb[0].mxu0
        %1288 = vdwg.mxu0
        %v1289 = vmul.f32 %v1284, 1.702
        %v1290 = vxor.u32 %v1289, 2147483648
        %v1291 = vmul.f32 %v1290, 1.442695
        %v1292 = vpow.pop %v1291
        %v1293 = vadd.f32 %v1292, 1.0
        %v1294 = vrcp.pop %v1293
        %v1295 = vmul.f32 1.0, %v1294
        %v1296 = vmul.f32 %v1284, %v1295
        %v1297 = vpack.c.bf16 %v1296, %v1296
        %v1298 = vld [vmem:[%s11] sm:$0xf]
        %v1299 = vld [vmem:[%s11 + $0x4] sm:$0xf]
        %v1300 = vld [vmem:[%s11 + $0x8] sm:$0xf]
        %v1301 = vld [vmem:[%s11 + $0xc] sm:$0xf]
        %v1302 = vld [vmem:[%s11 + $0x10] sm:$0xf]
        %v1303 = vld [vmem:[%s11 + $0x14] sm:$0xf]
        %v1304 = vld [vmem:[%s11 + $0x18] sm:$0xf]
        %v1305 = vld [vmem:[%s11 + $0x1c] sm:$0xf]
        %v1306 = vld [vmem:[%s11 + $0x20] sm:$0xf]
        %v1307 = vld [vmem:[%s11 + $0x24] sm:$0xf]
        %v1308 = vld [vmem:[%s11 + $0x28] sm:$0xf]
        %v1309 = vld [vmem:[%s11 + $0x2c] sm:$0xf]
        %v1310 = vld [vmem:[%s11 + $0x30] sm:$0xf]
        %v1311 = vld [vmem:[%s11 + $0x34] sm:$0xf]
        %v1312 = vld [vmem:[%s11 + $0x38] sm:$0xf]
        %v1313 = vld [vmem:[%s11 + $0x3c] sm:$0xf]
        %v1314 = vld [vmem:[%s12] sm:$0x1]
        %v1316 = vlaneseq
        %v1317 = vshrl.u32 %v1316, 7
        %v1318 = vsub.s32 0, %v1317
        %v1319 = vrot.slane %v1314, %v1318
        %v1337 = vunpack.c.l.b16 %v1298
        %v1338 = vunpack.c.l.b16 %v1299
        %v1339 = vunpack.c.l.b16 %v1300
        %v1340 = vunpack.c.l.b16 %v1301
        %v1341 = vunpack.c.l.b16 %v1302
        %v1342 = vunpack.c.l.b16 %v1303
        %v1343 = vunpack.c.l.b16 %v1304
        %v1344 = vunpack.c.l.b16 %v1305
        %v1345 = vunpack.c.l.b16 %v1306
        %v1346 = vunpack.c.l.b16 %v1307
        %v1347 = vunpack.c.l.b16 %v1308
        %v1348 = vunpack.c.l.b16 %v1309
        %v1349 = vunpack.c.l.b16 %v1310
        %v1350 = vunpack.c.l.b16 %v1311
        %v1351 = vunpack.c.l.b16 %v1312
        %v1352 = vunpack.c.l.b16 %v1313
        %v1353 = vpack.c.b16 %v1338, %v1337
        %v1354 = vpack.c.b16 %v1340, %v1339
        %v1355 = vpack.c.b16 %v1342, %v1341
        %v1356 = vpack.c.b16 %v1344, %v1343
        %v1357 = vpack.c.b16 %v1346, %v1345
        %v1358 = vpack.c.b16 %v1348, %v1347
        %v1359 = vpack.c.b16 %v1350, %v1349
        %v1360 = vpack.c.b16 %v1352, %v1351
        %1369 = vmatprep.subr.bf16.mxu0 0
        %1370 = vmatpush1.bf16.msra.mxu0 %v1353
        %1371 = vmatprep.subr.bf16.mxu0 0
        %1372 = vmatpush1.bf16.msra.mxu0 %v1354
        %1373 = vmatprep.subr.bf16.mxu0 0
        %1374 = vmatpush1.bf16.msra.mxu0 %v1355
        %1375 = vmatprep.subr.bf16.mxu0 0
        %1376 = vmatpush1.bf16.msra.mxu0 %v1356
        %1377 = vmatprep.subr.bf16.mxu0 0
        %1378 = vmatpush1.bf16.msra.mxu0 %v1357
        %1379 = vmatprep.subr.bf16.mxu0 0
        %1380 = vmatpush1.bf16.msra.mxu0 %v1358
        %1381 = vmatprep.subr.bf16.mxu0 0
        %1382 = vmatpush1.bf16.msra.mxu0 %v1359
        %1383 = vmatprep.subr.bf16.mxu0 0
        %1384 = vmatpush1.bf16.msra.mxu0 %v1360
        %1385 = vmatprep.subr.bf16.mxu0 0
        %1386 = vmatpush1.bf16.msra.mxu0 0
        %1387 = vmatprep.subr.bf16.mxu0 0
        %1388 = vmatpush1.bf16.msra.mxu0 0
        %1389 = vmatprep.subr.bf16.mxu0 0
        %1390 = vmatpush1.bf16.msra.mxu0 0
        %1391 = vmatprep.subr.bf16.mxu0 0
        %1392 = vmatpush1.bf16.msra.mxu0 0
        %1393 = vmatprep.subr.bf16.mxu0 0
        %1394 = vmatpush1.bf16.msra.mxu0 0
        %1395 = vmatprep.subr.bf16.mxu0 0
        %1396 = vmatpush1.bf16.msra.mxu0 0
        %1397 = vmatprep.subr.bf16.mxu0 0
        %1398 = vmatpush1.bf16.msra.mxu0 0
        %1399 = vmatprep.subr.bf16.mxu0 0
        %1400 = vmatpush1.bf16.msra.mxu0 0
        %1401 = vmatprep.mubr.bf16.mxu0 0
        %1402 = vmatmul.mubr.bf16.gmra.mrb[0].mxu0 %v1297
        %v1403 = vpop.f32.mrb[0].mxu0
        %v1404 = vadd.f32 %v1319, %v1403
        %v1405 = vpop.f32.mrb[0].mxu0
        %v1406 = vpop.f32.mrb[0].mxu0
        %v1407 = vpop.f32.mrb[0].mxu0
        %1408 = vdwg.mxu0
        %v1409 = vadd.f32 %v1404, %v1192
        %1410 = vst.msk [vmem:[%s431] sm:$0xff] %vm440, %v1409
        %s1411 = sand.u32 %s313, 1
        %s1412 = scalar_lea.sflag [#allocation3], %s1411
        %s1413 = sand.u32 %s313, 1
        %s1414 = smul.addr %s1413, 8
        %s1415 = scalar_lea.vmem [#allocation2], %s1414
        // Predicated region
        $region73: #{tpu_custom_call.1} parent=71 // pred_check
          %p1416 = pneg %p323
        $region74: #{tpu_custom_call.1} parent=71 // pred_check_branch
          %1418 = sbr.rel (%p1416) target = $region76
        $region75: #{tpu_custom_call.1} parent=71 // pred_region
          %s1420 = ssub.s32 128, 128
          %1421 = vsyncadd %s1412, %s1420
          %s1422 = smul.addr %s27, 128
          %s1423 = scalar_lea.hbm %s13, %s1422
          %s1425 = sshll.u32 %s1415, 4
          %s1426 = int_to_ptr.vmem [resolvable:$true] %s1425
          %1428 = dma.vmem_to_hbm [thread:$0]  %s1426, 128, %s1423, %s1412
        $region76: #{tpu_custom_call.1} parent=71 // pred_fallthru
          _
      $region72: #{tpu_custom_call.1} parent=5 // pred_fallthru
        _
      %p1429 = scmp.le.s32.totalorder 2, %s22
      // Predicated region
      $region77: #{tpu_custom_call.1} parent=5 // pred_check
        %p1430 = pneg %p1429
      $region78: #{tpu_custom_call.1} parent=5 // pred_check_branch
        %1432 = sbr.rel (%p1430) target = $region80
      $region79: #{tpu_custom_call.1} parent=5 // pred_region
        %s1433 = ssub.s32 %s22, 2
        // Predicated region
        $region81: #{tpu_custom_call.1} parent=79 // pred_check
          %p1434 = pneg %p329
        $region82: #{tpu_custom_call.1} parent=79 // pred_check_branch
          %1436 = sbr.rel (%p1434) target = $region84
        $region83: #{tpu_custom_call.1} parent=79 // pred_region
          %s1437 = sand.u32 %s314, 1
          %s1438 = scalar_lea.sflag [#allocation3], %s1437
          %s1439 = sand.u32 %s314, 1
          %s1440 = smul.addr %s1439, 8
          %s1441 = scalar_lea.vmem [#allocation2], %s1440
          %1442 = dma.done %s1438, 128
        $region84: #{tpu_custom_call.1} parent=79 // pred_fallthru
          _
      $region80: #{tpu_custom_call.1} parent=5 // pred_fallthru
        _
    $region6: #{tpu_custom_call.1} parent=1 // loop_footer
      %s26 = sadd.s32 1, %s22
    $region7: #{tpu_custom_call.1} parent=1 // loop_footer_branch
      %21 = sbr.rel target = $region3
    $region8: #{tpu_custom_call.1} parent=1 // loop_exit
      _
    %1443 = vsyncpa [#allocation3], 1
    %s1444 = scalar_lea.sflag [#allocation3], 1
    %1445 = vsyncpa %s1444, 1

// kernel: tpu_custom_call.1
$region0: #{tpu_custom_call.1}
  #allocation0 [shape = 'u32[]', space=smem, size = 0x4, offset = 0x4, fixed_abs, tag = 'smem constant byte address 0x4 - core index']
  #allocation1 [shape = 'u32[144,128]{1,0:T(1,128)}', space=vmem, size = 0x12000, scoped, tag = 'internal scratch']
  %s0 = inlined_call_operand.vmem [shape: f32[2,8,32], index: 0, kind: input, shape index: {}]
  %s1 = inlined_call_operand.vmem [shape: f32[1,32], index: 1, kind: input, shape index: {}]
  %s2 = inlined_call_operand.vmem [shape: f32[1,32], index: 2, kind: input, shape index: {}]
  %s3 = inlined_call_operand.vmem [shape: bf16[32,96], index: 3, kind: input, shape index: {}]
  %s4 = inlined_call_operand.vmem [shape: f32[1,96], index: 4, kind: input, shape index: {}]
  %s5 = inlined_call_operand.vmem [shape: bf16[32,32], index: 5, kind: input, shape index: {}]
  %s6 = inlined_call_operand.vmem [shape: f32[1,32], index: 6, kind: input, shape index: {}]
  %s7 = inlined_call_operand.vmem [shape: f32[1,32], index: 7, kind: input, shape index: {}]
  %s8 = inlined_call_operand.vmem [shape: f32[1,32], index: 8, kind: input, shape index: {}]
  %s9 = inlined_call_operand.vmem [shape: bf16[32,128], index: 9, kind: input, shape index: {}]
  %s10 = inlined_call_operand.vmem [shape: f32[1,128], index: 10, kind: input, shape index: {}]
  %s11 = inlined_call_operand.vmem [shape: bf16[128,32], index: 11, kind: input, shape index: {}]
  %s12 = inlined_call_operand.vmem [shape: f32[1,32], index: 12, kind: input, shape index: {}]
  %s13 = inlined_call_operand.hbm [shape: f32[2,8,32], index: 13, kind: output, shape index: {}]
  %s14 = sld [smem:[#allocation0]]
  $region85: #{tpu_custom_call.1} parent=0
    _
  %s16 = ssub.s32 1, %s14
  %s17 = scalar_select 0, %s16, %s14
  $region1: #{tpu_custom_call.1} parent=0
    #allocation2 [shape = 'u8[8192]{0}', space=vmem, size = 0x2000, scoped, tag = 'output window, operand 0']
    #allocation3 [shape = 's32[2]{0}', space=sflag, size = 0x8, scoped, tag = 'scoped memory for tpu_custom_call.1']
    %18 = vsyncpa [#allocation3], 0
    %s19 = scalar_lea.sflag [#allocation3], 1
    %20 = vsyncpa %s19, 0
    loop: start=0, step=1, limit=4
    $region2: #{tpu_custom_call.1} parent=1 // loop_pre_header
      _
    $region3: #{tpu_custom_call.1} parent=1 // loop_header
      %s22 = sphi 0, %s26
      %p23 = scmp.ge.s32.totalorder %s22, 4
      %s32 = sphi 0, %s34
      %s35 = sphi 0, %s32
      %s36 = sphi 0, %s35
      %s52 = sphi 0, %s36
      %s56 = sphi 0, %s56
      %s58 = sphi 0, %s56
      %s59 = sphi 0, %s58
      %s73 = sphi 0, %s59
      %s77 = sphi 0, %s77
      %s79 = sphi 0, %s77
      %s80 = sphi 0, %s79
      %s94 = sphi 0, %s80
      %s98 = sphi 0, %s98
      %s100 = sphi 0, %s98
      %s101 = sphi 0, %s100
      %s115 = sphi 0, %s101
      %s119 = sphi 0, %s119
      %s121 = sphi 0, %s119
      %s122 = sphi 0, %s121
      %s136 = sphi 0, %s122
      %s140 = sphi 0, %s140
      %s142 = sphi 0, %s140
      %s143 = sphi 0, %s142
      %s157 = sphi 0, %s143
      %s161 = sphi 0, %s161
      %s163 = sphi 0, %s161
      %s164 = sphi 0, %s163
      %s178 = sphi 0, %s164
      %s182 = sphi 0, %s182
      %s184 = sphi 0, %s182
      %s185 = sphi 0, %s184
      %s199 = sphi 0, %s185
      %s203 = sphi 0, %s203
      %s205 = sphi 0, %s203
      %s206 = sphi 0, %s205
      %s220 = sphi 0, %s206
      %s224 = sphi 0, %s224
      %s226 = sphi 0, %s224
      %s227 = sphi 0, %s226
      %s241 = sphi 0, %s227
      %s245 = sphi 0, %s245
      %s247 = sphi 0, %s245
      %s248 = sphi 0, %s247
      %s262 = sphi 0, %s248
      %s266 = sphi 0, %s266
      %s268 = sphi 0, %s266
      %s269 = sphi 0, %s268
      %s283 = sphi 0, %s269
      %s287 = sphi 0, %s287
      %s289 = sphi 0, %s287
      %s290 = sphi 0, %s289
      %s304 = sphi 0, %s290
      %s310 = sphi 0, %s312
      %s313 = sphi 0, %s310
      %s314 = sphi 0, %s313
      %s330 = sphi 0, %s314
    $region4: #{tpu_custom_call.1} parent=1 // loop_header_branch
      %25 = sbr.rel (%p23) target = $region8
    $region5: #{tpu_custom_call.1} parent=1 // loop_body
      %s27 = ssub.s32 %s22, 1
      %s28 = ssub.s32 %s22, 2
      %s29 = sadd.s32 %s22, 1
      %s30 = ssub.s32 %s22, %s29
      %p31 = scmp.eq.s32.totalorder %s30, 0
      %s33 = sadd.s32 %s32, 1
      %s34 = scalar_select %p31, %s32, %s33
      %p37 = pneg %p31
      %p38 = scmp.eq.s32.totalorder %s22, 1
      %p39 = por %p37, %p38
      %p40 = scmp.ne.s32.totalorder %s32, %s35
      %p41 = scmp.eq.s32.totalorder %s22, 0
      %p42 = por %p40, %p41
      %p43 = scmp.ne.s32.totalorder %s32, %s35
      %p44 = scmp.eq.s32.totalorder %s27, 1
      %p45 = por %p43, %p44
      %p46 = scmp.ne.s32.totalorder %s35, %s36
      %p47 = scmp.eq.s32.totalorder %s27, 0
      %p48 = por %p46, %p47
      %p49 = scmp.ne.s32.totalorder %s35, %s36
      %p50 = scmp.eq.s32.totalorder %s28, 1
      %p51 = por %p49, %p50
      %p53 = scmp.ne.s32.totalorder %s36, %s52
      %p54 = scmp.eq.s32.totalorder %s28, 0
      %p55 = por %p53, %p54
      %s57 = sadd.s32 %s56, 1
      %p60 = scmp.eq.s32.totalorder %s22, 1
      %p61 = scmp.ne.s32.totalorder %s56, %s58
      %p62 = scmp.eq.s32.totalorder %s22, 0
      %p63 = por %p61, %p62
      %p64 = scmp.ne.s32.totalorder %s56, %s58
      %p65 = scmp.eq.s32.totalorder %s27, 1
      %p66 = por %p64, %p65
      %p67 = scmp.ne.s32.totalorder %s58, %s59
      %p68 = scmp.eq.s32.totalorder %s27, 0
      %p69 = por %p67, %p68
      %p70 = scmp.ne.s32.totalorder %s58, %s59
      %p71 = scmp.eq.s32.totalorder %s28, 1
      %p72 = por %p70, %p71
      %p74 = scmp.ne.s32.totalorder %s59, %s73
      %p75 = scmp.eq.s32.totalorder %s28, 0
      %p76 = por %p74, %p75
      %s78 = sadd.s32 %s77, 1
      %p81 = scmp.eq.s32.totalorder %s22, 1
      %p82 = scmp.ne.s32.totalorder %s77, %s79
      %p83 = scmp.eq.s32.totalorder %s22, 0
      %p84 = por %p82, %p83
      %p85 = scmp.ne.s32.totalorder %s77, %s79
      %p86 = scmp.eq.s32.totalorder %s27, 1
      %p87 = por %p85, %p86
      %p88 = scmp.ne.s32.totalorder %s79, %s80
      %p89 = scmp.eq.s32.totalorder %s27, 0
      %p90 = por %p88, %p89
      %p91 = scmp.ne.s32.totalorder %s79, %s80
      %p92 = scmp.eq.s32.totalorder %s28, 1
      %p93 = por %p91, %p92
      %p95 = scmp.ne.s32.totalorder %s80, %s94
      %p96 = scmp.eq.s32.totalorder %s28, 0
      %p97 = por %p95, %p96
      %s99 = sadd.s32 %s98, 1
      %p102 = scmp.eq.s32.totalorder %s22, 1
      %p103 = scmp.ne.s32.totalorder %s98, %s100
      %p104 = scmp.eq.s32.totalorder %s22, 0
      %p105 = por %p103, %p104
      %p106 = scmp.ne.s32.totalorder %s98, %s100
      %p107 = scmp.eq.s32.totalorder %s27, 1
      %p108 = por %p106, %p107
      %p109 = scmp.ne.s32.totalorder %s100, %s101
      %p110 = scmp.eq.s32.totalorder %s27, 0
      %p111 = por %p109, %p110
      %p112 = scmp.ne.s32.totalorder %s100, %s101
      %p113 = scmp.eq.s32.totalorder %s28, 1
      %p114 = por %p112, %p113
      %p116 = scmp.ne.s32.totalorder %s101, %s115
      %p117 = scmp.eq.s32.totalorder %s28, 0
      %p118 = por %p116, %p117
      %s120 = sadd.s32 %s119, 1
      %p123 = scmp.eq.s32.totalorder %s22, 1
      %p124 = scmp.ne.s32.totalorder %s119, %s121
      %p125 = scmp.eq.s32.totalorder %s22, 0
      %p126 = por %p124, %p125
      %p127 = scmp.ne.s32.totalorder %s119, %s121
      %p128 = scmp.eq.s32.totalorder %s27, 1
      %p129 = por %p127, %p128
      %p130 = scmp.ne.s32.totalorder %s121, %s122
      %p131 = scmp.eq.s32.totalorder %s27, 0
      %p132 = por %p130, %p131
      %p133 = scmp.ne.s32.totalorder %s121, %s122
      %p134 = scmp.eq.s32.totalorder %s28, 1
      %p135 = por %p133, %p134
      %p137 = scmp.ne.s32.totalorder %s122, %s136
      %p138 = scmp.eq.s32.totalorder %s28, 0
      %p139 = por %p137, %p138
      %s141 = sadd.s32 %s140, 1
      %p144 = scmp.eq.s32.totalorder %s22, 1
      %p145 = scmp.ne.s32.totalorder %s140, %s142
      %p146 = scmp.eq.s32.totalorder %s22, 0
      %p147 = por %p145, %p146
      %p148 = scmp.ne.s32.totalorder %s140, %s142
      %p149 = scmp.eq.s32.totalorder %s27, 1
      %p150 = por %p148, %p149
      %p151 = scmp.ne.s32.totalorder %s142, %s143
      %p152 = scmp.eq.s32.totalorder %s27, 0
      %p153 = por %p151, %p152
      %p154 = scmp.ne.s32.totalorder %s142, %s143
      %p155 = scmp.eq.s32.totalorder %s28, 1
      %p156 = por %p154, %p155
      %p158 = scmp.ne.s32.totalorder %s143, %s157
      %p159 = scmp.eq.s32.totalorder %s28, 0
      %p160 = por %p158, %p159
      %s162 = sadd.s32 %s161, 1
      %p165 = scmp.eq.s32.totalorder %s22, 1
      %p166 = scmp.ne.s32.totalorder %s161, %s163
      %p167 = scmp.eq.s32.totalorder %s22, 0
      %p168 = por %p166, %p167
      %p169 = scmp.ne.s32.totalorder %s161, %s163
      %p170 = scmp.eq.s32.totalorder %s27, 1
      %p171 = por %p169, %p170
      %p172 = scmp.ne.s32.totalorder %s163, %s164
      %p173 = scmp.eq.s32.totalorder %s27, 0
      %p174 = por %p172, %p173
      %p175 = scmp.ne.s32.totalorder %s163, %s164
      %p176 = scmp.eq.s32.totalorder %s28, 1
      %p177 = por %p175, %p176
      %p179 = scmp.ne.s32.totalorder %s164, %s178
      %p180 = scmp.eq.s32.totalorder %s28, 0
      %p181 = por %p179, %p180
      %s183 = sadd.s32 %s182, 1
      %p186 = scmp.eq.s32.totalorder %s22, 1
      %p187 = scmp.ne.s32.totalorder %s182, %s184
      %p188 = scmp.eq.s32.totalorder %s22, 0
      %p189 = por %p187, %p188
      %p190 = scmp.ne.s32.totalorder %s182, %s184
      %p191 = scmp.eq.s32.totalorder %s27, 1
      %p192 = por %p190, %p191
      %p193 = scmp.ne.s32.totalorder %s184, %s185
      %p194 = scmp.eq.s32.totalorder %s27, 0
      %p195 = por %p193, %p194
      %p196 = scmp.ne.s32.totalorder %s184, %s185
      %p197 = scmp.eq.s32.totalorder %s28, 1
      %p198 = por %p196, %p197
      %p200 = scmp.ne.s32.totalorder %s185, %s199
      %p201 = scmp.eq.s32.totalorder %s28, 0
      %p202 = por %p200, %p201
      %s204 = sadd.s32 %s203, 1
      %p207 = scmp.eq.s32.totalorder %s22, 1
      %p208 = scmp.ne.s32.totalorder %s203, %s205
      %p209 = scmp.eq.s32.totalorder %s22, 0
      %p210 = por %p208, %p209
      %p211 = scmp.ne.s32.totalorder %s203, %s205
      %p212 = scmp.eq.s32.totalorder %s27, 1
      %p213 = por %p211, %p212
      %p214 = scmp.ne.s32.totalorder %s205, %s206
      %p215 = scmp.eq.s32.totalorder %s27, 0
      %p216 = por %p214, %p215
      %p217 = scmp.ne.s32.totalorder %s205, %s206
      %p218 = scmp.eq.s32.totalorder %s28, 1
      %p219 = por %p217, %p218
      %p221 = scmp.ne.s32.totalorder %s206, %s220
      %p222 = scmp.eq.s32.totalorder %s28, 0
      %p223 = por %p221, %p222
      %s225 = sadd.s32 %s224, 1
      %p228 = scmp.eq.s32.totalorder %s22, 1
      %p229 = scmp.ne.s32.totalorder %s224, %s226
      %p230 = scmp.eq.s32.totalorder %s22, 0
      %p231 = por %p229, %p230
      %p232 = scmp.ne.s32.totalorder %s224, %s226
      %p233 = scmp.eq.s32.totalorder %s27, 1
      %p234 = por %p232, %p233
      %p235 = scmp.ne.s32.totalorder %s226, %s227
      %p236 = scmp.eq.s32.totalorder %s27, 0
      %p237 = por %p235, %p236
      %p238 = scmp.ne.s32.totalorder %s226, %s227
      %p239 = scmp.eq.s32.totalorder %s28, 1
      %p240 = por %p238, %p239
      %p242 = scmp.ne.s32.totalorder %s227, %s241
      %p243 = scmp.eq.s32.totalorder %s28, 0
      %p244 = por %p242, %p243
      %s246 = sadd.s32 %s245, 1
      %p249 = scmp.eq.s32.totalorder %s22, 1
      %p250 = scmp.ne.s32.totalorder %s245, %s247
      %p251 = scmp.eq.s32.totalorder %s22, 0
      %p252 = por %p250, %p251
      %p253 = scmp.ne.s32.totalorder %s245, %s247
      %p254 = scmp.eq.s32.totalorder %s27, 1
      %p255 = por %p253, %p254
      %p256 = scmp.ne.s32.totalorder %s247, %s248
      %p257 = scmp.eq.s32.totalorder %s27, 0
      %p258 = por %p256, %p257
      %p259 = scmp.ne.s32.totalorder %s247, %s248
      %p260 = scmp.eq.s32.totalorder %s28, 1
      %p261 = por %p259, %p260
      %p263 = scmp.ne.s32.totalorder %s248, %s262
      %p264 = scmp.eq.s32.totalorder %s28, 0
      %p265 = por %p263, %p264
      %s267 = sadd.s32 %s266, 1
      %p270 = scmp.eq.s32.totalorder %s22, 1
      %p271 = scmp.ne.s32.totalorder %s266, %s268
      %p272 = scmp.eq.s32.totalorder %s22, 0
      %p273 = por %p271, %p272
      %p274 = scmp.ne.s32.totalorder %s266, %s268
      %p275 = scmp.eq.s32.totalorder %s27, 1
      %p276 = por %p274, %p275
      %p277 = scmp.ne.s32.totalorder %s268, %s269
      %p278 = scmp.eq.s32.totalorder %s27, 0
      %p279 = por %p277, %p278
      %p280 = scmp.ne.s32.totalorder %s268, %s269
      %p281 = scmp.eq.s32.totalorder %s28, 1
      %p282 = por %p280, %p281
      %p284 = scmp.ne.s32.totalorder %s269, %s283
      %p285 = scmp.eq.s32.totalorder %s28, 0
      %p286 = por %p284, %p285
      %s288 = sadd.s32 %s287, 1
      %p291 = scmp.eq.s32.totalorder %s22, 1
      %p292 = scmp.ne.s32.totalorder %s287, %s289
      %p293 = scmp.eq.s32.totalorder %s22, 0
      %p294 = por %p292, %p293
      %p295 = scmp.ne.s32.totalorder %s287, %s289
      %p296 = scmp.eq.s32.totalorder %s27, 1
      %p297 = por %p295, %p296
      %p298 = scmp.ne.s32.totalorder %s289, %s290
      %p299 = scmp.eq.s32.totalorder %s27, 0
      %p300 = por %p298, %p299
      %p301 = scmp.ne.s32.totalorder %s289, %s290
      %p302 = scmp.eq.s32.totalorder %s28, 1
      %p303 = por %p301, %p302
      %p305 = scmp.ne.s32.totalorder %s290, %s304
      %p306 = scmp.eq.s32.totalorder %s28, 0
      %p307 = por %p305, %p306
      %s308 = ssub.s32 %s22, %s29
      %p309 = scmp.eq.s32.totalorder %s308, 0
      %s311 = sadd.s32 %s310, 1
      %s312 = scalar_select %p309, %s310, %s311
      %p315 = pneg %p309
      %p316 = scmp.eq.s32.totalorder %s22, 1
      %p317 = por %p315, %p316
      %p318 = scmp.ne.s32.totalorder %s310, %s313
      %p319 = scmp.eq.s32.totalorder %s22, 0
      %p320 = por %p318, %p319
      %p321 = scmp.ne.s32.totalorder %s310, %s313
      %p322 = scmp.eq.s32.totalorder %s27, 1
      %p323 = por %p321, %p322
      %p324 = scmp.ne.s32.totalorder %s313, %s314
      %p325 = scmp.eq.s32.totalorder %s27, 0
      %p326 = por %p324, %p325
      %p327 = scmp.ne.s32.totalorder %s313, %s314
      %p328 = scmp.eq.s32.totalorder %s28, 1
      %p329 = por %p327, %p328
      %p331 = scmp.ne.s32.totalorder %s314, %s330
      %p332 = scmp.eq.s32.totalorder %s28, 0
      %p333 = por %p331, %p332
      %p334 = scmp.le.s32.totalorder 1, %s22
      %p335 = scmp.lt.s32.totalorder %s22, 3
      %p336 = pnand %p334, %p335
      %p337 = pneg %p336
      // Predicated region
      $region9: #{tpu_custom_call.1} parent=5 // pred_check
        _
      $region10: #{tpu_custom_call.1} parent=5 // pred_check_branch
        %339 = sbr.rel (%p336) target = $region12
      $region11: #{tpu_custom_call.1} parent=5 // pred_region
        %s340 = ssub.s32 %s22, 1
        // Predicated region
        $region13: #{tpu_custom_call.1} parent=11 // pred_check
          %p341 = pneg %p69
        $region14: #{tpu_custom_call.1} parent=11 // pred_check_branch
          %343 = sbr.rel (%p341) target = $region16
        $region15: #{tpu_custom_call.1} parent=11 // pred_region
          _
        $region16: #{tpu_custom_call.1} parent=11 // pred_fallthru
          _
        // Predicated region
        $region17: #{tpu_custom_call.1} parent=11 // pred_check
          %p344 = pneg %p90
        $region18: #{tpu_custom_call.1} parent=11 // pred_check_branch
          %346 = sbr.rel (%p344) target = $region20
        $region19: #{tpu_custom_call.1} parent=11 // pred_region
          _
        $region20: #{tpu_custom_call.1} parent=11 // pred_fallthru
          _
        // Predicated region
        $region21: #{tpu_custom_call.1} parent=11 // pred_check
          %p347 = pneg %p111
        $region22: #{tpu_custom_call.1} parent=11 // pred_check_branch
          %349 = sbr.rel (%p347) target = $region24
        $region23: #{tpu_custom_call.1} parent=11 // pred_region
          _
        $region24: #{tpu_custom_call.1} parent=11 // pred_fallthru
          _
        // Predicated region
        $region25: #{tpu_custom_call.1} parent=11 // pred_check
          %p350 = pneg %p132
        $region26: #{tpu_custom_call.1} parent=11 // pred_check_branch
          %352 = sbr.rel (%p350) target = $region28
        $region27: #{tpu_custom_call.1} parent=11 // pred_region
          _
        $region28: #{tpu_custom_call.1} parent=11 // pred_fallthru
          _
        // Predicated region
        $region29: #{tpu_custom_call.1} parent=11 // pred_check
          %p353 = pneg %p153
        $region30: #{tpu_custom_call.1} parent=11 // pred_check_branch
          %355 = sbr.rel (%p353) target = $region32
        $region31: #{tpu_custom_call.1} parent=11 // pred_region
          _
        $region32: #{tpu_custom_call.1} parent=11 // pred_fallthru
          _
        // Predicated region
        $region33: #{tpu_custom_call.1} parent=11 // pred_check
          %p356 = pneg %p174
        $region34: #{tpu_custom_call.1} parent=11 // pred_check_branch
          %358 = sbr.rel (%p356) target = $region36
        $region35: #{tpu_custom_call.1} parent=11 // pred_region
          _
        $region36: #{tpu_custom_call.1} parent=11 // pred_fallthru
          _
        // Predicated region
        $region37: #{tpu_custom_call.1} parent=11 // pred_check
          %p359 = pneg %p195
        $region38: #{tpu_custom_call.1} parent=11 // pred_check_branch
          %361 = sbr.rel (%p359) target = $region40
        $region39: #{tpu_custom_call.1} parent=11 // pred_region
          _
        $region40: #{tpu_custom_call.1} parent=11 // pred_fallthru
          _
        // Predicated region
        $region41: #{tpu_custom_call.1} parent=11 // pred_check
          %p362 = pneg %p216
        $region42: #{tpu_custom_call.1} parent=11 // pred_check_branch
          %364 = sbr.rel (%p362) target = $region44
        $region43: #{tpu_custom_call.1} parent=11 // pred_region
          _
        $region44: #{tpu_custom_call.1} parent=11 // pred_fallthru
          _
        // Predicated region
        $region45: #{tpu_custom_call.1} parent=11 // pred_check
          %p365 = pneg %p237
        $region46: #{tpu_custom_call.1} parent=11 // pred_check_branch
          %367 = sbr.rel (%p365) target = $region48
        $region47: #{tpu_custom_call.1} parent=11 // pred_region
          _
        $region48: #{tpu_custom_call.1} parent=11 // pred_fallthru
          _
        // Predicated region
        $region49: #{tpu_custom_call.1} parent=11 // pred_check
          %p368 = pneg %p258
        $region50: #{tpu_custom_call.1} parent=11 // pred_check_branch
          %370 = sbr.rel (%p368) target = $region52
        $region51: #{tpu_custom_call.1} parent=11 // pred_region
          _
        $region52: #{tpu_custom_call.1} parent=11 // pred_fallthru
          _
        // Predicated region
        $region53: #{tpu_custom_call.1} parent=11 // pred_check
          %p371 = pneg %p279
        $region54: #{tpu_custom_call.1} parent=11 // pred_check_branch
          %373 = sbr.rel (%p371) target = $region56
        $region55: #{tpu_custom_call.1} parent=11 // pred_region
          _
        $region56: #{tpu_custom_call.1} parent=11 // pred_fallthru
          _
        // Predicated region
        $region57: #{tpu_custom_call.1} parent=11 // pred_check
          %p374 = pneg %p300
        $region58: #{tpu_custom_call.1} parent=11 // pred_check_branch
          %376 = sbr.rel (%p374) target = $region60
        $region59: #{tpu_custom_call.1} parent=11 // pred_region
          _
        $region60: #{tpu_custom_call.1} parent=11 // pred_fallthru
          _
      $region12: #{tpu_custom_call.1} parent=5 // pred_fallthru
        _
      %p377 = scmp.lt.s32.totalorder %s22, 2
      // Predicated region
      $region61: #{tpu_custom_call.1} parent=5 // pred_check
        %p378 = pneg %p377
      $region62: #{tpu_custom_call.1} parent=5 // pred_check_branch
        %380 = sbr.rel (%p378) target = $region64
      $region63: #{tpu_custom_call.1} parent=5 // pred_region
        // Predicated region
        $region65: #{tpu_custom_call.1} parent=63 // pred_check
          %p381 = pneg %p42
        $region66: #{tpu_custom_call.1} parent=63 // pred_check_branch
          %383 = sbr.rel (%p381) target = $region68
        $region67: #{tpu_custom_call.1} parent=63 // pred_region
          %p384 = scmp.lt.s32.totalorder %s22, 1
          %s385 = scalar_select %p384, %s22, 1
          %s386 = smul.addr %s385, 8
          %s387 = scalar_lea.vmem %s0, %s386
        $region68: #{tpu_custom_call.1} parent=63 // pred_fallthru
          _
      $region64: #{tpu_custom_call.1} parent=5 // pred_fallthru
        _
      %p388 = scmp.le.s32.totalorder 1, %s22
      %p389 = scmp.lt.s32.totalorder %s22, 3
      %p390 = pnand %p388, %p389
      %p391 = pneg %p390
      // Predicated region
      $region69: #{tpu_custom_call.1} parent=5 // pred_check
        _
      $region70: #{tpu_custom_call.1} parent=5 // pred_check_branch
        %393 = sbr.rel (%p390) target = $region72
      $region71: #{tpu_custom_call.1} parent=5 // pred_region
        %s394 = ssub.s32 %s22, 1
        %p395 = scmp.lt.s32.totalorder %s27, 1
        %s396 = scalar_select %p395, %s27, 1
        %s397 = smul.addr %s396, 8
        %s398 = scalar_lea.vmem %s0, %s397
        %p399 = pneg %p48
        %p400 = pneg %p45
        %p401 = pneg %p69
        %p402 = pneg %p66
        %p403 = pneg %p90
        %p404 = pneg %p87
        %p405 = pneg %p111
        %p406 = pneg %p108
        %p407 = pneg %p132
        %p408 = pneg %p129
        %p409 = pneg %p153
        %p410 = pneg %p150
        %p411 = pneg %p174
        %p412 = pneg %p171
        %p413 = pneg %p195
        %p414 = pneg %p192
        %p415 = pneg %p216
        %p416 = pneg %p213
        %p417 = pneg %p237
        %p418 = pneg %p234
        %p419 = pneg %p258
        %p420 = pneg %p255
        %p421 = pneg %p279
        %p422 = pneg %p276
        %p423 = pneg %p300
        %p424 = pneg %p297
        %p425 = pneg %p326
        %p426 = pneg %p323
        %s427 = sand.u32 %s313, 1
        %s428 = scalar_lea.sflag [#allocation3], %s427
        %s429 = sand.u32 %s313, 1
        %s430 = smul.addr %s429, 8
        %s431 = scalar_lea.vmem [#allocation2], %s430
        %p432 = scmp.lt.s32.totalorder %s27, 1
        %s433 = scalar_select %p432, %s27, 1
        %s434 = smul.addr %s433, 8
        %s435 = scalar_lea.vmem %s0, %s434
        %v437 = vld [vmem:[%s435] sm:$0xff]
        %v438 = vld [vmem:[%s1] sm:$0x1]
        %v439 = vld [vmem:[%s2] sm:$0x1]
        %vm440 = vcmask 261120
        %v441 = vsel %vm440, %v437, 0.0
        %442 = vadd.xlane.f32.xlu0 %v441
        %v443 = vpop.xlane.xlu0 %442
        %v444 = vrcp.pop 32.0
        %v445 = vmul.f32 %v443, %v444
        %v446 = vsub.f32 %v437, %v445
        %v447 = vmul.f32 %v446, %v446
        %v448 = vsel %vm440, %v447, 0.0
        %449 = vadd.xlane.f32.xlu0 %v448
        %v450 = vpop.xlane.xlu0 %449
        %v451 = vmul.f32 %v450, %v444
        %v452 = vadd.f32 %v451, 1e-05
        %v453 = vrsqrt.pop %v452
        %v454 = vmul.f32 %v446, %v453
        %v456 = vlaneseq
        %v457 = vshrl.u32 %v456, 7
        %v458 = vsub.s32 0, %v457
        %v459 = vrot.slane %v438, %v458
        %v461 = vmul.f32 %v454, %v459
        %v463 = vlaneseq
        %v464 = vshrl.u32 %v463, 7
        %v465 = vsub.s32 0, %v464
        %v466 = vrot.slane %v439, %v465
        %v468 = vadd.f32 %v461, %v466
        %v469 = vpack.c.bf16 %v468, %v468
        %v470 = vld [vmem:[%s3] sm:$0xf]
        %v471 = vld [vmem:[%s3 + $0x4] sm:$0xf]
        %v472 = vld [vmem:[%s3 + $0x8] sm:$0xf]
        %v473 = vld [vmem:[%s3 + $0xc] sm:$0xf]
        %v474 = vld [vmem:[%s4] sm:$0x1]
        %v476 = vlaneseq
        %v477 = vshrl.u32 %v476, 7
        %v478 = vsub.s32 0, %v477
        %v479 = vrot.slane %v474, %v478
        %v485 = vunpack.c.l.b16 %v470
        %v486 = vunpack.c.l.b16 %v471
        %v487 = vunpack.c.l.b16 %v472
        %v488 = vunpack.c.l.b16 %v473
        %v489 = vpack.c.b16 %v486, %v485
        %v490 = vpack.c.b16 %v488, %v487
        %v494 = vsel %vm440, %v469, 0
        %496 = vmatprep.subr.bf16.mxu0 0
        %497 = vmatpush1.bf16.msra.mxu0 %v489
        %498 = vmatprep.subr.bf16.mxu0 0
        %499 = vmatpush1.bf16.msra.mxu0 %v490
        %500 = vmatprep.subr.bf16.mxu0 0
        %501 = vmatpush1.bf16.msra.mxu0 0
        %502 = vmatprep.subr.bf16.mxu0 0
        %503 = vmatpush1.bf16.msra.mxu0 0
        %504 = vmatprep.subr.bf16.mxu0 0
        %505 = vmatpush1.bf16.msra.mxu0 0
        %506 = vmatprep.subr.bf16.mxu0 0
        %507 = vmatpush1.bf16.msra.mxu0 0
        %508 = vmatprep.subr.bf16.mxu0 0
        %509 = vmatpush1.bf16.msra.mxu0 0
        %510 = vmatprep.subr.bf16.mxu0 0
        %511 = vmatpush1.bf16.msra.mxu0 0
        %512 = vmatprep.subr.bf16.mxu0 0
        %513 = vmatpush1.bf16.msra.mxu0 0
        %514 = vmatprep.subr.bf16.mxu0 0
        %515 = vmatpush1.bf16.msra.mxu0 0
        %516 = vmatprep.subr.bf16.mxu0 0
        %517 = vmatpush1.bf16.msra.mxu0 0
        %518 = vmatprep.subr.bf16.mxu0 0
        %519 = vmatpush1.bf16.msra.mxu0 0
        %520 = vmatprep.subr.bf16.mxu0 0
        %521 = vmatpush1.bf16.msra.mxu0 0
        %522 = vmatprep.subr.bf16.mxu0 0
        %523 = vmatpush1.bf16.msra.mxu0 0
        %524 = vmatprep.subr.bf16.mxu0 0
        %525 = vmatpush1.bf16.msra.mxu0 0
        %526 = vmatprep.subr.bf16.mxu0 0
        %527 = vmatpush1.bf16.msra.mxu0 0
        %528 = vmatprep.mubr.bf16.mxu0 0
        %529 = vmatmul.mubr.bf16.gmra.mrb[0].mxu0 %v494
        %v530 = vpop.f32.mrb[0].mxu0
        %v531 = vadd.f32 %v479, %v530
        %v532 = vpop.f32.mrb[0].mxu0
        %v533 = vpop.f32.mrb[0].mxu0
        %v534 = vpop.f32.mrb[0].mxu0
        %535 = vdwg.mxu0
        %v536 = vmul.f32 %v531, 0.35355338
        %v537 = vlaneseq
        %v538 = vshrl.u32 %v537, 7
        %v539 = vlaneseq
        %v540 = vand.u32 %v539, 127
        %vm541 = vcmp.ge.s32.totalorder %v538, %v540
        %v542 = vpack.c.bf16 %v536, %v536
        %v543 = vpack.c.bf16 %v531, %v531
        %545 = vrot.lane.b32.xlu0 %v543, 96
        %v546 = vpop.permute.xlu0 %545
        %vm547 = vcmask 64512
        %v549 = vsel %vm547, %v542, 0
        %v552 = vsel %vm547, %v546, 0
        %554 = vmatprep.subr.bf16.mxu0 0
        %555 = vmatpush1.bf16.xpose.msra.mxu0 %v552
        %556 = vmatprep.subr.bf16.mxu0 0
        %557 = vmatpush1.bf16.xpose.msra.mxu0 0
        %558 = vmatprep.subr.bf16.mxu0 0
        %559 = vmatpush1.bf16.xpose.msra.mxu0 0
        %560 = vmatprep.subr.bf16.mxu0 0
        %561 = vmatpush1.bf16.xpose.msra.mxu0 0
        %562 = vmatprep.subr.bf16.mxu0 0
        %563 = vmatpush1.bf16.xpose.msra.mxu0 0
        %564 = vmatprep.subr.bf16.mxu0 0
        %565 = vmatpush1.bf16.xpose.msra.mxu0 0
        %566 = vmatprep.subr.bf16.mxu0 0
        %567 = vmatpush1.bf16.xpose.msra.mxu0 0
        %568 = vmatprep.subr.bf16.mxu0 0
        %569 = vmatpush1.bf16.xpose.msra.mxu0 0
        %570 = vmatprep.subr.bf16.mxu0 0
        %571 = vmatpush1.bf16.xpose.msra.mxu0 0
        %572 = vmatprep.subr.bf16.mxu0 0
        %573 = vmatpush1.bf16.xpose.msra.mxu0 0
        %574 = vmatprep.subr.bf16.mxu0 0
        %575 = vmatpush1.bf16.xpose.msra.mxu0 0
        %576 = vmatprep.subr.bf16.mxu0 0
        %577 = vmatpush1.bf16.xpose.msra.mxu0 0
        %578 = vmatprep.subr.bf16.mxu0 0
        %579 = vmatpush1.bf16.xpose.msra.mxu0 0
        %580 = vmatprep.subr.bf16.mxu0 0
        %581 = vmatpush1.bf16.xpose.msra.mxu0 0
        %582 = vmatprep.subr.bf16.mxu0 0
        %583 = vmatpush1.bf16.xpose.msra.mxu0 0
        %584 = vmatprep.subr.bf16.mxu0 0
        %585 = vmatpush1.bf16.xpose.msra.mxu0 0
        %586 = vmatprep.mubr.bf16.mxu0 0
        %587 = vmatmul.mubr.bf16.gmra.mrb[0].mxu0 %v549
        %v588 = vpop.f32.mrb[0].mxu0
        %v589 = vadd.f32 0.0, %v588
        %v590 = vpop.f32.mrb[0].mxu0
        %v591 = vpop.f32.mrb[0].mxu0
        %v592 = vpop.f32.mrb[0].mxu0
        %593 = vdwg.mxu0
        %v594 = vsel %vm541, %v589, -1e+30
        %v595 = vsel %vm547, %v594, -inf
        %596 = vmax.xlane.f32.xlu0 %v595
        %v597 = vpop.xlane.xlu0 %596
        %v598 = vsub.f32 %v594, %v597
        %v599 = vmul.f32 %v598, 1.442695
        %v600 = vpow.pop %v599
        %v601 = vsel %vm547, %v600, 0.0
        %602 = vadd.xlane.f32.xlu0 %v601
        %v603 = vpop.xlane.xlu0 %602
        %v604 = vrcp.pop %v603
        %v605 = vmul.f32 %v600, %v604
        %v606 = vpack.c.bf16 %v605, %v605
        %607 = vrot.lane.b32.xlu0 %v543, 64
        %v608 = vpop.permute.xlu0 %607
        %v610 = vsel %vm547, %v606, 0
        %vm612 = vcmask 1043456
        %v614 = vsel %vm612, %v608, 0
        %616 = vmatprep.subr.bf16.mxu0 0
        %617 = vmatpush1.bf16.msra.mxu0 %v614
        %618 = vmatprep.subr.bf16.mxu0 0
        %619 = vmatpush1.bf16.msra.mxu0 0
        %620 = vmatprep.subr.bf16.mxu0 0
        %621 = vmatpush1.bf16.msra.mxu0 0
        %622 = vmatprep.subr.bf16.mxu0 0
        %623 = vmatpush1.bf16.msra.mxu0 0
        %624 = vmatprep.subr.bf16.mxu0 0
        %625 = vmatpush1.bf16.msra.mxu0 0
        %626 = vmatprep.subr.bf16.mxu0 0
        %627 = vmatpush1.bf16.msra.mxu0 0
        %628 = vmatprep.subr.bf16.mxu0 0
        %629 = vmatpush1.bf16.msra.mxu0 0
        %630 = vmatprep.subr.bf16.mxu0 0
        %631 = vmatpush1.bf16.msra.mxu0 0
        %632 = vmatprep.subr.bf16.mxu0 0
        %633 = vmatpush1.bf16.msra.mxu0 0
        %634 = vmatprep.subr.bf16.mxu0 0
        %635 = vmatpush1.bf16.msra.mxu0 0
        %636 = vmatprep.subr.bf16.mxu0 0
        %637 = vmatpush1.bf16.msra.mxu0 0
        %638 = vmatprep.subr.bf16.mxu0 0
        %639 = vmatpush1.bf16.msra.mxu0 0
        %640 = vmatprep.subr.bf16.mxu0 0
        %641 = vmatpush1.bf16.msra.mxu0 0
        %642 = vmatprep.subr.bf16.mxu0 0
        %643 = vmatpush1.bf16.msra.mxu0 0
        %644 = vmatprep.subr.bf16.mxu0 0
        %645 = vmatpush1.bf16.msra.mxu0 0
        %646 = vmatprep.subr.bf16.mxu0 0
        %647 = vmatpush1.bf16.msra.mxu0 0
        %648 = vmatprep.mubr.bf16.mxu0 0
        %649 = vmatmul.mubr.bf16.gmra.mrb[0].mxu0 %v610
        %v650 = vpop.f32.mrb[0].mxu0
        %v651 = vadd.f32 0.0, %v650
        %v652 = vpop.f32.mrb[0].mxu0
        %v653 = vpop.f32.mrb[0].mxu0
        %v654 = vpop.f32.mrb[0].mxu0
        %655 = vdwg.mxu0
        %v656 = vpack.c.bf16 %v651, %v651
        %v657 = vld [vmem:[%s5] sm:$0xf]
        %659 = vrot.lane.b32.xlu0 %v542, 120
        %v660 = vpop.permute.xlu0 %659
        %661 = vrot.lane.b32.xlu0 %v543, 88
        %v662 = vpop.permute.xlu0 %661
        %v664 = vsel %vm547, %v660, 0
        %v667 = vsel %vm547, %v662, 0
        %669 = vmatprep.subr.bf16.mxu0 0
        %670 = vmatpush1.bf16.xpose.msra.mxu0 %v667
        %671 = vmatprep.subr.bf16.mxu0 0
        %672 = vmatpush1.bf16.xpose.msra.mxu0 0
        %673 = vmatprep.subr.bf16.mxu0 0
        %674 = vmatpush1.bf16.xpose.msra.mxu0 0
        %675 = vmatprep.subr.bf16.mxu0 0
        %676 = vmatpush1.bf16.xpose.msra.mxu0 0
        %677 = vmatprep.subr.bf16.mxu0 0
        %678 = vmatpush1.bf16.xpose.msra.mxu0 0
        %679 = vmatprep.subr.bf16.mxu0 0
        %680 = vmatpush1.bf16.xpose.msra.mxu0 0
        %681 = vmatprep.subr.bf16.mxu0 0
        %682 = vmatpush1.bf16.xpose.msra.mxu0 0
        %683 = vmatprep.subr.bf16.mxu0 0
        %684 = vmatpush1.bf16.xpose.msra.mxu0 0
        %685 = vmatprep.subr.bf16.mxu0 0
        %686 = vmatpush1.bf16.xpose.msra.mxu0 0
        %687 = vmatprep.subr.bf16.mxu0 0
        %688 = vmatpush1.bf16.xpose.msra.mxu0 0
        %689 = vmatprep.subr.bf16.mxu0 0
        %690 = vmatpush1.bf16.xpose.msra.mxu0 0
        %691 = vmatprep.subr.bf16.mxu0 0
        %692 = vmatpush1.bf16.xpose.msra.mxu0 0
        %693 = vmatprep.subr.bf16.mxu0 0
        %694 = vmatpush1.bf16.xpose.msra.mxu0 0
        %695 = vmatprep.subr.bf16.mxu0 0
        %696 = vmatpush1.bf16.xpose.msra.mxu0 0
        %697 = vmatprep.subr.bf16.mxu0 0
        %698 = vmatpush1.bf16.xpose.msra.mxu0 0
        %699 = vmatprep.subr.bf16.mxu0 0
        %700 = vmatpush1.bf16.xpose.msra.mxu0 0
        %701 = vmatprep.mubr.bf16.mxu0 0
        %702 = vmatmul.mubr.bf16.gmra.mrb[0].mxu0 %v664
        %v703 = vpop.f32.mrb[0].mxu0
        %v704 = vadd.f32 0.0, %v703
        %v705 = vpop.f32.mrb[0].mxu0
        %v706 = vpop.f32.mrb[0].mxu0
        %v707 = vpop.f32.mrb[0].mxu0
        %708 = vdwg.mxu0
        %v709 = vsel %vm541, %v704, -1e+30
        %v710 = vsel %vm547, %v709, -inf
        %711 = vmax.xlane.f32.xlu0 %v710
        %v712 = vpop.xlane.xlu0 %711
        %v713 = vsub.f32 %v709, %v712
        %v714 = vmul.f32 %v713, 1.442695
        %v715 = vpow.pop %v714
        %v716 = vsel %vm547, %v715, 0.0
        %717 = vadd.xlane.f32.xlu0 %v716
        %v718 = vpop.xlane.xlu0 %717
        %v719 = vrcp.pop %v718
        %v720 = vmul.f32 %v715, %v719
        %v721 = vpack.c.bf16 %v720, %v720
        %722 = vrot.lane.b32.xlu0 %v543, 56
        %v723 = vpop.permute.xlu0 %722
        %v725 = vsel %vm547, %v721, 0
        %v728 = vsel %vm612, %v723, 0
        %730 = vmatprep.subr.bf16.mxu0 0
        %731 = vmatpush1.bf16.msra.mxu0 %v728
        %732 = vmatprep.subr.bf16.mxu0 0
        %733 = vmatpush1.bf16.msra.mxu0 0
        %734 = vmatprep.subr.bf16.mxu0 0
        %735 = vmatpush1.bf16.msra.mxu0 0
        %736 = vmatprep.subr.bf16.mxu0 0
        %737 = vmatpush1.bf16.msra.mxu0 0
        %738 = vmatprep.subr.bf16.mxu0 0
        %739 = vmatpush1.bf16.msra.mxu0 0
        %740 = vmatprep.subr.bf16.mxu0 0
        %741 = vmatpush1.bf16.msra.mxu0 0
        %742 = vmatprep.subr.bf16.mxu0 0
        %743 = vmatpush1.bf16.msra.mxu0 0
        %744 = vmatprep.subr.bf16.mxu0 0
        %745 = vmatpush1.bf16.msra.mxu0 0
        %746 = vmatprep.subr.bf16.mxu0 0
        %747 = vmatpush1.bf16.msra.mxu0 0
        %748 = vmatprep.subr.bf16.mxu0 0
        %749 = vmatpush1.bf16.msra.mxu0 0
        %750 = vmatprep.subr.bf16.mxu0 0
        %751 = vmatpush1.bf16.msra.mxu0 0
        %752 = vmatprep.subr.bf16.mxu0 0
        %753 = vmatpush1.bf16.msra.mxu0 0
        %754 = vmatprep.subr.bf16.mxu0 0
        %755 = vmatpush1.bf16.msra.mxu0 0
        %756 = vmatprep.subr.bf16.mxu0 0
        %757 = vmatpush1.bf16.msra.mxu0 0
        %758 = vmatprep.subr.bf16.mxu0 0
        %759 = vmatpush1.bf16.msra.mxu0 0
        %760 = vmatprep.subr.bf16.mxu0 0
        %761 = vmatpush1.bf16.msra.mxu0 0
        %762 = vmatprep.mubr.bf16.mxu0 0
        %763 = vmatmul.mubr.bf16.gmra.mrb[0].mxu0 %v725
        %v764 = vpop.f32.mrb[0].mxu0
        %v765 = vadd.f32 0.0, %v764
        %v766 = vpop.f32.mrb[0].mxu0
        %v767 = vpop.f32.mrb[0].mxu0
        %v768 = vpop.f32.mrb[0].mxu0
        %769 = vdwg.mxu0
        %v770 = vpack.c.bf16 %v765, %v765
        %v771 = vld [vmem:[%s5 + $0x4] sm:$0xf]
        %v773 = vsel %vm547, %v770, 0
        %v776 = vsel %vm612, %v771, 0
        %778 = vmatprep.subr.bf16.mxu0 0
        %779 = vmatpush1.bf16.msra.mxu0 %v776
        %780 = vmatprep.subr.bf16.mxu0 0
        %781 = vmatpush1.bf16.msra.mxu0 0
        %782 = vmatprep.subr.bf16.mxu0 0
        %783 = vmatpush1.bf16.msra.mxu0 0
        %784 = vmatprep.subr.bf16.mxu0 0
        %785 = vmatpush1.bf16.msra.mxu0 0
        %786 = vmatprep.subr.bf16.mxu0 0
        %787 = vmatpush1.bf16.msra.mxu0 0
        %788 = vmatprep.subr.bf16.mxu0 0
        %789 = vmatpush1.bf16.msra.mxu0 0
        %790 = vmatprep.subr.bf16.mxu0 0
        %791 = vmatpush1.bf16.msra.mxu0 0
        %792 = vmatprep.subr.bf16.mxu0 0
        %793 = vmatpush1.bf16.msra.mxu0 0
        %794 = vmatprep.subr.bf16.mxu0 0
        %795 = vmatpush1.bf16.msra.mxu0 0
        %796 = vmatprep.subr.bf16.mxu0 0
        %797 = vmatpush1.bf16.msra.mxu0 0
        %798 = vmatprep.subr.bf16.mxu0 0
        %799 = vmatpush1.bf16.msra.mxu0 0
        %800 = vmatprep.subr.bf16.mxu0 0
        %801 = vmatpush1.bf16.msra.mxu0 0
        %802 = vmatprep.subr.bf16.mxu0 0
        %803 = vmatpush1.bf16.msra.mxu0 0
        %804 = vmatprep.subr.bf16.mxu0 0
        %805 = vmatpush1.bf16.msra.mxu0 0
        %806 = vmatprep.subr.bf16.mxu0 0
        %807 = vmatpush1.bf16.msra.mxu0 0
        %808 = vmatprep.subr.bf16.mxu0 0
        %809 = vmatpush1.bf16.msra.mxu0 0
        %810 = vmatprep.mubr.bf16.mxu0 0
        %811 = vmatmul.mubr.bf16.gmra.mrb[0].mxu0 %v773
        %v812 = vpop.f32.mrb[0].mxu0
        %v813 = vadd.f32 0.0, %v812
        %v814 = vpop.f32.mrb[0].mxu0
        %v815 = vpop.f32.mrb[0].mxu0
        %v816 = vpop.f32.mrb[0].mxu0
        %817 = vdwg.mxu0
        %v819 = vsel %vm547, %v656, 0
        %v822 = vsel %vm612, %v657, 0
        %824 = vmatprep.subr.bf16.mxu0 0
        %825 = vmatpush1.bf16.msra.mxu0 %v822
        %826 = vmatprep.subr.bf16.mxu0 0
        %827 = vmatpush1.bf16.msra.mxu0 0
        %828 = vmatprep.subr.bf16.mxu0 0
        %829 = vmatpush1.bf16.msra.mxu0 0
        %830 = vmatprep.subr.bf16.mxu0 0
        %831 = vmatpush1.bf16.msra.mxu0 0
        %832 = vmatprep.subr.bf16.mxu0 0
        %833 = vmatpush1.bf16.msra.mxu0 0
        %834 = vmatprep.subr.bf16.mxu0 0
        %835 = vmatpush1.bf16.msra.mxu0 0
        %836 = vmatprep.subr.bf16.mxu0 0
        %837 = vmatpush1.bf16.msra.mxu0 0
        %838 = vmatprep.subr.bf16.mxu0 0
        %839 = vmatpush1.bf16.msra.mxu0 0
        %840 = vmatprep.subr.bf16.mxu0 0
        %841 = vmatpush1.bf16.msra.mxu0 0
        %842 = vmatprep.subr.bf16.mxu0 0
        %843 = vmatpush1.bf16.msra.mxu0 0
        %844 = vmatprep.subr.bf16.mxu0 0
        %845 = vmatpush1.bf16.msra.mxu0 0
        %846 = vmatprep.subr.bf16.mxu0 0
        %847 = vmatpush1.bf16.msra.mxu0 0
        %848 = vmatprep.subr.bf16.mxu0 0
        %849 = vmatpush1.bf16.msra.mxu0 0
        %850 = vmatprep.subr.bf16.mxu0 0
        %851 = vmatpush1.bf16.msra.mxu0 0
        %852 = vmatprep.subr.bf16.mxu0 0
        %853 = vmatpush1.bf16.msra.mxu0 0
        %854 = vmatprep.subr.bf16.mxu0 0
        %855 = vmatpush1.bf16.msra.mxu0 0
        %856 = vmatprep.mubr.bf16.mxu0 0
        %857 = vmatmul.mubr.bf16.gmra.mrb[0].mxu0 %v819
        %v858 = vpop.f32.mrb[0].mxu0
        %v859 = vadd.f32 %v813, %v858
        %v860 = vpop.f32.mrb[0].mxu0
        %v861 = vpop.f32.mrb[0].mxu0
        %v862 = vpop.f32.mrb[0].mxu0
        %863 = vdwg.mxu0
        %864 = vrot.lane.b32.xlu0 %v542, 112
        %v865 = vpop.permute.xlu0 %864
        %866 = vrot.lane.b32.xlu0 %v543, 80
        %v867 = vpop.permute.xlu0 %866
        %v869 = vsel %vm547, %v865, 0
        %v872 = vsel %vm547, %v867, 0
        %874 = vmatprep.subr.bf16.mxu0 0
        %875 = vmatpush1.bf16.xpose.msra.mxu0 %v872
        %876 = vmatprep.subr.bf16.mxu0 0
        %877 = vmatpush1.bf16.xpose.msra.mxu0 0
        %878 = vmatprep.subr.bf16.mxu0 0
        %879 = vmatpush1.bf16.xpose.msra.mxu0 0
        %880 = vmatprep.subr.bf16.mxu0 0
        %881 = vmatpush1.bf16.xpose.msra.mxu0 0
        %882 = vmatprep.subr.bf16.mxu0 0
        %883 = vmatpush1.bf16.xpose.msra.mxu0 0
        %884 = vmatprep.subr.bf16.mxu0 0
        %885 = vmatpush1.bf16.xpose.msra.mxu0 0
        %886 = vmatprep.subr.bf16.mxu0 0
        %887 = vmatpush1.bf16.xpose.msra.mxu0 0
        %888 = vmatprep.subr.bf16.mxu0 0
        %889 = vmatpush1.bf16.xpose.msra.mxu0 0
        %890 = vmatprep.subr.bf16.mxu0 0
        %891 = vmatpush1.bf16.xpose.msra.mxu0 0
        %892 = vmatprep.subr.bf16.mxu0 0
        %893 = vmatpush1.bf16.xpose.msra.mxu0 0
        %894 = vmatprep.subr.bf16.mxu0 0
        %895 = vmatpush1.bf16.xpose.msra.mxu0 0
        %896 = vmatprep.subr.bf16.mxu0 0
        %897 = vmatpush1.bf16.xpose.msra.mxu0 0
        %898 = vmatprep.subr.bf16.mxu0 0
        %899 = vmatpush1.bf16.xpose.msra.mxu0 0
        %900 = vmatprep.subr.bf16.mxu0 0
        %901 = vmatpush1.bf16.xpose.msra.mxu0 0
        %902 = vmatprep.subr.bf16.mxu0 0
        %903 = vmatpush1.bf16.xpose.msra.mxu0 0
        %904 = vmatprep.subr.bf16.mxu0 0
        %905 = vmatpush1.bf16.xpose.msra.mxu0 0
        %906 = vmatprep.mubr.bf16.mxu0 0
        %907 = vmatmul.mubr.bf16.gmra.mrb[0].mxu0 %v869
        %v908 = vpop.f32.mrb[0].mxu0
        %v909 = vadd.f32 0.0, %v908
        %v910 = vpop.f32.mrb[0].mxu0
        %v911 = vpop.f32.mrb[0].mxu0
        %v912 = vpop.f32.mrb[0].mxu0
        %913 = vdwg.mxu0
        %v914 = vsel %vm541, %v909, -1e+30
        %v915 = vsel %vm547, %v914, -inf
        %916 = vmax.xlane.f32.xlu0 %v915
        %v917 = vpop.xlane.xlu0 %916
        %v918 = vsub.f32 %v914, %v917
        %v919 = vmul.f32 %v918, 1.442695
        %v920 = vpow.pop %v919
        %v921 = vsel %vm547, %v920, 0.0
        %922 = vadd.xlane.f32.xlu0 %v921
        %v923 = vpop.xlane.xlu0 %922
        %v924 = vrcp.pop %v923
        %v925 = vmul.f32 %v920, %v924
        %v926 = vpack.c.bf16 %v925, %v925
        %927 = vrot.lane.b32.xlu0 %v543, 48
        %v928 = vpop.permute.xlu0 %927
        %v930 = vsel %vm547, %v926, 0
        %v933 = vsel %vm612, %v928, 0
        %935 = vmatprep.subr.bf16.mxu0 0
        %936 = vmatpush1.bf16.msra.mxu0 %v933
        %937 = vmatprep.subr.bf16.mxu0 0
        %938 = vmatpush1.bf16.msra.mxu0 0
        %939 = vmatprep.subr.bf16.mxu0 0
        %940 = vmatpush1.bf16.msra.mxu0 0
        %941 = vmatprep.subr.bf16.mxu0 0
        %942 = vmatpush1.bf16.msra.mxu0 0
        %943 = vmatprep.subr.bf16.mxu0 0
        %944 = vmatpush1.bf16.msra.mxu0 0
        %945 = vmatprep.subr.bf16.mxu0 0
        %946 = vmatpush1.bf16.msra.mxu0 0
        %947 = vmatprep.subr.bf16.mxu0 0
        %948 = vmatpush1.bf16.msra.mxu0 0
        %949 = vmatprep.subr.bf16.mxu0 0
        %950 = vmatpush1.bf16.msra.mxu0 0
        %951 = vmatprep.subr.bf16.mxu0 0
        %952 = vmatpush1.bf16.msra.mxu0 0
        %953 = vmatprep.subr.bf16.mxu0 0
        %954 = vmatpush1.bf16.msra.mxu0 0
        %955 = vmatprep.subr.bf16.mxu0 0
        %956 = vmatpush1.bf16.msra.mxu0 0
        %957 = vmatprep.subr.bf16.mxu0 0
        %958 = vmatpush1.bf16.msra.mxu0 0
        %959 = vmatprep.subr.bf16.mxu0 0
        %960 = vmatpush1.bf16.msra.mxu0 0
        %961 = vmatprep.subr.bf16.mxu0 0
        %962 = vmatpush1.bf16.msra.mxu0 0
        %963 = vmatprep.subr.bf16.mxu0 0
        %964 = vmatpush1.bf16.msra.mxu0 0
        %965 = vmatprep.subr.bf16.mxu0 0
        %966 = vmatpush1.bf16.msra.mxu0 0
        %967 = vmatprep.mubr.bf16.mxu0 0
        %968 = vmatmul.mubr.bf16.gmra.mrb[0].mxu0 %v930
        %v969 = vpop.f32.mrb[0].mxu0
        %v970 = vadd.f32 0.0, %v969
        %v971 = vpop.f32.mrb[0].mxu0
        %v972 = vpop.f32.mrb[0].mxu0
        %v973 = vpop.f32.mrb[0].mxu0
        %974 = vdwg.mxu0
        %v975 = vpack.c.bf16 %v970, %v970
        %v976 = vld [vmem:[%s5 + $0x8] sm:$0xf]
        %v978 = vsel %vm547, %v975, 0
        %v981 = vsel %vm612, %v976, 0
        %983 = vmatprep.subr.bf16.mxu0 0
        %984 = vmatpush1.bf16.msra.mxu0 %v981
        %985 = vmatprep.subr.bf16.mxu0 0
        %986 = vmatpush1.bf16.msra.mxu0 0
        %987 = vmatprep.subr.bf16.mxu0 0
        %988 = vmatpush1.bf16.msra.mxu0 0
        %989 = vmatprep.subr.bf16.mxu0 0
        %990 = vmatpush1.bf16.msra.mxu0 0
        %991 = vmatprep.subr.bf16.mxu0 0
        %992 = vmatpush1.bf16.msra.mxu0 0
        %993 = vmatprep.subr.bf16.mxu0 0
        %994 = vmatpush1.bf16.msra.mxu0 0
        %995 = vmatprep.subr.bf16.mxu0 0
        %996 = vmatpush1.bf16.msra.mxu0 0
        %997 = vmatprep.subr.bf16.mxu0 0
        %998 = vmatpush1.bf16.msra.mxu0 0
        %999 = vmatprep.subr.bf16.mxu0 0
        %1000 = vmatpush1.bf16.msra.mxu0 0
        %1001 = vmatprep.subr.bf16.mxu0 0
        %1002 = vmatpush1.bf16.msra.mxu0 0
        %1003 = vmatprep.subr.bf16.mxu0 0
        %1004 = vmatpush1.bf16.msra.mxu0 0
        %1005 = vmatprep.subr.bf16.mxu0 0
        %1006 = vmatpush1.bf16.msra.mxu0 0
        %1007 = vmatprep.subr.bf16.mxu0 0
        %1008 = vmatpush1.bf16.msra.mxu0 0
        %1009 = vmatprep.subr.bf16.mxu0 0
        %1010 = vmatpush1.bf16.msra.mxu0 0
        %1011 = vmatprep.subr.bf16.mxu0 0
        %1012 = vmatpush1.bf16.msra.mxu0 0
        %1013 = vmatprep.subr.bf16.mxu0 0
        %1014 = vmatpush1.bf16.msra.mxu0 0
        %1015 = vmatprep.mubr.bf16.mxu0 0
        %1016 = vmatmul.mubr.bf16.gmra.mrb[0].mxu0 %v978
        %v1017 = vpop.f32.mrb[0].mxu0
        %v1018 = vadd.f32 0.0, %v1017
        %v1019 = vpop.f32.mrb[0].mxu0
        %v1020 = vpop.f32.mrb[0].mxu0
        %v1021 = vpop.f32.mrb[0].mxu0
        %1022 = vdwg.mxu0
        %v1023 = vadd.f32 %v859, %v1018
        %1024 = vrot.lane.b32.xlu0 %v542, 104
        %v1025 = vpop.permute.xlu0 %1024
        %1026 = vrot.lane.b32.xlu0 %v543, 72
        %v1027 = vpop.permute.xlu0 %1026
        %v1029 = vsel %vm547, %v1025, 0
        %v1032 = vsel %vm547, %v1027, 0
        %1034 = vmatprep.subr.bf16.mxu0 0
        %1035 = vmatpush1.bf16.xpose.msra.mxu0 %v1032
        %1036 = vmatprep.subr.bf16.mxu0 0
        %1037 = vmatpush1.bf16.xpose.msra.mxu0 0
        %1038 = vmatprep.subr.bf16.mxu0 0
        %1039 = vmatpush1.bf16.xpose.msra.mxu0 0
        %1040 = vmatprep.subr.bf16.mxu0 0
        %1041 = vmatpush1.bf16.xpose.msra.mxu0 0
        %1042 = vmatprep.subr.bf16.mxu0 0
        %1043 = vmatpush1.bf16.xpose.msra.mxu0 0
        %1044 = vmatprep.subr.bf16.mxu0 0
        %1045 = vmatpush1.bf16.xpose.msra.mxu0 0
        %1046 = vmatprep.subr.bf16.mxu0 0
        %1047 = vmatpush1.bf16.xpose.msra.mxu0 0
        %1048 = vmatprep.subr.bf16.mxu0 0
        %1049 = vmatpush1.bf16.xpose.msra.mxu0 0
        %1050 = vmatprep.subr.bf16.mxu0 0
        %1051 = vmatpush1.bf16.xpose.msra.mxu0 0
        %1052 = vmatprep.subr.bf16.mxu0 0
        %1053 = vmatpush1.bf16.xpose.msra.mxu0 0
        %1054 = vmatprep.subr.bf16.mxu0 0
        %1055 = vmatpush1.bf16.xpose.msra.mxu0 0
        %1056 = vmatprep.subr.bf16.mxu0 0
        %1057 = vmatpush1.bf16.xpose.msra.mxu0 0
        %1058 = vmatprep.subr.bf16.mxu0 0
        %1059 = vmatpush1.bf16.xpose.msra.mxu0 0
        %1060 = vmatprep.subr.bf16.mxu0 0
        %1061 = vmatpush1.bf16.xpose.msra.mxu0 0
        %1062 = vmatprep.subr.bf16.mxu0 0
        %1063 = vmatpush1.bf16.xpose.msra.mxu0 0
        %1064 = vmatprep.subr.bf16.mxu0 0
        %1065 = vmatpush1.bf16.xpose.msra.mxu0 0
        %1066 = vmatprep.mubr.bf16.mxu0 0
        %1067 = vmatmul.mubr.bf16.gmra.mrb[0].mxu0 %v1029
        %v1068 = vpop.f32.mrb[0].mxu0
        %v1069 = vadd.f32 0.0, %v1068
        %v1070 = vpop.f32.mrb[0].mxu0
        %v1071 = vpop.f32.mrb[0].mxu0
        %v1072 = vpop.f32.mrb[0].mxu0
        %1073 = vdwg.mxu0
        %v1074 = vsel %vm541, %v1069, -1e+30
        %v1075 = vsel %vm547, %v1074, -inf
        %1076 = vmax.xlane.f32.xlu0 %v1075
        %v1077 = vpop.xlane.xlu0 %1076
        %v1078 = vsub.f32 %v1074, %v1077
        %v1079 = vmul.f32 %v1078, 1.442695
        %v1080 = vpow.pop %v1079
        %v1081 = vsel %vm547, %v1080, 0.0
        %1082 = vadd.xlane.f32.xlu0 %v1081
        %v1083 = vpop.xlane.xlu0 %1082
        %v1084 = vrcp.pop %v1083
        %v1085 = vmul.f32 %v1080, %v1084
        %v1086 = vpack.c.bf16 %v1085, %v1085
        %1087 = vrot.lane.b32.xlu0 %v543, 40
        %v1088 = vpop.permute.xlu0 %1087
        %v1090 = vsel %vm547, %v1086, 0
        %v1093 = vsel %vm612, %v1088, 0
        %1095 = vmatprep.subr.bf16.mxu0 0
        %1096 = vmatpush1.bf16.msra.mxu0 %v1093
        %1097 = vmatprep.subr.bf16.mxu0 0
        %1098 = vmatpush1.bf16.msra.mxu0 0
        %1099 = vmatprep.subr.bf16.mxu0 0
        %1100 = vmatpush1.bf16.msra.mxu0 0
        %1101 = vmatprep.subr.bf16.mxu0 0
        %1102 = vmatpush1.bf16.msra.mxu0 0
        %1103 = vmatprep.subr.bf16.mxu0 0
        %1104 = vmatpush1.bf16.msra.mxu0 0
        %1105 = vmatprep.subr.bf16.mxu0 0
        %1106 = vmatpush1.bf16.msra.mxu0 0
        %1107 = vmatprep.subr.bf16.mxu0 0
        %1108 = vmatpush1.bf16.msra.mxu0 0
        %1109 = vmatprep.subr.bf16.mxu0 0
        %1110 = vmatpush1.bf16.msra.mxu0 0
        %1111 = vmatprep.subr.bf16.mxu0 0
        %1112 = vmatpush1.bf16.msra.mxu0 0
        %1113 = vmatprep.subr.bf16.mxu0 0
        %1114 = vmatpush1.bf16.msra.mxu0 0
        %1115 = vmatprep.subr.bf16.mxu0 0
        %1116 = vmatpush1.bf16.msra.mxu0 0
        %1117 = vmatprep.subr.bf16.mxu0 0
        %1118 = vmatpush1.bf16.msra.mxu0 0
        %1119 = vmatprep.subr.bf16.mxu0 0
        %1120 = vmatpush1.bf16.msra.mxu0 0
        %1121 = vmatprep.subr.bf16.mxu0 0
        %1122 = vmatpush1.bf16.msra.mxu0 0
        %1123 = vmatprep.subr.bf16.mxu0 0
        %1124 = vmatpush1.bf16.msra.mxu0 0
        %1125 = vmatprep.subr.bf16.mxu0 0
        %1126 = vmatpush1.bf16.msra.mxu0 0
        %1127 = vmatprep.mubr.bf16.mxu0 0
        %1128 = vmatmul.mubr.bf16.gmra.mrb[0].mxu0 %v1090
        %v1129 = vpop.f32.mrb[0].mxu0
        %v1130 = vadd.f32 0.0, %v1129
        %v1131 = vpop.f32.mrb[0].mxu0
        %v1132 = vpop.f32.mrb[0].mxu0
        %v1133 = vpop.f32.mrb[0].mxu0
        %1134 = vdwg.mxu0
        %v1135 = vpack.c.bf16 %v1130, %v1130
        %v1136 = vld [vmem:[%s5 + $0xc] sm:$0xf]
        %v1138 = vsel %vm547, %v1135, 0
        %v1141 = vsel %vm612, %v1136, 0
        %1143 = vmatprep.subr.bf16.mxu0 0
        %1144 = vmatpush1.bf16.msra.mxu0 %v1141
        %1145 = vmatprep.subr.bf16.mxu0 0
        %1146 = vmatpush1.bf16.msra.mxu0 0
        %1147 = vmatprep.subr.bf16.mxu0 0
        %1148 = vmatpush1.bf16.msra.mxu0 0
        %1149 = vmatprep.subr.bf16.mxu0 0
        %1150 = vmatpush1.bf16.msra.mxu0 0
        %1151 = vmatprep.subr.bf16.mxu0 0
        %1152 = vmatpush1.bf16.msra.mxu0 0
        %1153 = vmatprep.subr.bf16.mxu0 0
        %1154 = vmatpush1.bf16.msra.mxu0 0
        %1155 = vmatprep.subr.bf16.mxu0 0
        %1156 = vmatpush1.bf16.msra.mxu0 0
        %1157 = vmatprep.subr.bf16.mxu0 0
        %1158 = vmatpush1.bf16.msra.mxu0 0
        %1159 = vmatprep.subr.bf16.mxu0 0
        %1160 = vmatpush1.bf16.msra.mxu0 0
        %1161 = vmatprep.subr.bf16.mxu0 0
        %1162 = vmatpush1.bf16.msra.mxu0 0
        %1163 = vmatprep.subr.bf16.mxu0 0
        %1164 = vmatpush1.bf16.msra.mxu0 0
        %1165 = vmatprep.subr.bf16.mxu0 0
        %1166 = vmatpush1.bf16.msra.mxu0 0
        %1167 = vmatprep.subr.bf16.mxu0 0
        %1168 = vmatpush1.bf16.msra.mxu0 0
        %1169 = vmatprep.subr.bf16.mxu0 0
        %1170 = vmatpush1.bf16.msra.mxu0 0
        %1171 = vmatprep.subr.bf16.mxu0 0
        %1172 = vmatpush1.bf16.msra.mxu0 0
        %1173 = vmatprep.subr.bf16.mxu0 0
        %1174 = vmatpush1.bf16.msra.mxu0 0
        %1175 = vmatprep.mubr.bf16.mxu0 0
        %1176 = vmatmul.mubr.bf16.gmra.mrb[0].mxu0 %v1138
        %v1177 = vpop.f32.mrb[0].mxu0
        %v1178 = vadd.f32 0.0, %v1177
        %v1179 = vpop.f32.mrb[0].mxu0
        %v1180 = vpop.f32.mrb[0].mxu0
        %v1181 = vpop.f32.mrb[0].mxu0
        %1182 = vdwg.mxu0
        %v1183 = vadd.f32 %v1023, %v1178
        %v1184 = vld [vmem:[%s6] sm:$0x1]
        %v1186 = vlaneseq
        %v1187 = vshrl.u32 %v1186, 7
        %v1188 = vsub.s32 0, %v1187
        %v1189 = vrot.slane %v1184, %v1188
        %v1191 = vadd.f32 %v1183, %v1189
        %v1192 = vadd.f32 %v1191, %v437
        %v1193 = vld [vmem:[%s7] sm:$0x1]
        %v1194 = vld [vmem:[%s8] sm:$0x1]
        %v1195 = vsel %vm440, %v1192, 0.0
        %1196 = vadd.xlane.f32.xlu0 %v1195
        %v1197 = vpop.xlane.xlu0 %1196
        %v1198 = vmul.f32 %v1197, %v444
        %v1199 = vsub.f32 %v1192, %v1198
        %v1200 = vmul.f32 %v1199, %v1199
        %v1201 = vsel %vm440, %v1200, 0.0
        %1202 = vadd.xlane.f32.xlu0 %v1201
        %v1203 = vpop.xlane.xlu0 %1202
        %v1204 = vmul.f32 %v1203, %v444
        %v1205 = vadd.f32 %v1204, 1e-05
        %v1206 = vrsqrt.pop %v1205
        %v1207 = vmul.f32 %v1199, %v1206
        %v1209 = vlaneseq
        %v1210 = vshrl.u32 %v1209, 7
        %v1211 = vsub.s32 0, %v1210
        %v1212 = vrot.slane %v1193, %v1211
        %v1214 = vmul.f32 %v1207, %v1212
        %v1216 = vlaneseq
        %v1217 = vshrl.u32 %v1216, 7
        %v1218 = vsub.s32 0, %v1217
        %v1219 = vrot.slane %v1194, %v1218
        %v1221 = vadd.f32 %v1214, %v1219
        %v1222 = vpack.c.bf16 %v1221, %v1221
        %v1223 = vld [vmem:[%s9] sm:$0xf]
        %v1224 = vld [vmem:[%s9 + $0x4] sm:$0xf]
        %v1225 = vld [vmem:[%s9 + $0x8] sm:$0xf]
        %v1226 = vld [vmem:[%s9 + $0xc] sm:$0xf]
        %v1227 = vld [vmem:[%s10] sm:$0x1]
        %v1229 = vlaneseq
        %v1230 = vshrl.u32 %v1229, 7
        %v1231 = vsub.s32 0, %v1230
        %v1232 = vrot.slane %v1227, %v1231
        %v1238 = vunpack.c.l.b16 %v1223
        %v1239 = vunpack.c.l.b16 %v1224
        %v1240 = vunpack.c.l.b16 %v1225
        %v1241 = vunpack.c.l.b16 %v1226
        %v1242 = vpack.c.b16 %v1239, %v1238
        %v1243 = vpack.c.b16 %v1241, %v1240
        %v1247 = vsel %vm440, %v1222, 0
        %1249 = vmatprep.subr.bf16.mxu0 0
        %1250 = vmatpush1.bf16.msra.mxu0 %v1242
        %1251 = vmatprep.subr.bf16.mxu0 0
        %1252 = vmatpush1.bf16.msra.mxu0 %v1243
        %1253 = vmatprep.subr.bf16.mxu0 0
        %1254 = vmatpush1.bf16.msra.mxu0 0
        %1255 = vmatprep.subr.bf16.mxu0 0
        %1256 = vmatpush1.bf16.msra.mxu0 0
        %1257 = vmatprep.subr.bf16.mxu0 0
        %1258 = vmatpush1.bf16.msra.mxu0 0
        %1259 = vmatprep.subr.bf16.mxu0 0
        %1260 = vmatpush1.bf16.msra.mxu0 0
        %1261 = vmatprep.subr.bf16.mxu0 0
        %1262 = vmatpush1.bf16.msra.mxu0 0
        %1263 = vmatprep.subr.bf16.mxu0 0
        %1264 = vmatpush1.bf16.msra.mxu0 0
        %1265 = vmatprep.subr.bf16.mxu0 0
        %1266 = vmatpush1.bf16.msra.mxu0 0
        %1267 = vmatprep.subr.bf16.mxu0 0
        %1268 = vmatpush1.bf16.msra.mxu0 0
        %1269 = vmatprep.subr.bf16.mxu0 0
        %1270 = vmatpush1.bf16.msra.mxu0 0
        %1271 = vmatprep.subr.bf16.mxu0 0
        %1272 = vmatpush1.bf16.msra.mxu0 0
        %1273 = vmatprep.subr.bf16.mxu0 0
        %1274 = vmatpush1.bf16.msra.mxu0 0
        %1275 = vmatprep.subr.bf16.mxu0 0
        %1276 = vmatpush1.bf16.msra.mxu0 0
        %1277 = vmatprep.subr.bf16.mxu0 0
        %1278 = vmatpush1.bf16.msra.mxu0 0
        %1279 = vmatprep.subr.bf16.mxu0 0
        %1280 = vmatpush1.bf16.msra.mxu0 0
        %1281 = vmatprep.mubr.bf16.mxu0 0
        %1282 = vmatmul.mubr.bf16.gmra.mrb[0].mxu0 %v1247
        %v1283 = vpop.f32.mrb[0].mxu0
        %v1284 = vadd.f32 %v1232, %v1283
        %v1285 = vpop.f32.mrb[0].mxu0
        %v1286 = vpop.f32.mrb[0].mxu0
        %v1287 = vpop.f32.mrb[0].mxu0
        %1288 = vdwg.mxu0
        %v1289 = vmul.f32 %v1284, 1.702
        %v1290 = vxor.u32 %v1289, 2147483648
        %v1291 = vmul.f32 %v1290, 1.442695
        %v1292 = vpow.pop %v1291
        %v1293 = vadd.f32 %v1292, 1.0
        %v1294 = vrcp.pop %v1293
        %v1295 = vmul.f32 1.0, %v1294
        %v1296 = vmul.f32 %v1284, %v1295
        %v1297 = vpack.c.bf16 %v1296, %v1296
        %v1298 = vld [vmem:[%s11] sm:$0xf]
        %v1299 = vld [vmem:[%s11 + $0x4] sm:$0xf]
        %v1300 = vld [vmem:[%s11 + $0x8] sm:$0xf]
        %v1301 = vld [vmem:[%s11 + $0xc] sm:$0xf]
        %v1302 = vld [vmem:[%s11 + $0x10] sm:$0xf]
        %v1303 = vld [vmem:[%s11 + $0x14] sm:$0xf]
        %v1304 = vld [vmem:[%s11 + $0x18] sm:$0xf]
        %v1305 = vld [vmem:[%s11 + $0x1c] sm:$0xf]
        %v1306 = vld [vmem:[%s11 + $0x20] sm:$0xf]
        %v1307 = vld [vmem:[%s11 + $0x24] sm:$0xf]
        %v1308 = vld [vmem:[%s11 + $0x28] sm:$0xf]
        %v1309 = vld [vmem:[%s11 + $0x2c] sm:$0xf]
        %v1310 = vld [vmem:[%s11 + $0x30] sm:$0xf]
        %v1311 = vld [vmem:[%s11 + $0x34] sm:$0xf]
        %v1312 = vld [vmem:[%s11 + $0x38] sm:$0xf]
        %v1313 = vld [vmem:[%s11 + $0x3c] sm:$0xf]
        %v1314 = vld [vmem:[%s12] sm:$0x1]
        %v1316 = vlaneseq
        %v1317 = vshrl.u32 %v1316, 7
        %v1318 = vsub.s32 0, %v1317
        %v1319 = vrot.slane %v1314, %v1318
        %v1337 = vunpack.c.l.b16 %v1298
        %v1338 = vunpack.c.l.b16 %v1299
        %v1339 = vunpack.c.l.b16 %v1300
        %v1340 = vunpack.c.l.b16 %v1301
        %v1341 = vunpack.c.l.b16 %v1302
        %v1342 = vunpack.c.l.b16 %v1303
        %v1343 = vunpack.c.l.b16 %v1304
        %v1344 = vunpack.c.l.b16 %v1305
        %v1345 = vunpack.c.l.b16 %v1306
        %v1346 = vunpack.c.l.b16 %v1307
        %v1347 = vunpack.c.l.b16 %v1308
        %v1348 = vunpack.c.l.b16 %v1309
        %v1349 = vunpack.c.l.b16 %v1310
        %v1350 = vunpack.c.l.b16 %v1311
        %v1351 = vunpack.c.l.b16 %v1312
        %v1352 = vunpack.c.l.b16 %v1313
        %v1353 = vpack.c.b16 %v1338, %v1337
        %v1354 = vpack.c.b16 %v1340, %v1339
        %v1355 = vpack.c.b16 %v1342, %v1341
        %v1356 = vpack.c.b16 %v1344, %v1343
        %v1357 = vpack.c.b16 %v1346, %v1345
        %v1358 = vpack.c.b16 %v1348, %v1347
        %v1359 = vpack.c.b16 %v1350, %v1349
        %v1360 = vpack.c.b16 %v1352, %v1351
        %1369 = vmatprep.subr.bf16.mxu0 0
        %1370 = vmatpush1.bf16.msra.mxu0 %v1353
        %1371 = vmatprep.subr.bf16.mxu0 0
        %1372 = vmatpush1.bf16.msra.mxu0 %v1354
        %1373 = vmatprep.subr.bf16.mxu0 0
        %1374 = vmatpush1.bf16.msra.mxu0 %v1355
        %1375 = vmatprep.subr.bf16.mxu0 0
        %1376 = vmatpush1.bf16.msra.mxu0 %v1356
        %1377 = vmatprep.subr.bf16.mxu0 0
        %1378 = vmatpush1.bf16.msra.mxu0 %v1357
        %1379 = vmatprep.subr.bf16.mxu0 0
        %1380 = vmatpush1.bf16.msra.mxu0 %v1358
        %1381 = vmatprep.subr.bf16.mxu0 0
        %1382 = vmatpush1.bf16.msra.mxu0 %v1359
        %1383 = vmatprep.subr.bf16.mxu0 0
        %1384 = vmatpush1.bf16.msra.mxu0 %v1360
        %1385 = vmatprep.subr.bf16.mxu0 0
        %1386 = vmatpush1.bf16.msra.mxu0 0
        %1387 = vmatprep.subr.bf16.mxu0 0
        %1388 = vmatpush1.bf16.msra.mxu0 0
        %1389 = vmatprep.subr.bf16.mxu0 0
        %1390 = vmatpush1.bf16.msra.mxu0 0
        %1391 = vmatprep.subr.bf16.mxu0 0
        %1392 = vmatpush1.bf16.msra.mxu0 0
        %1393 = vmatprep.subr.bf16.mxu0 0
        %1394 = vmatpush1.bf16.msra.mxu0 0
        %1395 = vmatprep.subr.bf16.mxu0 0
        %1396 = vmatpush1.bf16.msra.mxu0 0
        %1397 = vmatprep.subr.bf16.mxu0 0
        %1398 = vmatpush1.bf16.msra.mxu0 0
        %1399 = vmatprep.subr.bf16.mxu0 0
        %1400 = vmatpush1.bf16.msra.mxu0 0
        %1401 = vmatprep.mubr.bf16.mxu0 0
        %1402 = vmatmul.mubr.bf16.gmra.mrb[0].mxu0 %v1297
        %v1403 = vpop.f32.mrb[0].mxu0
        %v1404 = vadd.f32 %v1319, %v1403
        %v1405 = vpop.f32.mrb[0].mxu0
        %v1406 = vpop.f32.mrb[0].mxu0
        %v1407 = vpop.f32.mrb[0].mxu0
        %1408 = vdwg.mxu0
        %v1409 = vadd.f32 %v1404, %v1192
        %1410 = vst.msk [vmem:[%s431] sm:$0xff] %vm440, %v1409
        %s1411 = sand.u32 %s313, 1
        %s1412 = scalar_lea.sflag [#allocation3], %s1411
        %s1413 = sand.u32 %s313, 1
        %s1414 = smul.addr %s1413, 8
        %s1415 = scalar_lea.vmem [#allocation2], %s1414
        // Predicated region
        $region73: #{tpu_custom_call.1} parent=71 // pred_check
          %p1416 = pneg %p323
        $region74: #{tpu_custom_call.1} parent=71 // pred_check_branch
          %1418 = sbr.rel (%p1416) target = $region76
        $region75: #{tpu_custom_call.1} parent=71 // pred_region
          %s1420 = ssub.s32 128, 128
          %1421 = vsyncadd %s1412, %s1420
          %s1422 = smul.addr %s27, 128
          %s1423 = scalar_lea.hbm %s13, %s1422
          %s1425 = sshll.u32 %s1415, 4
          %s1426 = int_to_ptr.vmem [resolvable:$true] %s1425
          %1428 = dma.vmem_to_hbm [thread:$0]  %s1426, 128, %s1423, %s1412
        $region76: #{tpu_custom_call.1} parent=71 // pred_fallthru
          _
      $region72: #{tpu_custom_call.1} parent=5 // pred_fallthru
        _
      %p1429 = scmp.le.s32.totalorder 2, %s22
      // Predicated region
      $region77: #{tpu_custom_call.1} parent=5 // pred_check
        %p1430 = pneg %p1429
      $region78: #{tpu_custom_call.1} parent=5 // pred_check_branch
        %1432 = sbr.rel (%p1430) target = $region80
      $region79: #{tpu_custom_call.1} parent=5 // pred_region
        %s1433 = ssub.s32 %s22, 2
        // Predicated region
        $region81: #{tpu_custom_call.1} parent=79 // pred_check
          %p1434 = pneg %p329
        $region82: #{tpu_custom_call.1} parent=79 // pred_check_branch
          %1436 = sbr.rel (%p1434) target = $region84
        $region83: #{tpu_custom_call.1} parent=79 // pred_region
          %s1437 = sand.u32 %s314, 1
          %s1438 = scalar_lea.sflag [#allocation3], %s1437
          %s1439 = sand.u32 %s314, 1
          %s1440 = smul.addr %s1439, 8
          %s1441 = scalar_lea.vmem [#allocation2], %s1440
          %1442 = dma.done %s1438, 128
        $region84: #{tpu_custom_call.1} parent=79 // pred_fallthru
          _
      $region80: #{tpu_custom_call.1} parent=5 // pred_fallthru
        _
    $region6: #{tpu_custom_call.1} parent=1 // loop_footer
      %s26 = sadd.s32 1, %s22
    $region7: #{tpu_custom_call.1} parent=1 // loop_footer_branch
      %21 = sbr.rel target = $region3
    $region8: #{tpu_custom_call.1} parent=1 // loop_exit
      _
    %1443 = vsyncpa [#allocation3], 1
    %s1444 = scalar_lea.sflag [#allocation3], 1
    %1445 = vsyncpa %s1444, 1

</llo_original>
